<compile_context>
chip_gen: v7x
topology: tpu7x:2x2x1
jax: 0.10.0
libtpu: 0.0.40
codegen_flags: <defaults>
</compile_context>

<pallas_src>
import functools

import jax
import jax.numpy as jnp
from jax.experimental import pallas as pl
from jax.experimental.pallas import tpu as pltpu


# ----------------------------------------------------------------------------
# Pallas kernel: causal conv + full residual stack + DensNet (fused)
# ----------------------------------------------------------------------------
def wavenet_kernel(dilations,
                   x_ref,        # [Bblk, Tp, Cin]      input block
                   cw0_ref,      # [Cin, R]   bf16      causal tap on x[t-1]
                   cw1_ref,      # [Cin, R]   bf16      causal tap on x[t]
                   wd0_ref,      # [N, R, R]  bf16      dilated tap on h[t-d]
                   wd1_ref,      # [N, R, R]  bf16      dilated tap on h[t]
                   wrs_ref,      # [N, R, R+Cin] bf16   fused 1x1 res|skip weights
                   brs_ref,      # [N, 1, R+Cin] f32    fused res|skip bias
                   dw1_ref,      # [Cin, Cin] bf16      densnet conv1
                   db1_ref,      # [1, Cin]   f32
                   dw2_ref,      # [Cin, Cin] bf16      densnet conv2
                   db2_ref,      # [1, Cin]   f32
                   out_ref,      # [Bblk, Tp, Cin]
                   xpad_ref,     # VMEM [px + Bblk*Tp, Cin]   f32 (zero history)
                   cur_ref,      # VMEM [pc + Bblk*Tp, R]     f32 (zero history)
                   skip_ref):    # VMEM [Bblk*Tp, R+Cin]      f32 (skip accumulator)
    f32, bf16 = jnp.float32, jnp.bfloat16
    bblk, tp, cin = x_ref.shape
    m = bblk * tp                            # batch folded into the matmul M dim
    rch = cur_ref.shape[-1]
    px = xpad_ref.shape[0] - m
    pc = cur_ref.shape[0] - m

    def mm(act, w_ref, idx=None):
        # bf16 operands at the MXU boundary, f32 accumulate; elementwise stays f32.
        w = w_ref[...] if idx is None else w_ref[idx]
        return jnp.dot(act.astype(bf16), w, preferred_element_type=f32)

    # --- causal conv (k=2):  cur[t] = x[t-1] @ Wc0 + x[t] @ Wc1,  x[-1] = 0 ----
    x = x_ref[...].astype(f32).reshape(m, cin)            # stacked [B*Tp, Cin]
    xpad_ref[:px, :] = jnp.zeros((px, cin), f32)          # zero "history" rows
    xpad_ref[px:, :] = x
    x_prev = xpad_ref[px - 1: px - 1 + m, :]              # x[t-1] in stacked time
    row = jax.lax.broadcasted_iota(jnp.int32, (m, 1), 0)
    x_prev = jnp.where(row % tp == 0, 0.0, x_prev)        # x[-1]=0 at every batch start
    cur_ref[:pc, :] = jnp.zeros((pc, rch), f32)           # zero "history" rows
    cur_ref[pc:, :] = mm(x_prev, cw0_ref) + mm(x, cw1_ref)
    skip_ref[...] = jnp.zeros(skip_ref.shape, f32)

    # --- residual stack (Python-unrolled; all offsets static) -----------------
    # Right-aligned formulation: only the last skip_size rows of each batch are
    # kept, and every shifted read that feeds those rows stays inside its own
    # batch, so zero-history / cross-batch rows only contaminate discarded rows.
    for n, d in enumerate(dilations):
        cur = cur_ref[pc:, :]                              # h[t]    [m, R]
        prev = cur_ref[pc - d: pc - d + m, :]              # h[t-d]  [m, R]
        # two accumulated MXU passes (no lane-axis activation concat)
        z = mm(prev, wd0_ref, n) + mm(cur, wd1_ref, n)
        gated = jnp.tanh(z) * jax.nn.sigmoid(z)
        # fused 1x1 residual + 1x1 skip: one [R, R+Cin] matmul
        rs = mm(gated, wrs_ref, n) + brs_ref[n]            # [m, R+Cin] = res | skip
        cur_ref[pc:, :] = rs[:, :rch] + cur                # residual connection
        skip_ref[...] = skip_ref[...] + rs                 # full-width accumulate

    # --- DensNet: relu -> 1x1 -> relu -> 1x1 -> softmax over channels ---------
    # Computed over ALL rows; the wrapper keeps only the last skip_size rows.
    h = jnp.maximum(skip_ref[:, rch:], 0.0)                # read skip lanes once
    h = jnp.maximum(mm(h, dw1_ref) + db1_ref[...], 0.0)
    h = mm(h, dw2_ref) + db2_ref[...]
    mx = jnp.max(h, axis=-1, keepdims=True)
    e = jnp.exp(h - mx)
    inv = pl.reciprocal(jnp.sum(e, axis=-1, keepdims=True), approx=True)
    out_ref[...] = (e * inv).reshape(bblk, tp, cin).astype(out_ref.dtype)


# ----------------------------------------------------------------------------
# Wrapper: parameter re-layout (glue) + pallas_call
# ----------------------------------------------------------------------------
def wavenet_forward(x, params, layer_size, stack_size, batch_block=None):
    """x: [B, T, Cin]  (same as PyTorch WaveNet.forward input).
    Returns [B, T - receptive_fields, Cin] (softmax over channels)."""
    B, T, Cin = x.shape
    dilations = [2 ** l for _ in range(stack_size) for l in range(layer_size)]
    rf = sum(dilations)
    skip_size = T - rf
    assert skip_size > 0, "timestep dim must exceed the receptive field"

    # Sublane alignment: front-pad time with zeros to a multiple of 8.  Exact
    # under the right-aligned formulation; a no-op when T % 8 == 0.
    pad = (-T) % 8
    xp = jnp.pad(x, ((0, 0), (pad, 0), (0, 0))) if pad else x
    Tp = T + pad

    # Batch folding: default is ONE grid step with every batch stacked into the
    # matmul M dimension (best on 1-TC v5e/v6e).  On v7x (2 TCs) pass
    # batch_block = pl.cdiv(B, 2) so the "parallel" grid axis feeds both cores.
    if batch_block is None:
        batch_block = B
    assert B % batch_block == 0, "batch_block must divide the batch size"
    n_steps = B // batch_block
    M = batch_block * Tp

    p = params
    R = p['causal_w'].shape[0]
    bf16 = jnp.bfloat16

    # Zero-history row counts (multiples of 8 for sublane alignment).
    px = 8
    pc = ((max(dilations) + 7) // 8) * 8
    assert pc >= max(dilations)

    # Glue: (out,in,k) conv weights -> (in,out) matmul operands, stored bf16 for
    # the MXU (halves weight DMA bytes / VMEM footprint); biases stay f32.
    cw0 = p['causal_w'][:, :, 0].T.astype(bf16)                          # x[t-1] tap
    cw1 = p['causal_w'][:, :, 1].T.astype(bf16)                          # x[t]   tap
    wd0 = jnp.transpose(p['wdil'][:, :, :, 0], (0, 2, 1)).astype(bf16)   # h[t-d] tap
    wd1 = jnp.transpose(p['wdil'][:, :, :, 1], (0, 2, 1)).astype(bf16)   # h[t]   tap
    wrs = jnp.concatenate([jnp.transpose(p['wres'][:, :, :, 0], (0, 2, 1)),
                           jnp.transpose(p['wskip'][:, :, :, 0], (0, 2, 1))],
                          axis=2).astype(bf16)                           # [N, R, R+Cin]
    brs = jnp.concatenate([p['bres'], p['bskip']], axis=1)[:, None, :]   # [N, 1, R+Cin] f32
    dw1 = p['dw1'][:, :, 0].T.astype(bf16)                               # [Cin, Cin]
    db1 = p['db1'][None, :]                                              # [1, Cin] f32
    dw2 = p['dw2'][:, :, 0].T.astype(bf16)
    db2 = p['db2'][None, :]
    weights = (cw0, cw1, wd0, wd1, wrs, brs, dw1, db1, dw2, db2)

    def rep_spec(a):  # grid-invariant (replicated) weight block
        nd = a.ndim
        return pl.BlockSpec(a.shape, lambda b, nd=nd: (0,) * nd)

    kernel = functools.partial(wavenet_kernel, tuple(dilations))

    out = pl.pallas_call(
        kernel,
        grid=(n_steps,),
        in_specs=[pl.BlockSpec((batch_block, Tp, Cin), lambda b: (b, 0, 0))] +
                 [rep_spec(w) for w in weights],
        out_specs=pl.BlockSpec((batch_block, Tp, Cin), lambda b: (b, 0, 0)),
        out_shape=jax.ShapeDtypeStruct((B, Tp, Cin), x.dtype),
        scratch_shapes=[pltpu.VMEM((px + M, Cin), jnp.float32),
                        pltpu.VMEM((pc + M, R), jnp.float32),
                        pltpu.VMEM((M, R + Cin), jnp.float32)],
        compiler_params=pltpu.CompilerParams(
            dimension_semantics=("parallel",),
            # safely below v7x's 64 MiB physical VMEM; raise toward ~100 MiB on
            # v5e/v6e when scaling Tp/R (per-generation tuning).
            vmem_limit_bytes=48 * 1024 * 1024),
    )(xp, *weights)

    # DensNet ran on all Tp rows (avoids a sublane-shifted copy before the dense
    # matmuls); keep only the last skip_size timesteps per batch here.
    return out[:, Tp - skip_size:, :]


# ----------------------------------------------------------------------------
# Pure-JAX reference mirroring the PyTorch (NCW) semantics, for verification.
# mxu_dtype=jnp.bfloat16 emulates the kernel's bf16 MXU-operand rounding
# (everything else f32), so the kernel can be checked tightly against its own
# numerics spec as well as loosely against the full-f32 module.
# ----------------------------------------------------------------------------
def ref_forward(x, p, dilations, mxu_dtype=None):
    f32 = jnp.float32
    hi = jax.lax.Precision.HIGHEST
    cast = (lambda a: a.astype(mxu_dtype)) if mxu_dtype is not None else (lambda a: a)

    def mm(w, a):  # w: [O, I], a: [B, I, T] -> [B, O, T], f32 accumulate
        return jnp.einsum('oi,bit->bot', cast(w), cast(a),
                          precision=hi, preferred_element_type=f32)

    xc = jnp.transpose(x, (0, 2, 1))                       # [B, Cin, T]
    T = xc.shape[2]
    skip_size = T - sum(dilations)
    xpd = jnp.pad(xc, ((0, 0), (0, 0), (1, 0)))
    cw = p['causal_w']
    cur = mm(cw[:, :, 0], xpd[:, :, :T]) + mm(cw[:, :, 1], xpd[:, :, 1:])
    skips = []
    for n, d in enumerate(dilations):
        L = cur.shape[2]
        w = p['wdil'][n]
        z = mm(w[:, :, 0], cur[:, :, :L - d]) + mm(w[:, :, 1], cur[:, :, d:])
        gated = jnp.tanh(z) * jax.nn.sigmoid(z)
        res = mm(p['wres'][n][:, :, 0], gated) + p['bres'][n][None, :, None]
        skip = mm(p['wskip'][n][:, :, 0], gated) + p['bskip'][n][None, :, None]
        cur = res + cur[:, :, d:]
        skips.append(skip[:, :, -skip_size:])
    out = sum(skips)
    out = jnp.maximum(out, 0.0)
    out = mm(p['dw1'][:, :, 0], out) + p['db1'][None, :, None]
    out = jnp.maximum(out, 0.0)
    out = mm(p['dw2'][:, :, 0], out) + p['db2'][None, :, None]
    out = jax.nn.softmax(out, axis=1)
    return jnp.transpose(out, (0, 2, 1))


# ----------------------------------------------------------------------------
def make_params(key, layer_size, stack_size, in_channels, res_channels):
    n_blocks = layer_size * stack_size
    ks = jax.random.split(key, 10)
    s = 0.2
    return {
        'causal_w': s * jax.random.normal(ks[0], (res_channels, in_channels, 2), jnp.float32),
        'wdil':     s * jax.random.normal(ks[1], (n_blocks, res_channels, res_channels, 2), jnp.float32),
        'wres':     s * jax.random.normal(ks[2], (n_blocks, res_channels, res_channels, 1), jnp.float32),
        'bres':     s * jax.random.normal(ks[3], (n_blocks, res_channels), jnp.float32),
        'wskip':    s * jax.random.normal(ks[4], (n_blocks, in_channels, res_channels, 1), jnp.float32),
        'bskip':    s * jax.random.normal(ks[5], (n_blocks, in_channels), jnp.float32),
        'dw1':      s * jax.random.normal(ks[6], (in_channels, in_channels, 1), jnp.float32),
        'db1':      s * jax.random.normal(ks[7], (in_channels,), jnp.float32),
        'dw2':      s * jax.random.normal(ks[8], (in_channels, in_channels, 1), jnp.float32),
        'db2':      s * jax.random.normal(ks[9], (in_channels,), jnp.float32),
    }


if __name__ == "__main__":
    layer_size, stack_size = 3, 2          # dilations: 1,2,4,1,2,4 -> rf = 14
    in_channels, res_channels = 8, 16
    B, T = 2, 32                           # T > receptive field; T % 8 == 0

    key = jax.random.PRNGKey(0)
    kp, kx = jax.random.split(key)
    params = make_params(kp, layer_size, stack_size, in_channels, res_channels)
    x = jax.random.normal(kx, (B, T, in_channels), jnp.float32)

    out = jax.block_until_ready(wavenet_forward(x, params, layer_size, stack_size))

    dilations = [2 ** l for _ in range(stack_size) for l in range(layer_size)]
    skip_size = T - sum(dilations)
    assert out.shape == (B, skip_size, in_channels), out.shape

    # (1) Numerics-spec check: pure-JAX reference with the SAME bf16 MXU-operand
    #     rounding the kernel uses (elementwise math f32 in both).  Residual
    #     difference is summation order / transcendental impl / approx recip.
    ref_b = ref_forward(x, params, dilations, mxu_dtype=jnp.bfloat16)
    err_b = float(jnp.max(jnp.abs(out - ref_b)))
    assert jnp.allclose(out, ref_b, atol=5e-3, rtol=5e-3), err_b

    # (2) Accuracy vs. the full-f32 HIGHEST-precision reference.  The looser
    #     tolerance is intentional: MXU operands are bf16 and the softmax uses
    #     the approximate EUP reciprocal, per the performance review.
    ref_f = ref_forward(x, params, dilations)
    err_f = float(jnp.max(jnp.abs(out - ref_f)))
    assert jnp.allclose(out, ref_f, atol=3e-2, rtol=3e-2), err_f

    print("KERNEL_OK")
</pallas_src>

<mosaic_0001>
module attributes {stable_mosaic.version = 11 : i64} {
  func.func @wavenet_kernel(%arg0: i32, %arg1: memref<2x32x8xf32, #tpu.memory_space<vmem>>, %arg2: memref<8x16xbf16, #tpu.memory_space<vmem>>, %arg3: memref<8x16xbf16, #tpu.memory_space<vmem>>, %arg4: memref<6x16x16xbf16, #tpu.memory_space<vmem>>, %arg5: memref<6x16x16xbf16, #tpu.memory_space<vmem>>, %arg6: memref<6x16x24xbf16, #tpu.memory_space<vmem>>, %arg7: memref<6x1x24xf32, #tpu.memory_space<vmem>>, %arg8: memref<8x8xbf16, #tpu.memory_space<vmem>>, %arg9: memref<1x8xf32, #tpu.memory_space<vmem>>, %arg10: memref<8x8xbf16, #tpu.memory_space<vmem>>, %arg11: memref<1x8xf32, #tpu.memory_space<vmem>>, %arg12: memref<2x32x8xf32, #tpu.memory_space<vmem>>, %arg13: memref<72x8xf32, #tpu.memory_space<vmem>>, %arg14: memref<72x16xf32, #tpu.memory_space<vmem>>, %arg15: memref<64x24xf32, #tpu.memory_space<vmem>>) attributes {dimension_semantics = [#tpu.dimension_semantics<parallel>], iteration_bounds = array<i64: 1>, scalar_prefetch = 0 : i64, scratch_operands = 3 : i64, tpu.core_type = #tpu.core_type<tc>, window_params = [{transform_indices = @transform_0, window_bounds = array<i64: 2, 32, 8>}, {pipeline_mode = #tpu.pipeline_mode<synchronous>, transform_indices = @transform_1, window_bounds = array<i64: 8, 16>}, {pipeline_mode = #tpu.pipeline_mode<synchronous>, transform_indices = @transform_2, window_bounds = array<i64: 8, 16>}, {pipeline_mode = #tpu.pipeline_mode<synchronous>, transform_indices = @transform_3, window_bounds = array<i64: 6, 16, 16>}, {pipeline_mode = #tpu.pipeline_mode<synchronous>, transform_indices = @transform_4, window_bounds = array<i64: 6, 16, 16>}, {pipeline_mode = #tpu.pipeline_mode<synchronous>, transform_indices = @transform_5, window_bounds = array<i64: 6, 16, 24>}, {pipeline_mode = #tpu.pipeline_mode<synchronous>, transform_indices = @transform_6, window_bounds = array<i64: 6, 1, 24>}, {pipeline_mode = #tpu.pipeline_mode<synchronous>, transform_indices = @transform_7, window_bounds = array<i64: 8, 8>}, {pipeline_mode = #tpu.pipeline_mode<synchronous>, transform_indices = @transform_8, window_bounds = array<i64: 1, 8>}, {pipeline_mode = #tpu.pipeline_mode<synchronous>, transform_indices = @transform_9, window_bounds = array<i64: 8, 8>}, {pipeline_mode = #tpu.pipeline_mode<synchronous>, transform_indices = @transform_10, window_bounds = array<i64: 1, 8>}, {transform_indices = @transform_11, window_bounds = array<i64: 2, 32, 8>}]} {
    %c0 = arith.constant 0 : index
    %c0_0 = arith.constant 0 : index
    %c0_1 = arith.constant 0 : index
    %0 = vector.load %arg1[%c0, %c0_0, %c0_1] : memref<2x32x8xf32, #tpu.memory_space<vmem>>, vector<2x32x8xf32>
    %1 = vector.shape_cast %0 : vector<2x32x8xf32> to vector<64x8xf32>
    %cst = arith.constant 0.000000e+00 : f32
    %2 = vector.broadcast %cst : f32 to vector<8x8xf32>
    %c0_2 = arith.constant 0 : index
    %c0_3 = arith.constant 0 : index
    %3 = vector.load %arg13[%c0_2, %c0_3] : memref<72x8xf32, #tpu.memory_space<vmem>>, vector<8x8xf32>
    tpu.vector_store %arg13[%c0_2, %c0_3], %2 {strides = array<i32>} : memref<72x8xf32, #tpu.memory_space<vmem>>, vector<8x8xf32>,
    %c8 = arith.constant 8 : index
    %c0_4 = arith.constant 0 : index
    %4 = vector.load %arg13[%c8, %c0_4] : memref<72x8xf32, #tpu.memory_space<vmem>>, vector<64x8xf32>
    tpu.vector_store %arg13[%c8, %c0_4], %1 {strides = array<i32>} : memref<72x8xf32, #tpu.memory_space<vmem>>, vector<64x8xf32>,
    %c7 = arith.constant 7 : index
    %c0_5 = arith.constant 0 : index
    %5 = vector.load %arg13[%c7, %c0_5] : memref<72x8xf32, #tpu.memory_space<vmem>>, vector<64x8xf32>
    %6 = tpu.iota {dimensions = array<i32: 0>} : vector<64x1xi32>
    %c32_i32 = arith.constant 32 : i32
    %c0_i32 = arith.constant 0 : i32
    %7 = arith.cmpi eq, %c32_i32, %c0_i32 : i32
    %c1_i32 = arith.constant 1 : i32
    %8 = arith.select %7, %c1_i32, %c32_i32 : i32
    %9 = vector.broadcast %8 : i32 to vector<64x1xi32>
    %10 = arith.remsi %6, %9 : vector<64x1xi32>
    %c0_i32_6 = arith.constant 0 : i32
    %11 = vector.broadcast %c0_i32_6 : i32 to vector<64x1xi32>
    %12 = arith.cmpi ne, %10, %11 : vector<64x1xi32>
    %c0_i32_7 = arith.constant 0 : i32
    %13 = vector.broadcast %c0_i32_7 : i32 to vector<64x1xi32>
    %14 = arith.cmpi slt, %10, %13 : vector<64x1xi32>
    %c0_i32_8 = arith.constant 0 : i32
    %15 = arith.cmpi slt, %8, %c0_i32_8 : i32
    %16 = vector.broadcast %15 : i1 to vector<64x1xi1>
    %17 = vector.broadcast %16 : vector<64x1xi1> to vector<64x1xi1>
    %18 = arith.xori %14, %17 : vector<64x1xi1>
    %19 = arith.andi %18, %12 : vector<64x1xi1>
    %20 = vector.broadcast %8 : i32 to vector<64x1xi32>
    %21 = arith.addi %10, %20 : vector<64x1xi32>
    %22 = arith.select %19, %21, %10 : vector<64x1xi1>, vector<64x1xi32>
    %c0_i32_9 = arith.constant 0 : i32
    %23 = vector.broadcast %c0_i32_9 : i32 to vector<64x1xi32>
    %24 = arith.cmpi eq, %22, %23 : vector<64x1xi32>
    %cst_10 = arith.constant 0.000000e+00 : f32
    %25 = vector.shape_cast %24 : vector<64x1xi1> to vector<64x1xi1>
    %26 = vector.broadcast %25 : vector<64x1xi1> to vector<64x8xi1>
    %27 = vector.broadcast %cst_10 : f32 to vector<64x8xf32>
    %28 = arith.select %26, %27, %5 : vector<64x8xi1>, vector<64x8xf32>
    %cst_11 = arith.constant 0.000000e+00 : f32
    %29 = vector.broadcast %cst_11 : f32 to vector<8x16xf32>
    %c0_12 = arith.constant 0 : index
    %c0_13 = arith.constant 0 : index
    %30 = vector.load %arg14[%c0_12, %c0_13] : memref<72x16xf32, #tpu.memory_space<vmem>>, vector<8x16xf32>
    tpu.vector_store %arg14[%c0_12, %c0_13], %29 {strides = array<i32>} : memref<72x16xf32, #tpu.memory_space<vmem>>, vector<8x16xf32>,
    %c0_14 = arith.constant 0 : index
    %c0_15 = arith.constant 0 : index
    %31 = vector.load %arg2[%c0_14, %c0_15] : memref<8x16xbf16, #tpu.memory_space<vmem>>, vector<8x16xbf16>
    %32 = arith.truncf %28 : vector<64x8xf32> to vector<64x8xbf16>
    %cst_16 = arith.constant dense<0.000000e+00> : vector<64x16xf32>
    %33 = tpu.matmul %32, %31, %cst_16 {dimension_numbers = #tpu.dot_dimension_numbers<[1], [0], [0], [1], [0, 0, 1, 1], [], []>} : vector<64x8xbf16>, vector<8x16xbf16>, vector<64x16xf32> -> vector<64x16xf32>
    %c0_17 = arith.constant 0 : index
    %c0_18 = arith.constant 0 : index
    %34 = vector.load %arg3[%c0_17, %c0_18] : memref<8x16xbf16, #tpu.memory_space<vmem>>, vector<8x16xbf16>
    %35 = arith.truncf %1 : vector<64x8xf32> to vector<64x8xbf16>
    %cst_19 = arith.constant dense<0.000000e+00> : vector<64x16xf32>
    %36 = tpu.matmul %35, %34, %cst_19 {dimension_numbers = #tpu.dot_dimension_numbers<[1], [0], [0], [1], [0, 0, 1, 1], [], []>} : vector<64x8xbf16>, vector<8x16xbf16>, vector<64x16xf32> -> vector<64x16xf32>
    %37 = arith.addf %33, %36 : vector<64x16xf32>
    %c8_20 = arith.constant 8 : index
    %c0_21 = arith.constant 0 : index
    %38 = vector.load %arg14[%c8_20, %c0_21] : memref<72x16xf32, #tpu.memory_space<vmem>>, vector<64x16xf32>
    tpu.vector_store %arg14[%c8_20, %c0_21], %37 {strides = array<i32>} : memref<72x16xf32, #tpu.memory_space<vmem>>, vector<64x16xf32>,
    %cst_22 = arith.constant 0.000000e+00 : f32
    %39 = vector.broadcast %cst_22 : f32 to vector<64x24xf32>
    %c0_23 = arith.constant 0 : index
    %c0_24 = arith.constant 0 : index
    %40 = vector.load %arg15[%c0_23, %c0_24] : memref<64x24xf32, #tpu.memory_space<vmem>>, vector<64x24xf32>
    tpu.vector_store %arg15[%c0_23, %c0_24], %39 {strides = array<i32>} : memref<64x24xf32, #tpu.memory_space<vmem>>, vector<64x24xf32>,
    %c8_25 = arith.constant 8 : index
    %c0_26 = arith.constant 0 : index
    %41 = vector.load %arg14[%c8_25, %c0_26] : memref<72x16xf32, #tpu.memory_space<vmem>>, vector<64x16xf32>
    %c7_27 = arith.constant 7 : index
    %c0_28 = arith.constant 0 : index
    %42 = vector.load %arg14[%c7_27, %c0_28] : memref<72x16xf32, #tpu.memory_space<vmem>>, vector<64x16xf32>
    %c0_29 = arith.constant 0 : index
    %c0_30 = arith.constant 0 : index
    %c0_31 = arith.constant 0 : index
    %43 = vector.load %arg4[%c0_29, %c0_30, %c0_31] : memref<6x16x16xbf16, #tpu.memory_space<vmem>>, vector<1x16x16xbf16>
    %44 = vector.shape_cast %43 : vector<1x16x16xbf16> to vector<16x16xbf16>
    %45 = arith.truncf %42 : vector<64x16xf32> to vector<64x16xbf16>
    %cst_32 = arith.constant dense<0.000000e+00> : vector<64x16xf32>
    %46 = tpu.matmul %45, %44, %cst_32 {dimension_numbers = #tpu.dot_dimension_numbers<[1], [0], [0], [1], [0, 0, 1, 1], [], []>} : vector<64x16xbf16>, vector<16x16xbf16>, vector<64x16xf32> -> vector<64x16xf32>
    %c0_33 = arith.constant 0 : index
    %c0_34 = arith.constant 0 : index
    %c0_35 = arith.constant 0 : index
    %47 = vector.load %arg5[%c0_33, %c0_34, %c0_35] : memref<6x16x16xbf16, #tpu.memory_space<vmem>>, vector<1x16x16xbf16>
    %48 = vector.shape_cast %47 : vector<1x16x16xbf16> to vector<16x16xbf16>
    %49 = arith.truncf %41 : vector<64x16xf32> to vector<64x16xbf16>
    %cst_36 = arith.constant dense<0.000000e+00> : vector<64x16xf32>
    %50 = tpu.matmul %49, %48, %cst_36 {dimension_numbers = #tpu.dot_dimension_numbers<[1], [0], [0], [1], [0, 0, 1, 1], [], []>} : vector<64x16xbf16>, vector<16x16xbf16>, vector<64x16xf32> -> vector<64x16xf32>
    %51 = arith.addf %46, %50 : vector<64x16xf32>
    %52 = math.tanh %51 : vector<64x16xf32>
    %53 = arith.negf %51 : vector<64x16xf32>
    %54 = math.exp %53 : vector<64x16xf32>
    %cst_37 = arith.constant 1.000000e+00 : f32
    %55 = vector.broadcast %cst_37 : f32 to vector<64x16xf32>
    %56 = arith.addf %55, %54 : vector<64x16xf32>
    %57 = arith.divf %55, %56 : vector<64x16xf32>
    %58 = arith.mulf %52, %57 : vector<64x16xf32>
    %c0_38 = arith.constant 0 : index
    %c0_39 = arith.constant 0 : index
    %c0_40 = arith.constant 0 : index
    %59 = vector.load %arg6[%c0_38, %c0_39, %c0_40] : memref<6x16x24xbf16, #tpu.memory_space<vmem>>, vector<1x16x24xbf16>
    %60 = vector.shape_cast %59 : vector<1x16x24xbf16> to vector<16x24xbf16>
    %61 = arith.truncf %58 : vector<64x16xf32> to vector<64x16xbf16>
    %cst_41 = arith.constant dense<0.000000e+00> : vector<64x24xf32>
    %62 = tpu.matmul %61, %60, %cst_41 {dimension_numbers = #tpu.dot_dimension_numbers<[1], [0], [0], [1], [0, 0, 1, 1], [], []>} : vector<64x16xbf16>, vector<16x24xbf16>, vector<64x24xf32> -> vector<64x24xf32>
    %c0_42 = arith.constant 0 : index
    %c0_43 = arith.constant 0 : index
    %c0_44 = arith.constant 0 : index
    %63 = vector.load %arg7[%c0_42, %c0_43, %c0_44] : memref<6x1x24xf32, #tpu.memory_space<vmem>>, vector<1x1x24xf32>
    %64 = vector.shape_cast %63 : vector<1x1x24xf32> to vector<1x24xf32>
    %65 = vector.broadcast %64 : vector<1x24xf32> to vector<64x24xf32>
    %66 = arith.addf %62, %65 : vector<64x24xf32>
    %67 = vector.extract_strided_slice %66 {offsets = [0, 0], sizes = [64, 16], strides = [1, 1]} : vector<64x24xf32> to vector<64x16xf32>
    %68 = arith.addf %67, %41 : vector<64x16xf32>
    %c8_45 = arith.constant 8 : index
    %c0_46 = arith.constant 0 : index
    %69 = vector.load %arg14[%c8_45, %c0_46] : memref<72x16xf32, #tpu.memory_space<vmem>>, vector<64x16xf32>
    tpu.vector_store %arg14[%c8_45, %c0_46], %68 {strides = array<i32>} : memref<72x16xf32, #tpu.memory_space<vmem>>, vector<64x16xf32>,
    %c0_47 = arith.constant 0 : index
    %c0_48 = arith.constant 0 : index
    %70 = vector.load %arg15[%c0_47, %c0_48] : memref<64x24xf32, #tpu.memory_space<vmem>>, vector<64x24xf32>
    %71 = arith.addf %70, %66 : vector<64x24xf32>
    %c0_49 = arith.constant 0 : index
    %c0_50 = arith.constant 0 : index
    %72 = vector.load %arg15[%c0_49, %c0_50] : memref<64x24xf32, #tpu.memory_space<vmem>>, vector<64x24xf32>
    tpu.vector_store %arg15[%c0_49, %c0_50], %71 {strides = array<i32>} : memref<64x24xf32, #tpu.memory_space<vmem>>, vector<64x24xf32>,
    %c8_51 = arith.constant 8 : index
    %c0_52 = arith.constant 0 : index
    %73 = vector.load %arg14[%c8_51, %c0_52] : memref<72x16xf32, #tpu.memory_space<vmem>>, vector<64x16xf32>
    %c6 = arith.constant 6 : index
    %c0_53 = arith.constant 0 : index
    %74 = vector.load %arg14[%c6, %c0_53] : memref<72x16xf32, #tpu.memory_space<vmem>>, vector<64x16xf32>
    %c1 = arith.constant 1 : index
    %c0_54 = arith.constant 0 : index
    %c0_55 = arith.constant 0 : index
    %75 = vector.load %arg4[%c1, %c0_54, %c0_55] : memref<6x16x16xbf16, #tpu.memory_space<vmem>>, vector<1x16x16xbf16>
    %76 = vector.shape_cast %75 : vector<1x16x16xbf16> to vector<16x16xbf16>
    %77 = arith.truncf %74 : vector<64x16xf32> to vector<64x16xbf16>
    %cst_56 = arith.constant dense<0.000000e+00> : vector<64x16xf32>
    %78 = tpu.matmul %77, %76, %cst_56 {dimension_numbers = #tpu.dot_dimension_numbers<[1], [0], [0], [1], [0, 0, 1, 1], [], []>} : vector<64x16xbf16>, vector<16x16xbf16>, vector<64x16xf32> -> vector<64x16xf32>
    %c1_57 = arith.constant 1 : index
    %c0_58 = arith.constant 0 : index
    %c0_59 = arith.constant 0 : index
    %79 = vector.load %arg5[%c1_57, %c0_58, %c0_59] : memref<6x16x16xbf16, #tpu.memory_space<vmem>>, vector<1x16x16xbf16>
    %80 = vector.shape_cast %79 : vector<1x16x16xbf16> to vector<16x16xbf16>
    %81 = arith.truncf %73 : vector<64x16xf32> to vector<64x16xbf16>
    %cst_60 = arith.constant dense<0.000000e+00> : vector<64x16xf32>
    %82 = tpu.matmul %81, %80, %cst_60 {dimension_numbers = #tpu.dot_dimension_numbers<[1], [0], [0], [1], [0, 0, 1, 1], [], []>} : vector<64x16xbf16>, vector<16x16xbf16>, vector<64x16xf32> -> vector<64x16xf32>
    %83 = arith.addf %78, %82 : vector<64x16xf32>
    %84 = math.tanh %83 : vector<64x16xf32>
    %85 = arith.negf %83 : vector<64x16xf32>
    %86 = math.exp %85 : vector<64x16xf32>
    %cst_61 = arith.constant 1.000000e+00 : f32
    %87 = vector.broadcast %cst_61 : f32 to vector<64x16xf32>
    %88 = arith.addf %87, %86 : vector<64x16xf32>
    %89 = arith.divf %87, %88 : vector<64x16xf32>
    %90 = arith.mulf %84, %89 : vector<64x16xf32>
    %c1_62 = arith.constant 1 : index
    %c0_63 = arith.constant 0 : index
    %c0_64 = arith.constant 0 : index
    %91 = vector.load %arg6[%c1_62, %c0_63, %c0_64] : memref<6x16x24xbf16, #tpu.memory_space<vmem>>, vector<1x16x24xbf16>
    %92 = vector.shape_cast %91 : vector<1x16x24xbf16> to vector<16x24xbf16>
    %93 = arith.truncf %90 : vector<64x16xf32> to vector<64x16xbf16>
    %cst_65 = arith.constant dense<0.000000e+00> : vector<64x24xf32>
    %94 = tpu.matmul %93, %92, %cst_65 {dimension_numbers = #tpu.dot_dimension_numbers<[1], [0], [0], [1], [0, 0, 1, 1], [], []>} : vector<64x16xbf16>, vector<16x24xbf16>, vector<64x24xf32> -> vector<64x24xf32>
    %c1_66 = arith.constant 1 : index
    %c0_67 = arith.constant 0 : index
    %c0_68 = arith.constant 0 : index
    %95 = vector.load %arg7[%c1_66, %c0_67, %c0_68] : memref<6x1x24xf32, #tpu.memory_space<vmem>>, vector<1x1x24xf32>
    %96 = vector.shape_cast %95 : vector<1x1x24xf32> to vector<1x24xf32>
    %97 = vector.broadcast %96 : vector<1x24xf32> to vector<64x24xf32>
    %98 = arith.addf %94, %97 : vector<64x24xf32>
    %99 = vector.extract_strided_slice %98 {offsets = [0, 0], sizes = [64, 16], strides = [1, 1]} : vector<64x24xf32> to vector<64x16xf32>
    %100 = arith.addf %99, %73 : vector<64x16xf32>
    %c8_69 = arith.constant 8 : index
    %c0_70 = arith.constant 0 : index
    %101 = vector.load %arg14[%c8_69, %c0_70] : memref<72x16xf32, #tpu.memory_space<vmem>>, vector<64x16xf32>
    tpu.vector_store %arg14[%c8_69, %c0_70], %100 {strides = array<i32>} : memref<72x16xf32, #tpu.memory_space<vmem>>, vector<64x16xf32>,
    %c0_71 = arith.constant 0 : index
    %c0_72 = arith.constant 0 : index
    %102 = vector.load %arg15[%c0_71, %c0_72] : memref<64x24xf32, #tpu.memory_space<vmem>>, vector<64x24xf32>
    %103 = arith.addf %102, %98 : vector<64x24xf32>
    %c0_73 = arith.constant 0 : index
    %c0_74 = arith.constant 0 : index
    %104 = vector.load %arg15[%c0_73, %c0_74] : memref<64x24xf32, #tpu.memory_space<vmem>>, vector<64x24xf32>
    tpu.vector_store %arg15[%c0_73, %c0_74], %103 {strides = array<i32>} : memref<64x24xf32, #tpu.memory_space<vmem>>, vector<64x24xf32>,
    %c8_75 = arith.constant 8 : index
    %c0_76 = arith.constant 0 : index
    %105 = vector.load %arg14[%c8_75, %c0_76] : memref<72x16xf32, #tpu.memory_space<vmem>>, vector<64x16xf32>
    %c4 = arith.constant 4 : index
    %c0_77 = arith.constant 0 : index
    %106 = vector.load %arg14[%c4, %c0_77] : memref<72x16xf32, #tpu.memory_space<vmem>>, vector<64x16xf32>
    %c2 = arith.constant 2 : index
    %c0_78 = arith.constant 0 : index
    %c0_79 = arith.constant 0 : index
    %107 = vector.load %arg4[%c2, %c0_78, %c0_79] : memref<6x16x16xbf16, #tpu.memory_space<vmem>>, vector<1x16x16xbf16>
    %108 = vector.shape_cast %107 : vector<1x16x16xbf16> to vector<16x16xbf16>
    %109 = arith.truncf %106 : vector<64x16xf32> to vector<64x16xbf16>
    %cst_80 = arith.constant dense<0.000000e+00> : vector<64x16xf32>
    %110 = tpu.matmul %109, %108, %cst_80 {dimension_numbers = #tpu.dot_dimension_numbers<[1], [0], [0], [1], [0, 0, 1, 1], [], []>} : vector<64x16xbf16>, vector<16x16xbf16>, vector<64x16xf32> -> vector<64x16xf32>
    %c2_81 = arith.constant 2 : index
    %c0_82 = arith.constant 0 : index
    %c0_83 = arith.constant 0 : index
    %111 = vector.load %arg5[%c2_81, %c0_82, %c0_83] : memref<6x16x16xbf16, #tpu.memory_space<vmem>>, vector<1x16x16xbf16>
    %112 = vector.shape_cast %111 : vector<1x16x16xbf16> to vector<16x16xbf16>
    %113 = arith.truncf %105 : vector<64x16xf32> to vector<64x16xbf16>
    %cst_84 = arith.constant dense<0.000000e+00> : vector<64x16xf32>
    %114 = tpu.matmul %113, %112, %cst_84 {dimension_numbers = #tpu.dot_dimension_numbers<[1], [0], [0], [1], [0, 0, 1, 1], [], []>} : vector<64x16xbf16>, vector<16x16xbf16>, vector<64x16xf32> -> vector<64x16xf32>
    %115 = arith.addf %110, %114 : vector<64x16xf32>
    %116 = math.tanh %115 : vector<64x16xf32>
    %117 = arith.negf %115 : vector<64x16xf32>
    %118 = math.exp %117 : vector<64x16xf32>
    %cst_85 = arith.constant 1.000000e+00 : f32
    %119 = vector.broadcast %cst_85 : f32 to vector<64x16xf32>
    %120 = arith.addf %119, %118 : vector<64x16xf32>
    %121 = arith.divf %119, %120 : vector<64x16xf32>
    %122 = arith.mulf %116, %121 : vector<64x16xf32>
    %c2_86 = arith.constant 2 : index
    %c0_87 = arith.constant 0 : index
    %c0_88 = arith.constant 0 : index
    %123 = vector.load %arg6[%c2_86, %c0_87, %c0_88] : memref<6x16x24xbf16, #tpu.memory_space<vmem>>, vector<1x16x24xbf16>
    %124 = vector.shape_cast %123 : vector<1x16x24xbf16> to vector<16x24xbf16>
    %125 = arith.truncf %122 : vector<64x16xf32> to vector<64x16xbf16>
    %cst_89 = arith.constant dense<0.000000e+00> : vector<64x24xf32>
    %126 = tpu.matmul %125, %124, %cst_89 {dimension_numbers = #tpu.dot_dimension_numbers<[1], [0], [0], [1], [0, 0, 1, 1], [], []>} : vector<64x16xbf16>, vector<16x24xbf16>, vector<64x24xf32> -> vector<64x24xf32>
    %c2_90 = arith.constant 2 : index
    %c0_91 = arith.constant 0 : index
    %c0_92 = arith.constant 0 : index
    %127 = vector.load %arg7[%c2_90, %c0_91, %c0_92] : memref<6x1x24xf32, #tpu.memory_space<vmem>>, vector<1x1x24xf32>
    %128 = vector.shape_cast %127 : vector<1x1x24xf32> to vector<1x24xf32>
    %129 = vector.broadcast %128 : vector<1x24xf32> to vector<64x24xf32>
    %130 = arith.addf %126, %129 : vector<64x24xf32>
    %131 = vector.extract_strided_slice %130 {offsets = [0, 0], sizes = [64, 16], strides = [1, 1]} : vector<64x24xf32> to vector<64x16xf32>
    %132 = arith.addf %131, %105 : vector<64x16xf32>
    %c8_93 = arith.constant 8 : index
    %c0_94 = arith.constant 0 : index
    %133 = vector.load %arg14[%c8_93, %c0_94] : memref<72x16xf32, #tpu.memory_space<vmem>>, vector<64x16xf32>
    tpu.vector_store %arg14[%c8_93, %c0_94], %132 {strides = array<i32>} : memref<72x16xf32, #tpu.memory_space<vmem>>, vector<64x16xf32>,
    %c0_95 = arith.constant 0 : index
    %c0_96 = arith.constant 0 : index
    %134 = vector.load %arg15[%c0_95, %c0_96] : memref<64x24xf32, #tpu.memory_space<vmem>>, vector<64x24xf32>
    %135 = arith.addf %134, %130 : vector<64x24xf32>
    %c0_97 = arith.constant 0 : index
    %c0_98 = arith.constant 0 : index
    %136 = vector.load %arg15[%c0_97, %c0_98] : memref<64x24xf32, #tpu.memory_space<vmem>>, vector<64x24xf32>
    tpu.vector_store %arg15[%c0_97, %c0_98], %135 {strides = array<i32>} : memref<64x24xf32, #tpu.memory_space<vmem>>, vector<64x24xf32>,
    %c8_99 = arith.constant 8 : index
    %c0_100 = arith.constant 0 : index
    %137 = vector.load %arg14[%c8_99, %c0_100] : memref<72x16xf32, #tpu.memory_space<vmem>>, vector<64x16xf32>
    %c7_101 = arith.constant 7 : index
    %c0_102 = arith.constant 0 : index
    %138 = vector.load %arg14[%c7_101, %c0_102] : memref<72x16xf32, #tpu.memory_space<vmem>>, vector<64x16xf32>
    %c3 = arith.constant 3 : index
    %c0_103 = arith.constant 0 : index
    %c0_104 = arith.constant 0 : index
    %139 = vector.load %arg4[%c3, %c0_103, %c0_104] : memref<6x16x16xbf16, #tpu.memory_space<vmem>>, vector<1x16x16xbf16>
    %140 = vector.shape_cast %139 : vector<1x16x16xbf16> to vector<16x16xbf16>
    %141 = arith.truncf %138 : vector<64x16xf32> to vector<64x16xbf16>
    %cst_105 = arith.constant dense<0.000000e+00> : vector<64x16xf32>
    %142 = tpu.matmul %141, %140, %cst_105 {dimension_numbers = #tpu.dot_dimension_numbers<[1], [0], [0], [1], [0, 0, 1, 1], [], []>} : vector<64x16xbf16>, vector<16x16xbf16>, vector<64x16xf32> -> vector<64x16xf32>
    %c3_106 = arith.constant 3 : index
    %c0_107 = arith.constant 0 : index
    %c0_108 = arith.constant 0 : index
    %143 = vector.load %arg5[%c3_106, %c0_107, %c0_108] : memref<6x16x16xbf16, #tpu.memory_space<vmem>>, vector<1x16x16xbf16>
    %144 = vector.shape_cast %143 : vector<1x16x16xbf16> to vector<16x16xbf16>
    %145 = arith.truncf %137 : vector<64x16xf32> to vector<64x16xbf16>
    %cst_109 = arith.constant dense<0.000000e+00> : vector<64x16xf32>
    %146 = tpu.matmul %145, %144, %cst_109 {dimension_numbers = #tpu.dot_dimension_numbers<[1], [0], [0], [1], [0, 0, 1, 1], [], []>} : vector<64x16xbf16>, vector<16x16xbf16>, vector<64x16xf32> -> vector<64x16xf32>
    %147 = arith.addf %142, %146 : vector<64x16xf32>
    %148 = math.tanh %147 : vector<64x16xf32>
    %149 = arith.negf %147 : vector<64x16xf32>
    %150 = math.exp %149 : vector<64x16xf32>
    %cst_110 = arith.constant 1.000000e+00 : f32
    %151 = vector.broadcast %cst_110 : f32 to vector<64x16xf32>
    %152 = arith.addf %151, %150 : vector<64x16xf32>
    %153 = arith.divf %151, %152 : vector<64x16xf32>
    %154 = arith.mulf %148, %153 : vector<64x16xf32>
    %c3_111 = arith.constant 3 : index
    %c0_112 = arith.constant 0 : index
    %c0_113 = arith.constant 0 : index
    %155 = vector.load %arg6[%c3_111, %c0_112, %c0_113] : memref<6x16x24xbf16, #tpu.memory_space<vmem>>, vector<1x16x24xbf16>
    %156 = vector.shape_cast %155 : vector<1x16x24xbf16> to vector<16x24xbf16>
    %157 = arith.truncf %154 : vector<64x16xf32> to vector<64x16xbf16>
    %cst_114 = arith.constant dense<0.000000e+00> : vector<64x24xf32>
    %158 = tpu.matmul %157, %156, %cst_114 {dimension_numbers = #tpu.dot_dimension_numbers<[1], [0], [0], [1], [0, 0, 1, 1], [], []>} : vector<64x16xbf16>, vector<16x24xbf16>, vector<64x24xf32> -> vector<64x24xf32>
    %c3_115 = arith.constant 3 : index
    %c0_116 = arith.constant 0 : index
    %c0_117 = arith.constant 0 : index
    %159 = vector.load %arg7[%c3_115, %c0_116, %c0_117] : memref<6x1x24xf32, #tpu.memory_space<vmem>>, vector<1x1x24xf32>
    %160 = vector.shape_cast %159 : vector<1x1x24xf32> to vector<1x24xf32>
    %161 = vector.broadcast %160 : vector<1x24xf32> to vector<64x24xf32>
    %162 = arith.addf %158, %161 : vector<64x24xf32>
    %163 = vector.extract_strided_slice %162 {offsets = [0, 0], sizes = [64, 16], strides = [1, 1]} : vector<64x24xf32> to vector<64x16xf32>
    %164 = arith.addf %163, %137 : vector<64x16xf32>
    %c8_118 = arith.constant 8 : index
    %c0_119 = arith.constant 0 : index
    %165 = vector.load %arg14[%c8_118, %c0_119] : memref<72x16xf32, #tpu.memory_space<vmem>>, vector<64x16xf32>
    tpu.vector_store %arg14[%c8_118, %c0_119], %164 {strides = array<i32>} : memref<72x16xf32, #tpu.memory_space<vmem>>, vector<64x16xf32>,
    %c0_120 = arith.constant 0 : index
    %c0_121 = arith.constant 0 : index
    %166 = vector.load %arg15[%c0_120, %c0_121] : memref<64x24xf32, #tpu.memory_space<vmem>>, vector<64x24xf32>
    %167 = arith.addf %166, %162 : vector<64x24xf32>
    %c0_122 = arith.constant 0 : index
    %c0_123 = arith.constant 0 : index
    %168 = vector.load %arg15[%c0_122, %c0_123] : memref<64x24xf32, #tpu.memory_space<vmem>>, vector<64x24xf32>
    tpu.vector_store %arg15[%c0_122, %c0_123], %167 {strides = array<i32>} : memref<64x24xf32, #tpu.memory_space<vmem>>, vector<64x24xf32>,
    %c8_124 = arith.constant 8 : index
    %c0_125 = arith.constant 0 : index
    %169 = vector.load %arg14[%c8_124, %c0_125] : memref<72x16xf32, #tpu.memory_space<vmem>>, vector<64x16xf32>
    %c6_126 = arith.constant 6 : index
    %c0_127 = arith.constant 0 : index
    %170 = vector.load %arg14[%c6_126, %c0_127] : memref<72x16xf32, #tpu.memory_space<vmem>>, vector<64x16xf32>
    %c4_128 = arith.constant 4 : index
    %c0_129 = arith.constant 0 : index
    %c0_130 = arith.constant 0 : index
    %171 = vector.load %arg4[%c4_128, %c0_129, %c0_130] : memref<6x16x16xbf16, #tpu.memory_space<vmem>>, vector<1x16x16xbf16>
    %172 = vector.shape_cast %171 : vector<1x16x16xbf16> to vector<16x16xbf16>
    %173 = arith.truncf %170 : vector<64x16xf32> to vector<64x16xbf16>
    %cst_131 = arith.constant dense<0.000000e+00> : vector<64x16xf32>
    %174 = tpu.matmul %173, %172, %cst_131 {dimension_numbers = #tpu.dot_dimension_numbers<[1], [0], [0], [1], [0, 0, 1, 1], [], []>} : vector<64x16xbf16>, vector<16x16xbf16>, vector<64x16xf32> -> vector<64x16xf32>
    %c4_132 = arith.constant 4 : index
    %c0_133 = arith.constant 0 : index
    %c0_134 = arith.constant 0 : index
    %175 = vector.load %arg5[%c4_132, %c0_133, %c0_134] : memref<6x16x16xbf16, #tpu.memory_space<vmem>>, vector<1x16x16xbf16>
    %176 = vector.shape_cast %175 : vector<1x16x16xbf16> to vector<16x16xbf16>
    %177 = arith.truncf %169 : vector<64x16xf32> to vector<64x16xbf16>
    %cst_135 = arith.constant dense<0.000000e+00> : vector<64x16xf32>
    %178 = tpu.matmul %177, %176, %cst_135 {dimension_numbers = #tpu.dot_dimension_numbers<[1], [0], [0], [1], [0, 0, 1, 1], [], []>} : vector<64x16xbf16>, vector<16x16xbf16>, vector<64x16xf32> -> vector<64x16xf32>
    %179 = arith.addf %174, %178 : vector<64x16xf32>
    %180 = math.tanh %179 : vector<64x16xf32>
    %181 = arith.negf %179 : vector<64x16xf32>
    %182 = math.exp %181 : vector<64x16xf32>
    %cst_136 = arith.constant 1.000000e+00 : f32
    %183 = vector.broadcast %cst_136 : f32 to vector<64x16xf32>
    %184 = arith.addf %183, %182 : vector<64x16xf32>
    %185 = arith.divf %183, %184 : vector<64x16xf32>
    %186 = arith.mulf %180, %185 : vector<64x16xf32>
    %c4_137 = arith.constant 4 : index
    %c0_138 = arith.constant 0 : index
    %c0_139 = arith.constant 0 : index
    %187 = vector.load %arg6[%c4_137, %c0_138, %c0_139] : memref<6x16x24xbf16, #tpu.memory_space<vmem>>, vector<1x16x24xbf16>
    %188 = vector.shape_cast %187 : vector<1x16x24xbf16> to vector<16x24xbf16>
    %189 = arith.truncf %186 : vector<64x16xf32> to vector<64x16xbf16>
    %cst_140 = arith.constant dense<0.000000e+00> : vector<64x24xf32>
    %190 = tpu.matmul %189, %188, %cst_140 {dimension_numbers = #tpu.dot_dimension_numbers<[1], [0], [0], [1], [0, 0, 1, 1], [], []>} : vector<64x16xbf16>, vector<16x24xbf16>, vector<64x24xf32> -> vector<64x24xf32>
    %c4_141 = arith.constant 4 : index
    %c0_142 = arith.constant 0 : index
    %c0_143 = arith.constant 0 : index
    %191 = vector.load %arg7[%c4_141, %c0_142, %c0_143] : memref<6x1x24xf32, #tpu.memory_space<vmem>>, vector<1x1x24xf32>
    %192 = vector.shape_cast %191 : vector<1x1x24xf32> to vector<1x24xf32>
    %193 = vector.broadcast %192 : vector<1x24xf32> to vector<64x24xf32>
    %194 = arith.addf %190, %193 : vector<64x24xf32>
    %195 = vector.extract_strided_slice %194 {offsets = [0, 0], sizes = [64, 16], strides = [1, 1]} : vector<64x24xf32> to vector<64x16xf32>
    %196 = arith.addf %195, %169 : vector<64x16xf32>
    %c8_144 = arith.constant 8 : index
    %c0_145 = arith.constant 0 : index
    %197 = vector.load %arg14[%c8_144, %c0_145] : memref<72x16xf32, #tpu.memory_space<vmem>>, vector<64x16xf32>
    tpu.vector_store %arg14[%c8_144, %c0_145], %196 {strides = array<i32>} : memref<72x16xf32, #tpu.memory_space<vmem>>, vector<64x16xf32>,
    %c0_146 = arith.constant 0 : index
    %c0_147 = arith.constant 0 : index
    %198 = vector.load %arg15[%c0_146, %c0_147] : memref<64x24xf32, #tpu.memory_space<vmem>>, vector<64x24xf32>
    %199 = arith.addf %198, %194 : vector<64x24xf32>
    %c0_148 = arith.constant 0 : index
    %c0_149 = arith.constant 0 : index
    %200 = vector.load %arg15[%c0_148, %c0_149] : memref<64x24xf32, #tpu.memory_space<vmem>>, vector<64x24xf32>
    tpu.vector_store %arg15[%c0_148, %c0_149], %199 {strides = array<i32>} : memref<64x24xf32, #tpu.memory_space<vmem>>, vector<64x24xf32>,
    %c8_150 = arith.constant 8 : index
    %c0_151 = arith.constant 0 : index
    %201 = vector.load %arg14[%c8_150, %c0_151] : memref<72x16xf32, #tpu.memory_space<vmem>>, vector<64x16xf32>
    %c4_152 = arith.constant 4 : index
    %c0_153 = arith.constant 0 : index
    %202 = vector.load %arg14[%c4_152, %c0_153] : memref<72x16xf32, #tpu.memory_space<vmem>>, vector<64x16xf32>
    %c5 = arith.constant 5 : index
    %c0_154 = arith.constant 0 : index
    %c0_155 = arith.constant 0 : index
    %203 = vector.load %arg4[%c5, %c0_154, %c0_155] : memref<6x16x16xbf16, #tpu.memory_space<vmem>>, vector<1x16x16xbf16>
    %204 = vector.shape_cast %203 : vector<1x16x16xbf16> to vector<16x16xbf16>
    %205 = arith.truncf %202 : vector<64x16xf32> to vector<64x16xbf16>
    %cst_156 = arith.constant dense<0.000000e+00> : vector<64x16xf32>
    %206 = tpu.matmul %205, %204, %cst_156 {dimension_numbers = #tpu.dot_dimension_numbers<[1], [0], [0], [1], [0, 0, 1, 1], [], []>} : vector<64x16xbf16>, vector<16x16xbf16>, vector<64x16xf32> -> vector<64x16xf32>
    %c5_157 = arith.constant 5 : index
    %c0_158 = arith.constant 0 : index
    %c0_159 = arith.constant 0 : index
    %207 = vector.load %arg5[%c5_157, %c0_158, %c0_159] : memref<6x16x16xbf16, #tpu.memory_space<vmem>>, vector<1x16x16xbf16>
    %208 = vector.shape_cast %207 : vector<1x16x16xbf16> to vector<16x16xbf16>
    %209 = arith.truncf %201 : vector<64x16xf32> to vector<64x16xbf16>
    %cst_160 = arith.constant dense<0.000000e+00> : vector<64x16xf32>
    %210 = tpu.matmul %209, %208, %cst_160 {dimension_numbers = #tpu.dot_dimension_numbers<[1], [0], [0], [1], [0, 0, 1, 1], [], []>} : vector<64x16xbf16>, vector<16x16xbf16>, vector<64x16xf32> -> vector<64x16xf32>
    %211 = arith.addf %206, %210 : vector<64x16xf32>
    %212 = math.tanh %211 : vector<64x16xf32>
    %213 = arith.negf %211 : vector<64x16xf32>
    %214 = math.exp %213 : vector<64x16xf32>
    %cst_161 = arith.constant 1.000000e+00 : f32
    %215 = vector.broadcast %cst_161 : f32 to vector<64x16xf32>
    %216 = arith.addf %215, %214 : vector<64x16xf32>
    %217 = arith.divf %215, %216 : vector<64x16xf32>
    %218 = arith.mulf %212, %217 : vector<64x16xf32>
    %c5_162 = arith.constant 5 : index
    %c0_163 = arith.constant 0 : index
    %c0_164 = arith.constant 0 : index
    %219 = vector.load %arg6[%c5_162, %c0_163, %c0_164] : memref<6x16x24xbf16, #tpu.memory_space<vmem>>, vector<1x16x24xbf16>
    %220 = vector.shape_cast %219 : vector<1x16x24xbf16> to vector<16x24xbf16>
    %221 = arith.truncf %218 : vector<64x16xf32> to vector<64x16xbf16>
    %cst_165 = arith.constant dense<0.000000e+00> : vector<64x24xf32>
    %222 = tpu.matmul %221, %220, %cst_165 {dimension_numbers = #tpu.dot_dimension_numbers<[1], [0], [0], [1], [0, 0, 1, 1], [], []>} : vector<64x16xbf16>, vector<16x24xbf16>, vector<64x24xf32> -> vector<64x24xf32>
    %c5_166 = arith.constant 5 : index
    %c0_167 = arith.constant 0 : index
    %c0_168 = arith.constant 0 : index
    %223 = vector.load %arg7[%c5_166, %c0_167, %c0_168] : memref<6x1x24xf32, #tpu.memory_space<vmem>>, vector<1x1x24xf32>
    %224 = vector.shape_cast %223 : vector<1x1x24xf32> to vector<1x24xf32>
    %225 = vector.broadcast %224 : vector<1x24xf32> to vector<64x24xf32>
    %226 = arith.addf %222, %225 : vector<64x24xf32>
    %227 = vector.extract_strided_slice %226 {offsets = [0, 0], sizes = [64, 16], strides = [1, 1]} : vector<64x24xf32> to vector<64x16xf32>
    %228 = arith.addf %227, %201 : vector<64x16xf32>
    %c8_169 = arith.constant 8 : index
    %c0_170 = arith.constant 0 : index
    %229 = vector.load %arg14[%c8_169, %c0_170] : memref<72x16xf32, #tpu.memory_space<vmem>>, vector<64x16xf32>
    tpu.vector_store %arg14[%c8_169, %c0_170], %228 {strides = array<i32>} : memref<72x16xf32, #tpu.memory_space<vmem>>, vector<64x16xf32>,
    %c0_171 = arith.constant 0 : index
    %c0_172 = arith.constant 0 : index
    %230 = vector.load %arg15[%c0_171, %c0_172] : memref<64x24xf32, #tpu.memory_space<vmem>>, vector<64x24xf32>
    %231 = arith.addf %230, %226 : vector<64x24xf32>
    %c0_173 = arith.constant 0 : index
    %c0_174 = arith.constant 0 : index
    %232 = vector.load %arg15[%c0_173, %c0_174] : memref<64x24xf32, #tpu.memory_space<vmem>>, vector<64x24xf32>
    tpu.vector_store %arg15[%c0_173, %c0_174], %231 {strides = array<i32>} : memref<64x24xf32, #tpu.memory_space<vmem>>, vector<64x24xf32>,
    %c0_175 = arith.constant 0 : index
    %c16 = arith.constant 16 : index
    %233 = vector.load %arg15[%c0_175, %c16] : memref<64x24xf32, #tpu.memory_space<vmem>>, vector<64x8xf32>
    %cst_176 = arith.constant 0.000000e+00 : f32
    %234 = vector.broadcast %cst_176 : f32 to vector<64x8xf32>
    %235 = arith.maximumf %233, %234 : vector<64x8xf32>
    %c0_177 = arith.constant 0 : index
    %c0_178 = arith.constant 0 : index
    %236 = vector.load %arg8[%c0_177, %c0_178] : memref<8x8xbf16, #tpu.memory_space<vmem>>, vector<8x8xbf16>
    %237 = arith.truncf %235 : vector<64x8xf32> to vector<64x8xbf16>
    %cst_179 = arith.constant dense<0.000000e+00> : vector<64x8xf32>
    %238 = tpu.matmul %237, %236, %cst_179 {dimension_numbers = #tpu.dot_dimension_numbers<[1], [0], [0], [1], [0, 0, 1, 1], [], []>} : vector<64x8xbf16>, vector<8x8xbf16>, vector<64x8xf32> -> vector<64x8xf32>
    %c0_180 = arith.constant 0 : index
    %c0_181 = arith.constant 0 : index
    %239 = vector.load %arg9[%c0_180, %c0_181] : memref<1x8xf32, #tpu.memory_space<vmem>>, vector<1x8xf32>
    %240 = vector.broadcast %239 : vector<1x8xf32> to vector<64x8xf32>
    %241 = arith.addf %238, %240 : vector<64x8xf32>
    %cst_182 = arith.constant 0.000000e+00 : f32
    %242 = vector.broadcast %cst_182 : f32 to vector<64x8xf32>
    %243 = arith.maximumf %241, %242 : vector<64x8xf32>
    %c0_183 = arith.constant 0 : index
    %c0_184 = arith.constant 0 : index
    %244 = vector.load %arg10[%c0_183, %c0_184] : memref<8x8xbf16, #tpu.memory_space<vmem>>, vector<8x8xbf16>
    %245 = arith.truncf %243 : vector<64x8xf32> to vector<64x8xbf16>
    %cst_185 = arith.constant dense<0.000000e+00> : vector<64x8xf32>
    %246 = tpu.matmul %245, %244, %cst_185 {dimension_numbers = #tpu.dot_dimension_numbers<[1], [0], [0], [1], [0, 0, 1, 1], [], []>} : vector<64x8xbf16>, vector<8x8xbf16>, vector<64x8xf32> -> vector<64x8xf32>
    %c0_186 = arith.constant 0 : index
    %c0_187 = arith.constant 0 : index
    %247 = vector.load %arg11[%c0_186, %c0_187] : memref<1x8xf32, #tpu.memory_space<vmem>>, vector<1x8xf32>
    %248 = vector.broadcast %247 : vector<1x8xf32> to vector<64x8xf32>
    %249 = arith.addf %246, %248 : vector<64x8xf32>
    %cst_188 = arith.constant dense<0xFF800000> : vector<64xf32>
    %250 = vector.multi_reduction <maximumf>, %249, %cst_188 [1] : vector<64x8xf32> to vector<64xf32>
    %251 = vector.shape_cast %250 : vector<64xf32> to vector<64x1xf32>
    %252 = vector.broadcast %251 : vector<64x1xf32> to vector<64x8xf32>
    %253 = arith.subf %249, %252 : vector<64x8xf32>
    %254 = math.exp %253 : vector<64x8xf32>
    %cst_189 = arith.constant dense<0.000000e+00> : vector<64xf32>
    %255 = vector.multi_reduction <add>, %254, %cst_189 [1] : vector<64x8xf32> to vector<64xf32>
    %256 = vector.shape_cast %255 : vector<64xf32> to vector<64x1xf32>
    %257 = tpu.reciprocal %256 {approx = true} : vector<64x1xf32> -> vector<64x1xf32>
    %258 = vector.broadcast %257 : vector<64x1xf32> to vector<64x8xf32>
    %259 = arith.mulf %254, %258 : vector<64x8xf32>
    %260 = vector.shape_cast %259 : vector<64x8xf32> to vector<2x32x8xf32>
    %c0_190 = arith.constant 0 : index
    %c0_191 = arith.constant 0 : index
    %c0_192 = arith.constant 0 : index
    %261 = vector.load %arg12[%c0_190, %c0_191, %c0_192] : memref<2x32x8xf32, #tpu.memory_space<vmem>>, vector<2x32x8xf32>
    tpu.vector_store %arg12[%c0_190, %c0_191, %c0_192], %260 {strides = array<i32>} : memref<2x32x8xf32, #tpu.memory_space<vmem>>, vector<2x32x8xf32>,
    return
  }
  func.func @transform_0(%arg0: i32) -> (i32, i32, i32) {
    %c0_i32 = arith.constant 0 : i32
    %c0_i32_0 = arith.constant 0 : i32
    %c0_i32_1 = arith.constant 0 : i32
    return %arg0, %c0_i32, %c0_i32_0 : i32, i32, i32
  }
  func.func @transform_1(%arg0: i32) -> (i32, i32) {
    %c0_i32 = arith.constant 0 : i32
    %c0_i32_0 = arith.constant 0 : i32
    %c0_i32_1 = arith.constant 0 : i32
    return %c0_i32, %c0_i32_0 : i32, i32
  }
  func.func @transform_2(%arg0: i32) -> (i32, i32) {
    %c0_i32 = arith.constant 0 : i32
    %c0_i32_0 = arith.constant 0 : i32
    %c0_i32_1 = arith.constant 0 : i32
    return %c0_i32, %c0_i32_0 : i32, i32
  }
  func.func @transform_3(%arg0: i32) -> (i32, i32, i32) {
    %c0_i32 = arith.constant 0 : i32
    %c0_i32_0 = arith.constant 0 : i32
    %c0_i32_1 = arith.constant 0 : i32
    %c0_i32_2 = arith.constant 0 : i32
    return %c0_i32, %c0_i32_0, %c0_i32_1 : i32, i32, i32
  }
  func.func @transform_4(%arg0: i32) -> (i32, i32, i32) {
    %c0_i32 = arith.constant 0 : i32
    %c0_i32_0 = arith.constant 0 : i32
    %c0_i32_1 = arith.constant 0 : i32
    %c0_i32_2 = arith.constant 0 : i32
    return %c0_i32, %c0_i32_0, %c0_i32_1 : i32, i32, i32
  }
  func.func @transform_5(%arg0: i32) -> (i32, i32, i32) {
    %c0_i32 = arith.constant 0 : i32
    %c0_i32_0 = arith.constant 0 : i32
    %c0_i32_1 = arith.constant 0 : i32
    %c0_i32_2 = arith.constant 0 : i32
    return %c0_i32, %c0_i32_0, %c0_i32_1 : i32, i32, i32
  }
  func.func @transform_6(%arg0: i32) -> (i32, i32, i32) {
    %c0_i32 = arith.constant 0 : i32
    %c0_i32_0 = arith.constant 0 : i32
    %c0_i32_1 = arith.constant 0 : i32
    %c0_i32_2 = arith.constant 0 : i32
    return %c0_i32, %c0_i32_0, %c0_i32_1 : i32, i32, i32
  }
  func.func @transform_7(%arg0: i32) -> (i32, i32) {
    %c0_i32 = arith.constant 0 : i32
    %c0_i32_0 = arith.constant 0 : i32
    %c0_i32_1 = arith.constant 0 : i32
    return %c0_i32, %c0_i32_0 : i32, i32
  }
  func.func @transform_8(%arg0: i32) -> (i32, i32) {
    %c0_i32 = arith.constant 0 : i32
    %c0_i32_0 = arith.constant 0 : i32
    %c0_i32_1 = arith.constant 0 : i32
    return %c0_i32, %c0_i32_0 : i32, i32
  }
  func.func @transform_9(%arg0: i32) -> (i32, i32) {
    %c0_i32 = arith.constant 0 : i32
    %c0_i32_0 = arith.constant 0 : i32
    %c0_i32_1 = arith.constant 0 : i32
    return %c0_i32, %c0_i32_0 : i32, i32
  }
  func.func @transform_10(%arg0: i32) -> (i32, i32) {
    %c0_i32 = arith.constant 0 : i32
    %c0_i32_0 = arith.constant 0 : i32
    %c0_i32_1 = arith.constant 0 : i32
    return %c0_i32, %c0_i32_0 : i32, i32
  }
  func.func @transform_11(%arg0: i32) -> (i32, i32, i32) {
    %c0_i32 = arith.constant 0 : i32
    %c0_i32_0 = arith.constant 0 : i32
    %c0_i32_1 = arith.constant 0 : i32
    return %arg0, %c0_i32, %c0_i32_0 : i32, i32, i32
  }
}

</mosaic_0001>

<llo_original>
// kernel: tpu_custom_call.1
$region0: #{tpu_custom_call.1}
  #allocation0 [shape = 'u32[]', space=smem, size = 0x4, offset = 0x4, fixed_abs, tag = 'smem constant byte address 0x4 - core index']
  #allocation1 [shape = 'u32[144,128]{1,0:T(1,128)}', space=vmem, size = 0x12000, scoped, tag = 'internal scratch']
  #allocation2 [shape = 'f32[72,8]{1,0:T(8,128)}', space=vmem, size = 0x9000, scoped, tag = 'scratch operand']
  #allocation3 [shape = 'f32[72,16]{1,0:T(8,128)}', space=vmem, size = 0x9000, scoped, tag = 'scratch operand']
  #allocation4 [shape = 'f32[64,24]{1,0:T(8,128)}', space=vmem, size = 0x8000, scoped, tag = 'scratch operand']
  %s0 = inlined_call_operand.vmem [shape: f32[2,32,8], index: 0, kind: input, shape index: {}]
  %s1 = inlined_call_operand.hbm [shape: bf16[8,16], index: 1, kind: input, shape index: {}]
  %s2 = inlined_call_operand.hbm [shape: bf16[8,16], index: 2, kind: input, shape index: {}]
  %s3 = inlined_call_operand.vmem [shape: bf16[6,16,16], index: 3, kind: input, shape index: {}]
  %s4 = inlined_call_operand.hbm [shape: bf16[6,16,16], index: 4, kind: input, shape index: {}]
  %s5 = inlined_call_operand.vmem [shape: bf16[6,16,24], index: 5, kind: input, shape index: {}]
  %s6 = inlined_call_operand.vmem [shape: f32[6,1,24], index: 6, kind: input, shape index: {}]
  %s7 = inlined_call_operand.vmem [shape: bf16[8,8], index: 7, kind: input, shape index: {}]
  %s8 = inlined_call_operand.hbm [shape: f32[1,8], index: 8, kind: input, shape index: {}]
  %s9 = inlined_call_operand.vmem [shape: bf16[8,8], index: 9, kind: input, shape index: {}]
  %s10 = inlined_call_operand.vmem [shape: f32[1,8], index: 10, kind: input, shape index: {}]
  %s11 = inlined_call_operand.vmem [shape: f32[2,32,8], index: 11, kind: output, shape index: {}]
  %s12 = sld [smem:[#allocation0]]
  $region70: #{tpu_custom_call.1} parent=0
    _
  %s14 = ssub.s32 1, %s12
  %s15 = scalar_select 0, %s14, %s12
  $region1: #{tpu_custom_call.1} parent=0
    #allocation5 [shape = 'u8[2048]{0}', space=vmem, size = 0x800, scoped, tag = 'input window, operand 1, single buffered']
    #allocation6 [shape = 's32[1]{0}', space=sflag, size = 0x4, scoped, tag = 'scoped memory for tpu_custom_call.1']
    #allocation7 [shape = 'u8[2048]{0}', space=vmem, size = 0x800, scoped, tag = 'input window, operand 2, single buffered']
    #allocation8 [shape = 's32[1]{0}', space=sflag, size = 0x4, scoped, tag = 'scoped memory for tpu_custom_call.1']
    #allocation9 [shape = 'u8[24576]{0}', space=vmem, size = 0x6000, scoped, tag = 'input window, operand 4, single buffered']
    #allocation10 [shape = 'u8[512]{0}', space=vmem, size = 0x400, scoped, tag = 'input window, operand 8, single buffered']
    #allocation11 [shape = 's32[1]{0}', space=sflag, size = 0x4, scoped, tag = 'scoped memory for tpu_custom_call.1']
    %16 = vsyncpa [#allocation6], 0
    %17 = vsyncpa [#allocation8], 0
    %18 = vsyncpa [#allocation11], 0
    // Predicated region
    $region2: #{tpu_custom_call.1} parent=1 // pred_check
      _
    $region3: #{tpu_custom_call.1} parent=1 // pred_check_branch
      %20 = sbr.rel (0) target = $region5
    $region4: #{tpu_custom_call.1} parent=1 // pred_region
      _
    $region5: #{tpu_custom_call.1} parent=1 // pred_fallthru
      _
    // Predicated region
    $region6: #{tpu_custom_call.1} parent=1 // pred_check
      _
    $region7: #{tpu_custom_call.1} parent=1 // pred_check_branch
      %22 = sbr.rel (0) target = $region9
    $region8: #{tpu_custom_call.1} parent=1 // pred_region
      %s24 = ssub.s32 64, 64
      %25 = vsyncadd [#allocation6], %s24
      %s27 = sshll.u32 [#allocation5], 4
      %s28 = int_to_ptr.vmem [resolvable:$true] %s27
      %30 = dma.hbm_to_vmem [thread:$0]  %s1, 64, %s28, [#allocation6]
    $region9: #{tpu_custom_call.1} parent=1 // pred_fallthru
      _
    // Predicated region
    $region10: #{tpu_custom_call.1} parent=1 // pred_check
      _
    $region11: #{tpu_custom_call.1} parent=1 // pred_check_branch
      %32 = sbr.rel (0) target = $region13
    $region12: #{tpu_custom_call.1} parent=1 // pred_region
      %s34 = ssub.s32 64, 64
      %35 = vsyncadd [#allocation8], %s34
      %s37 = sshll.u32 [#allocation7], 4
      %s38 = int_to_ptr.vmem [resolvable:$true] %s37
      %40 = dma.hbm_to_vmem [thread:$0]  %s2, 64, %s38, [#allocation8]
    $region13: #{tpu_custom_call.1} parent=1 // pred_fallthru
      _
    // Predicated region
    $region14: #{tpu_custom_call.1} parent=1 // pred_check
      _
    $region15: #{tpu_custom_call.1} parent=1 // pred_check_branch
      %42 = sbr.rel (0) target = $region17
    $region16: #{tpu_custom_call.1} parent=1 // pred_region
      _
    $region17: #{tpu_custom_call.1} parent=1 // pred_fallthru
      _
    // Predicated region
    $region18: #{tpu_custom_call.1} parent=1 // pred_check
      _
    $region19: #{tpu_custom_call.1} parent=1 // pred_check_branch
      %44 = sbr.rel (0) target = $region21
    $region20: #{tpu_custom_call.1} parent=1 // pred_region
      %s46 = ssub.s32 768, 768
      %47 = vsyncadd [#allocation8], %s46
      %s48 = sshll.u32 [#allocation9], 4
      %s49 = int_to_ptr.vmem [resolvable:$true] %s48
      %54 = dma.hbm_to_vmem [thread:$0]  %s4, 768, %s49, [#allocation8], 64, 64, 4
    $region21: #{tpu_custom_call.1} parent=1 // pred_fallthru
      _
    // Predicated region
    $region22: #{tpu_custom_call.1} parent=1 // pred_check
      _
    $region23: #{tpu_custom_call.1} parent=1 // pred_check_branch
      %56 = sbr.rel (0) target = $region25
    $region24: #{tpu_custom_call.1} parent=1 // pred_region
      _
    $region25: #{tpu_custom_call.1} parent=1 // pred_fallthru
      _
    // Predicated region
    $region26: #{tpu_custom_call.1} parent=1 // pred_check
      _
    $region27: #{tpu_custom_call.1} parent=1 // pred_check_branch
      %58 = sbr.rel (0) target = $region29
    $region28: #{tpu_custom_call.1} parent=1 // pred_region
      _
    $region29: #{tpu_custom_call.1} parent=1 // pred_fallthru
      _
    // Predicated region
    $region30: #{tpu_custom_call.1} parent=1 // pred_check
      _
    $region31: #{tpu_custom_call.1} parent=1 // pred_check_branch
      %60 = sbr.rel (0) target = $region33
    $region32: #{tpu_custom_call.1} parent=1 // pred_region
      _
    $region33: #{tpu_custom_call.1} parent=1 // pred_fallthru
      _
    // Predicated region
    $region34: #{tpu_custom_call.1} parent=1 // pred_check
      _
    $region35: #{tpu_custom_call.1} parent=1 // pred_check_branch
      %62 = sbr.rel (0) target = $region37
    $region36: #{tpu_custom_call.1} parent=1 // pred_region
      %s64 = ssub.s32 16, 16
      %65 = vsyncadd [#allocation11], %s64
      %s67 = sshll.u32 [#allocation10], 4
      %s68 = int_to_ptr.vmem [resolvable:$true] %s67
      %70 = dma.hbm_to_vmem [thread:$0]  %s8, 16, %s68, [#allocation11]
    $region37: #{tpu_custom_call.1} parent=1 // pred_fallthru
      _
    // Predicated region
    $region38: #{tpu_custom_call.1} parent=1 // pred_check
      _
    $region39: #{tpu_custom_call.1} parent=1 // pred_check_branch
      %72 = sbr.rel (0) target = $region41
    $region40: #{tpu_custom_call.1} parent=1 // pred_region
      _
    $region41: #{tpu_custom_call.1} parent=1 // pred_fallthru
      _
    // Predicated region
    $region42: #{tpu_custom_call.1} parent=1 // pred_check
      _
    $region43: #{tpu_custom_call.1} parent=1 // pred_check_branch
      %74 = sbr.rel (0) target = $region45
    $region44: #{tpu_custom_call.1} parent=1 // pred_region
      _
    $region45: #{tpu_custom_call.1} parent=1 // pred_fallthru
      _
    // Predicated region
    $region46: #{tpu_custom_call.1} parent=1 // pred_check
      _
    $region47: #{tpu_custom_call.1} parent=1 // pred_check_branch
      %76 = sbr.rel (0) target = $region49
    $region48: #{tpu_custom_call.1} parent=1 // pred_region
      %77 = dma.done [#allocation6], 64
    $region49: #{tpu_custom_call.1} parent=1 // pred_fallthru
      _
    // Predicated region
    $region50: #{tpu_custom_call.1} parent=1 // pred_check
      _
    $region51: #{tpu_custom_call.1} parent=1 // pred_check_branch
      %79 = sbr.rel (0) target = $region53
    $region52: #{tpu_custom_call.1} parent=1 // pred_region
      %80 = dma.done [#allocation8], 64
    $region53: #{tpu_custom_call.1} parent=1 // pred_fallthru
      _
    // Predicated region
    $region54: #{tpu_custom_call.1} parent=1 // pred_check
      _
    $region55: #{tpu_custom_call.1} parent=1 // pred_check_branch
      %82 = sbr.rel (0) target = $region57
    $region56: #{tpu_custom_call.1} parent=1 // pred_region
      %83 = dma.done [#allocation8], 768
    $region57: #{tpu_custom_call.1} parent=1 // pred_fallthru
      _
    // Predicated region
    $region58: #{tpu_custom_call.1} parent=1 // pred_check
      _
    $region59: #{tpu_custom_call.1} parent=1 // pred_check_branch
      %85 = sbr.rel (0) target = $region61
    $region60: #{tpu_custom_call.1} parent=1 // pred_region
      %86 = dma.done [#allocation11], 16
    $region61: #{tpu_custom_call.1} parent=1 // pred_fallthru
      _
    %v88 = vld [vmem:[%s0] sm:$0xff]
    %v89 = vld [vmem:[%s0 + $0x8] sm:$0xff]
    %v90 = vld [vmem:[%s0 + $0x10] sm:$0xff]
    %v91 = vld [vmem:[%s0 + $0x18] sm:$0xff]
    %v92 = vld [vmem:[%s0 + $0x20] sm:$0xff]
    %v93 = vld [vmem:[%s0 + $0x28] sm:$0xff]
    %v94 = vld [vmem:[%s0 + $0x30] sm:$0xff]
    %v95 = vld [vmem:[%s0 + $0x38] sm:$0xff]
    %vm96 = vcmask 64512
    %97 = vst.msk [vmem:[#allocation2] sm:$0xff] %vm96, 0.0
    %98 = vst.msk [vmem:[#allocation2 + $0x8] sm:$0xff] %vm96, %v88
    %99 = vst.msk [vmem:[#allocation2 + $0x10] sm:$0xff] %vm96, %v89
    %100 = vst.msk [vmem:[#allocation2 + $0x18] sm:$0xff] %vm96, %v90
    %101 = vst.msk [vmem:[#allocation2 + $0x20] sm:$0xff] %vm96, %v91
    %102 = vst.msk [vmem:[#allocation2 + $0x28] sm:$0xff] %vm96, %v92
    %103 = vst.msk [vmem:[#allocation2 + $0x30] sm:$0xff] %vm96, %v93
    %104 = vst.msk [vmem:[#allocation2 + $0x38] sm:$0xff] %vm96, %v94
    %105 = vst.msk [vmem:[#allocation2 + $0x40] sm:$0xff] %vm96, %v95
    %v106 = vld [vmem:[#allocation2 + $0x7] sm:$0xff]
    %v107 = vld [vmem:[#allocation2 + $0xf] sm:$0xff]
    %v108 = vld [vmem:[#allocation2 + $0x17] sm:$0xff]
    %v109 = vld [vmem:[#allocation2 + $0x1f] sm:$0xff]
    %v110 = vld [vmem:[#allocation2 + $0x27] sm:$0xff]
    %v111 = vld [vmem:[#allocation2 + $0x2f] sm:$0xff]
    %v112 = vld [vmem:[#allocation2 + $0x37] sm:$0xff]
    %v113 = vld [vmem:[#allocation2 + $0x3f] sm:$0xff]
    %v114 = vlaneseq
    %v115 = vshrl.u32 %v114, 7
    %v116 = vadd.s32 %v115, 8
    %v117 = vadd.s32 %v115, 16
    %v118 = vadd.s32 %v115, 24
    %v119 = vadd.s32 %v115, 32
    %v120 = vadd.s32 %v115, 40
    %v121 = vadd.s32 %v115, 48
    %v122 = vadd.s32 %v115, 56
    %vm123 = vcmp.lt.s32.totalorder %v115, 0
    %v124 = vsub.s32 0, %v115
    %v125 = vsel %vm123, %v124, %v115
    %v126 = vshrl.u32 %v125, 5
    %v127 = vand.u32 %v125, 31
    %v128 = vsub.s32 0, %v127
    %v129 = vsel %vm123, %v128, %v127
    %vm130 = vcmp.lt.s32.totalorder %v116, 0
    %v131 = vsub.s32 0, %v116
    %v132 = vsel %vm130, %v131, %v116
    %v133 = vshrl.u32 %v132, 5
    %v134 = vand.u32 %v132, 31
    %v135 = vsub.s32 0, %v134
    %v136 = vsel %vm130, %v135, %v134
    %vm137 = vcmp.lt.s32.totalorder %v117, 0
    %v138 = vsub.s32 0, %v117
    %v139 = vsel %vm137, %v138, %v117
    %v140 = vshrl.u32 %v139, 5
    %v141 = vand.u32 %v139, 31
    %v142 = vsub.s32 0, %v141
    %v143 = vsel %vm137, %v142, %v141
    %vm144 = vcmp.lt.s32.totalorder %v118, 0
    %v145 = vsub.s32 0, %v118
    %v146 = vsel %vm144, %v145, %v118
    %v147 = vshrl.u32 %v146, 5
    %v148 = vand.u32 %v146, 31
    %v149 = vsub.s32 0, %v148
    %v150 = vsel %vm144, %v149, %v148
    %vm151 = vcmp.lt.s32.totalorder %v119, 0
    %v152 = vsub.s32 0, %v119
    %v153 = vsel %vm151, %v152, %v119
    %v154 = vshrl.u32 %v153, 5
    %v155 = vand.u32 %v153, 31
    %v156 = vsub.s32 0, %v155
    %v157 = vsel %vm151, %v156, %v155
    %vm158 = vcmp.lt.s32.totalorder %v120, 0
    %v159 = vsub.s32 0, %v120
    %v160 = vsel %vm158, %v159, %v120
    %v161 = vshrl.u32 %v160, 5
    %v162 = vand.u32 %v160, 31
    %v163 = vsub.s32 0, %v162
    %v164 = vsel %vm158, %v163, %v162
    %vm165 = vcmp.lt.s32.totalorder %v121, 0
    %v166 = vsub.s32 0, %v121
    %v167 = vsel %vm165, %v166, %v121
    %v168 = vshrl.u32 %v167, 5
    %v169 = vand.u32 %v167, 31
    %v170 = vsub.s32 0, %v169
    %v171 = vsel %vm165, %v170, %v169
    %vm172 = vcmp.lt.s32.totalorder %v122, 0
    %v173 = vsub.s32 0, %v122
    %v174 = vsel %vm172, %v173, %v122
    %v175 = vshrl.u32 %v174, 5
    %v176 = vand.u32 %v174, 31
    %v177 = vsub.s32 0, %v176
    %v178 = vsel %vm172, %v177, %v176
    %vm179 = vcmp.ne.s32.totalorder %v129, 0
    %vm180 = vcmp.ne.s32.totalorder %v136, 0
    %vm181 = vcmp.ne.s32.totalorder %v143, 0
    %vm182 = vcmp.ne.s32.totalorder %v150, 0
    %vm183 = vcmp.ne.s32.totalorder %v157, 0
    %vm184 = vcmp.ne.s32.totalorder %v164, 0
    %vm185 = vcmp.ne.s32.totalorder %v171, 0
    %vm186 = vcmp.ne.s32.totalorder %v178, 0
    %vm187 = vcmp.lt.s32.totalorder %v129, 0
    %vm188 = vcmp.lt.s32.totalorder %v136, 0
    %vm189 = vcmp.lt.s32.totalorder %v143, 0
    %vm190 = vcmp.lt.s32.totalorder %v150, 0
    %vm191 = vcmp.lt.s32.totalorder %v157, 0
    %vm192 = vcmp.lt.s32.totalorder %v164, 0
    %vm193 = vcmp.lt.s32.totalorder %v171, 0
    %vm194 = vcmp.lt.s32.totalorder %v178, 0
    %vm195 = vmand %vm187, %vm179
    %vm196 = vmand %vm188, %vm180
    %vm197 = vmand %vm189, %vm181
    %vm198 = vmand %vm190, %vm182
    %vm199 = vmand %vm191, %vm183
    %vm200 = vmand %vm192, %vm184
    %vm201 = vmand %vm193, %vm185
    %vm202 = vmand %vm194, %vm186
    %v203 = vadd.s32 %v129, 32
    %v204 = vadd.s32 %v136, 32
    %v205 = vadd.s32 %v143, 32
    %v206 = vadd.s32 %v150, 32
    %v207 = vadd.s32 %v157, 32
    %v208 = vadd.s32 %v164, 32
    %v209 = vadd.s32 %v171, 32
    %v210 = vadd.s32 %v178, 32
    %v211 = vsel %vm195, %v203, %v129
    %v212 = vsel %vm196, %v204, %v136
    %v213 = vsel %vm197, %v205, %v143
    %v214 = vsel %vm198, %v206, %v150
    %v215 = vsel %vm199, %v207, %v157
    %v216 = vsel %vm200, %v208, %v164
    %v217 = vsel %vm201, %v209, %v171
    %v218 = vsel %vm202, %v210, %v178
    %vm219 = vcmp.eq.s32.totalorder %v211, 0
    %vm220 = vcmp.eq.s32.totalorder %v212, 0
    %vm221 = vcmp.eq.s32.totalorder %v213, 0
    %vm222 = vcmp.eq.s32.totalorder %v214, 0
    %vm223 = vcmp.eq.s32.totalorder %v215, 0
    %vm224 = vcmp.eq.s32.totalorder %v216, 0
    %vm225 = vcmp.eq.s32.totalorder %v217, 0
    %vm226 = vcmp.eq.s32.totalorder %v218, 0
    %v227 = vsel %vm219, 1, 0
    %v228 = vsel %vm220, 1, 0
    %v229 = vsel %vm221, 1, 0
    %v230 = vsel %vm222, 1, 0
    %v231 = vsel %vm223, 1, 0
    %v232 = vsel %vm224, 1, 0
    %v233 = vsel %vm225, 1, 0
    %v234 = vsel %vm226, 1, 0
    %vm235 = vcmp.eq.s32.totalorder %v227, 1
    %vm236 = vcmp.eq.s32.totalorder %v228, 1
    %vm237 = vcmp.eq.s32.totalorder %v229, 1
    %vm238 = vcmp.eq.s32.totalorder %v230, 1
    %vm239 = vcmp.eq.s32.totalorder %v231, 1
    %vm240 = vcmp.eq.s32.totalorder %v232, 1
    %vm241 = vcmp.eq.s32.totalorder %v233, 1
    %vm242 = vcmp.eq.s32.totalorder %v234, 1
    %v243 = vsel %vm235, 0.0, %v106
    %v244 = vsel %vm236, 0.0, %v107
    %v245 = vsel %vm237, 0.0, %v108
    %v246 = vsel %vm238, 0.0, %v109
    %v247 = vsel %vm239, 0.0, %v110
    %v248 = vsel %vm240, 0.0, %v111
    %v249 = vsel %vm241, 0.0, %v112
    %v250 = vsel %vm242, 0.0, %v113
    %vm251 = vcmask 130048
    %252 = vst.msk [vmem:[#allocation3] sm:$0xff] %vm251, 0.0
    %v253 = vld [vmem:[#allocation5] sm:$0xf]
    %v254 = vpack.c.bf16 %v244, %v243
    %v255 = vpack.c.bf16 %v246, %v245
    %v256 = vpack.c.bf16 %v248, %v247
    %v257 = vpack.c.bf16 %v250, %v249
    %v258 = vld [vmem:[#allocation7] sm:$0xf]
    %v259 = vpack.c.bf16 %v89, %v88
    %v260 = vpack.c.bf16 %v91, %v90
    %v261 = vpack.c.bf16 %v93, %v92
    %v262 = vpack.c.bf16 %v95, %v94
    %v264 = vsel %vm96, %v259, 0
    %v267 = vsel %vm96, %v260, 0
    %v270 = vsel %vm96, %v261, 0
    %v273 = vsel %vm96, %v262, 0
    %vm275 = vcmask 1043456
    %v277 = vsel %vm275, %v258, 0
    %279 = vmatprep.subr.bf16.mxu0 0
    %280 = vmatpush1.bf16.msra.mxu0 %v277
    %281 = vmatprep.subr.bf16.mxu0 0
    %282 = vmatpush1.bf16.msra.mxu0 0
    %283 = vmatprep.subr.bf16.mxu0 0
    %284 = vmatpush1.bf16.msra.mxu0 0
    %285 = vmatprep.subr.bf16.mxu0 0
    %286 = vmatpush1.bf16.msra.mxu0 0
    %287 = vmatprep.subr.bf16.mxu0 0
    %288 = vmatpush1.bf16.msra.mxu0 0
    %289 = vmatprep.subr.bf16.mxu0 0
    %290 = vmatpush1.bf16.msra.mxu0 0
    %291 = vmatprep.subr.bf16.mxu0 0
    %292 = vmatpush1.bf16.msra.mxu0 0
    %293 = vmatprep.subr.bf16.mxu0 0
    %294 = vmatpush1.bf16.msra.mxu0 0
    %295 = vmatprep.subr.bf16.mxu0 0
    %296 = vmatpush1.bf16.msra.mxu0 0
    %297 = vmatprep.subr.bf16.mxu0 0
    %298 = vmatpush1.bf16.msra.mxu0 0
    %299 = vmatprep.subr.bf16.mxu0 0
    %300 = vmatpush1.bf16.msra.mxu0 0
    %301 = vmatprep.subr.bf16.mxu0 0
    %302 = vmatpush1.bf16.msra.mxu0 0
    %303 = vmatprep.subr.bf16.mxu0 0
    %304 = vmatpush1.bf16.msra.mxu0 0
    %305 = vmatprep.subr.bf16.mxu0 0
    %306 = vmatpush1.bf16.msra.mxu0 0
    %307 = vmatprep.subr.bf16.mxu0 0
    %308 = vmatpush1.bf16.msra.mxu0 0
    %309 = vmatprep.subr.bf16.mxu0 0
    %310 = vmatpush1.bf16.msra.mxu0 0
    %311 = vmatprep.mubr.bf16.mxu0 0
    %312 = vmatmul.mubr.bf16.gmra.mrb[0].mxu0 %v264
    %v313 = vpop.f32.mrb[0].mxu0
    %v314 = vadd.f32 0.0, %v313
    %v315 = vpop.f32.mrb[0].mxu0
    %v316 = vpop.f32.mrb[0].mxu0
    %v317 = vadd.f32 0.0, %v316
    %v318 = vpop.f32.mrb[0].mxu0
    %319 = vmatprep.mubr.bf16.mxu0 0
    %320 = vmatmul.mubr.bf16.gmra.mrb[0].mxu0 %v267
    %v321 = vpop.f32.mrb[0].mxu0
    %v322 = vadd.f32 0.0, %v321
    %v323 = vpop.f32.mrb[0].mxu0
    %v324 = vpop.f32.mrb[0].mxu0
    %v325 = vadd.f32 0.0, %v324
    %v326 = vpop.f32.mrb[0].mxu0
    %327 = vmatprep.mubr.bf16.mxu0 0
    %328 = vmatmul.mubr.bf16.gmra.mrb[0].mxu0 %v270
    %v329 = vpop.f32.mrb[0].mxu0
    %v330 = vadd.f32 0.0, %v329
    %v331 = vpop.f32.mrb[0].mxu0
    %v332 = vpop.f32.mrb[0].mxu0
    %v333 = vadd.f32 0.0, %v332
    %v334 = vpop.f32.mrb[0].mxu0
    %335 = vmatprep.mubr.bf16.mxu0 0
    %336 = vmatmul.mubr.bf16.gmra.mrb[0].mxu0 %v273
    %v337 = vpop.f32.mrb[0].mxu0
    %v338 = vadd.f32 0.0, %v337
    %v339 = vpop.f32.mrb[0].mxu0
    %v340 = vpop.f32.mrb[0].mxu0
    %v341 = vadd.f32 0.0, %v340
    %v342 = vpop.f32.mrb[0].mxu0
    %343 = vdwg.mxu0
    %v345 = vsel %vm96, %v254, 0
    %v348 = vsel %vm96, %v255, 0
    %v351 = vsel %vm96, %v256, 0
    %v354 = vsel %vm96, %v257, 0
    %v357 = vsel %vm275, %v253, 0
    %359 = vmatprep.subr.bf16.mxu0 0
    %360 = vmatpush1.bf16.msra.mxu0 %v357
    %361 = vmatprep.subr.bf16.mxu0 0
    %362 = vmatpush1.bf16.msra.mxu0 0
    %363 = vmatprep.subr.bf16.mxu0 0
    %364 = vmatpush1.bf16.msra.mxu0 0
    %365 = vmatprep.subr.bf16.mxu0 0
    %366 = vmatpush1.bf16.msra.mxu0 0
    %367 = vmatprep.subr.bf16.mxu0 0
    %368 = vmatpush1.bf16.msra.mxu0 0
    %369 = vmatprep.subr.bf16.mxu0 0
    %370 = vmatpush1.bf16.msra.mxu0 0
    %371 = vmatprep.subr.bf16.mxu0 0
    %372 = vmatpush1.bf16.msra.mxu0 0
    %373 = vmatprep.subr.bf16.mxu0 0
    %374 = vmatpush1.bf16.msra.mxu0 0
    %375 = vmatprep.subr.bf16.mxu0 0
    %376 = vmatpush1.bf16.msra.mxu0 0
    %377 = vmatprep.subr.bf16.mxu0 0
    %378 = vmatpush1.bf16.msra.mxu0 0
    %379 = vmatprep.subr.bf16.mxu0 0
    %380 = vmatpush1.bf16.msra.mxu0 0
    %381 = vmatprep.subr.bf16.mxu0 0
    %382 = vmatpush1.bf16.msra.mxu0 0
    %383 = vmatprep.subr.bf16.mxu0 0
    %384 = vmatpush1.bf16.msra.mxu0 0
    %385 = vmatprep.subr.bf16.mxu0 0
    %386 = vmatpush1.bf16.msra.mxu0 0
    %387 = vmatprep.subr.bf16.mxu0 0
    %388 = vmatpush1.bf16.msra.mxu0 0
    %389 = vmatprep.subr.bf16.mxu0 0
    %390 = vmatpush1.bf16.msra.mxu0 0
    %391 = vmatprep.mubr.bf16.mxu0 0
    %392 = vmatmul.mubr.bf16.gmra.mrb[0].mxu0 %v345
    %v393 = vpop.f32.mrb[0].mxu0
    %v394 = vadd.f32 %v314, %v393
    %v395 = vpop.f32.mrb[0].mxu0
    %v396 = vpop.f32.mrb[0].mxu0
    %v397 = vadd.f32 %v317, %v396
    %v398 = vpop.f32.mrb[0].mxu0
    %399 = vmatprep.mubr.bf16.mxu0 0
    %400 = vmatmul.mubr.bf16.gmra.mrb[0].mxu0 %v348
    %v401 = vpop.f32.mrb[0].mxu0
    %v402 = vadd.f32 %v322, %v401
    %v403 = vpop.f32.mrb[0].mxu0
    %v404 = vpop.f32.mrb[0].mxu0
    %v405 = vadd.f32 %v325, %v404
    %v406 = vpop.f32.mrb[0].mxu0
    %407 = vmatprep.mubr.bf16.mxu0 0
    %408 = vmatmul.mubr.bf16.gmra.mrb[0].mxu0 %v351
    %v409 = vpop.f32.mrb[0].mxu0
    %v410 = vadd.f32 %v330, %v409
    %v411 = vpop.f32.mrb[0].mxu0
    %v412 = vpop.f32.mrb[0].mxu0
    %v413 = vadd.f32 %v333, %v412
    %v414 = vpop.f32.mrb[0].mxu0
    %415 = vmatprep.mubr.bf16.mxu0 0
    %416 = vmatmul.mubr.bf16.gmra.mrb[0].mxu0 %v354
    %v417 = vpop.f32.mrb[0].mxu0
    %v418 = vadd.f32 %v338, %v417
    %v419 = vpop.f32.mrb[0].mxu0
    %v420 = vpop.f32.mrb[0].mxu0
    %v421 = vadd.f32 %v341, %v420
    %v422 = vpop.f32.mrb[0].mxu0
    %423 = vdwg.mxu0
    %424 = vst.msk [vmem:[#allocation3 + $0x8] sm:$0xff] %vm251, %v394
    %425 = vst.msk [vmem:[#allocation3 + $0x10] sm:$0xff] %vm251, %v397
    %426 = vst.msk [vmem:[#allocation3 + $0x18] sm:$0xff] %vm251, %v402
    %427 = vst.msk [vmem:[#allocation3 + $0x20] sm:$0xff] %vm251, %v405
    %428 = vst.msk [vmem:[#allocation3 + $0x28] sm:$0xff] %vm251, %v410
    %429 = vst.msk [vmem:[#allocation3 + $0x30] sm:$0xff] %vm251, %v413
    %430 = vst.msk [vmem:[#allocation3 + $0x38] sm:$0xff] %vm251, %v418
    %431 = vst.msk [vmem:[#allocation3 + $0x40] sm:$0xff] %vm251, %v421
    %vm432 = vcmask 195584
    %433 = vst.msk [vmem:[#allocation4] sm:$0xff] %vm432, 0.0
    %434 = vst.msk [vmem:[#allocation4 + $0x8] sm:$0xff] %vm432, 0.0
    %435 = vst.msk [vmem:[#allocation4 + $0x10] sm:$0xff] %vm432, 0.0
    %436 = vst.msk [vmem:[#allocation4 + $0x18] sm:$0xff] %vm432, 0.0
    %437 = vst.msk [vmem:[#allocation4 + $0x20] sm:$0xff] %vm432, 0.0
    %438 = vst.msk [vmem:[#allocation4 + $0x28] sm:$0xff] %vm432, 0.0
    %439 = vst.msk [vmem:[#allocation4 + $0x30] sm:$0xff] %vm432, 0.0
    %440 = vst.msk [vmem:[#allocation4 + $0x38] sm:$0xff] %vm432, 0.0
    %v441 = vld [vmem:[#allocation3 + $0x8] sm:$0xff]
    %v442 = vld [vmem:[#allocation3 + $0x10] sm:$0xff]
    %v443 = vld [vmem:[#allocation3 + $0x18] sm:$0xff]
    %v444 = vld [vmem:[#allocation3 + $0x20] sm:$0xff]
    %v445 = vld [vmem:[#allocation3 + $0x28] sm:$0xff]
    %v446 = vld [vmem:[#allocation3 + $0x30] sm:$0xff]
    %v447 = vld [vmem:[#allocation3 + $0x38] sm:$0xff]
    %v448 = vld [vmem:[#allocation3 + $0x40] sm:$0xff]
    %v449 = vld [vmem:[#allocation3 + $0x7] sm:$0xff]
    %v450 = vld [vmem:[#allocation3 + $0xf] sm:$0xff]
    %v451 = vld [vmem:[#allocation3 + $0x17] sm:$0xff]
    %v452 = vld [vmem:[#allocation3 + $0x1f] sm:$0xff]
    %v453 = vld [vmem:[#allocation3 + $0x27] sm:$0xff]
    %v454 = vld [vmem:[#allocation3 + $0x2f] sm:$0xff]
    %v455 = vld [vmem:[#allocation3 + $0x37] sm:$0xff]
    %v456 = vld [vmem:[#allocation3 + $0x3f] sm:$0xff]
    %v457 = vld [vmem:[%s3] sm:$0xf]
    %v458 = vld [vmem:[%s3 + $0x4] sm:$0xf]
    %v459 = vpack.c.bf16 %v450, %v449
    %v460 = vpack.c.bf16 %v452, %v451
    %v461 = vpack.c.bf16 %v454, %v453
    %v462 = vpack.c.bf16 %v456, %v455
    %v463 = vld [vmem:[#allocation9] sm:$0xf]
    %v464 = vld [vmem:[#allocation9 + $0x4] sm:$0xf]
    %v465 = vpack.c.bf16 %v442, %v441
    %v466 = vpack.c.bf16 %v444, %v443
    %v467 = vpack.c.bf16 %v446, %v445
    %v468 = vpack.c.bf16 %v448, %v447
    %v471 = vunpack.c.l.b16 %v463
    %v472 = vunpack.c.l.b16 %v464
    %v473 = vpack.c.b16 %v472, %v471
    %v476 = vsel %vm251, %v465, 0
    %v479 = vsel %vm251, %v466, 0
    %v482 = vsel %vm251, %v467, 0
    %v485 = vsel %vm251, %v468, 0
    %487 = vmatprep.subr.bf16.mxu0 0
    %488 = vmatpush1.bf16.msra.mxu0 %v473
    %489 = vmatprep.subr.bf16.mxu0 0
    %490 = vmatpush1.bf16.msra.mxu0 0
    %491 = vmatprep.subr.bf16.mxu0 0
    %492 = vmatpush1.bf16.msra.mxu0 0
    %493 = vmatprep.subr.bf16.mxu0 0
    %494 = vmatpush1.bf16.msra.mxu0 0
    %495 = vmatprep.subr.bf16.mxu0 0
    %496 = vmatpush1.bf16.msra.mxu0 0
    %497 = vmatprep.subr.bf16.mxu0 0
    %498 = vmatpush1.bf16.msra.mxu0 0
    %499 = vmatprep.subr.bf16.mxu0 0
    %500 = vmatpush1.bf16.msra.mxu0 0
    %501 = vmatprep.subr.bf16.mxu0 0
    %502 = vmatpush1.bf16.msra.mxu0 0
    %503 = vmatprep.subr.bf16.mxu0 0
    %504 = vmatpush1.bf16.msra.mxu0 0
    %505 = vmatprep.subr.bf16.mxu0 0
    %506 = vmatpush1.bf16.msra.mxu0 0
    %507 = vmatprep.subr.bf16.mxu0 0
    %508 = vmatpush1.bf16.msra.mxu0 0
    %509 = vmatprep.subr.bf16.mxu0 0
    %510 = vmatpush1.bf16.msra.mxu0 0
    %511 = vmatprep.subr.bf16.mxu0 0
    %512 = vmatpush1.bf16.msra.mxu0 0
    %513 = vmatprep.subr.bf16.mxu0 0
    %514 = vmatpush1.bf16.msra.mxu0 0
    %515 = vmatprep.subr.bf16.mxu0 0
    %516 = vmatpush1.bf16.msra.mxu0 0
    %517 = vmatprep.subr.bf16.mxu0 0
    %518 = vmatpush1.bf16.msra.mxu0 0
    %519 = vmatprep.mubr.bf16.mxu0 0
    %520 = vmatmul.mubr.bf16.gmra.mrb[0].mxu0 %v476
    %v521 = vpop.f32.mrb[0].mxu0
    %v522 = vadd.f32 0.0, %v521
    %v523 = vpop.f32.mrb[0].mxu0
    %v524 = vpop.f32.mrb[0].mxu0
    %v525 = vadd.f32 0.0, %v524
    %v526 = vpop.f32.mrb[0].mxu0
    %527 = vmatprep.mubr.bf16.mxu0 0
    %528 = vmatmul.mubr.bf16.gmra.mrb[0].mxu0 %v479
    %v529 = vpop.f32.mrb[0].mxu0
    %v530 = vadd.f32 0.0, %v529
    %v531 = vpop.f32.mrb[0].mxu0
    %v532 = vpop.f32.mrb[0].mxu0
    %v533 = vadd.f32 0.0, %v532
    %v534 = vpop.f32.mrb[0].mxu0
    %535 = vmatprep.mubr.bf16.mxu0 0
    %536 = vmatmul.mubr.bf16.gmra.mrb[0].mxu0 %v482
    %v537 = vpop.f32.mrb[0].mxu0
    %v538 = vadd.f32 0.0, %v537
    %v539 = vpop.f32.mrb[0].mxu0
    %v540 = vpop.f32.mrb[0].mxu0
    %v541 = vadd.f32 0.0, %v540
    %v542 = vpop.f32.mrb[0].mxu0
    %543 = vmatprep.mubr.bf16.mxu0 0
    %544 = vmatmul.mubr.bf16.gmra.mrb[0].mxu0 %v485
    %v545 = vpop.f32.mrb[0].mxu0
    %v546 = vadd.f32 0.0, %v545
    %v547 = vpop.f32.mrb[0].mxu0
    %v548 = vpop.f32.mrb[0].mxu0
    %v549 = vadd.f32 0.0, %v548
    %v550 = vpop.f32.mrb[0].mxu0
    %551 = vdwg.mxu0
    %v554 = vunpack.c.l.b16 %v457
    %v555 = vunpack.c.l.b16 %v458
    %v556 = vpack.c.b16 %v555, %v554
    %v559 = vsel %vm251, %v459, 0
    %v562 = vsel %vm251, %v460, 0
    %v565 = vsel %vm251, %v461, 0
    %v568 = vsel %vm251, %v462, 0
    %570 = vmatprep.subr.bf16.mxu0 0
    %571 = vmatpush1.bf16.msra.mxu0 %v556
    %572 = vmatprep.subr.bf16.mxu0 0
    %573 = vmatpush1.bf16.msra.mxu0 0
    %574 = vmatprep.subr.bf16.mxu0 0
    %575 = vmatpush1.bf16.msra.mxu0 0
    %576 = vmatprep.subr.bf16.mxu0 0
    %577 = vmatpush1.bf16.msra.mxu0 0
    %578 = vmatprep.subr.bf16.mxu0 0
    %579 = vmatpush1.bf16.msra.mxu0 0
    %580 = vmatprep.subr.bf16.mxu0 0
    %581 = vmatpush1.bf16.msra.mxu0 0
    %582 = vmatprep.subr.bf16.mxu0 0
    %583 = vmatpush1.bf16.msra.mxu0 0
    %584 = vmatprep.subr.bf16.mxu0 0
    %585 = vmatpush1.bf16.msra.mxu0 0
    %586 = vmatprep.subr.bf16.mxu0 0
    %587 = vmatpush1.bf16.msra.mxu0 0
    %588 = vmatprep.subr.bf16.mxu0 0
    %589 = vmatpush1.bf16.msra.mxu0 0
    %590 = vmatprep.subr.bf16.mxu0 0
    %591 = vmatpush1.bf16.msra.mxu0 0
    %592 = vmatprep.subr.bf16.mxu0 0
    %593 = vmatpush1.bf16.msra.mxu0 0
    %594 = vmatprep.subr.bf16.mxu0 0
    %595 = vmatpush1.bf16.msra.mxu0 0
    %596 = vmatprep.subr.bf16.mxu0 0
    %597 = vmatpush1.bf16.msra.mxu0 0
    %598 = vmatprep.subr.bf16.mxu0 0
    %599 = vmatpush1.bf16.msra.mxu0 0
    %600 = vmatprep.subr.bf16.mxu0 0
    %601 = vmatpush1.bf16.msra.mxu0 0
    %602 = vmatprep.mubr.bf16.mxu0 0
    %603 = vmatmul.mubr.bf16.gmra.mrb[0].mxu0 %v559
    %v604 = vpop.f32.mrb[0].mxu0
    %v605 = vadd.f32 %v522, %v604
    %v606 = vpop.f32.mrb[0].mxu0
    %v607 = vpop.f32.mrb[0].mxu0
    %v608 = vadd.f32 %v525, %v607
    %v609 = vpop.f32.mrb[0].mxu0
    %610 = vmatprep.mubr.bf16.mxu0 0
    %611 = vmatmul.mubr.bf16.gmra.mrb[0].mxu0 %v562
    %v612 = vpop.f32.mrb[0].mxu0
    %v613 = vadd.f32 %v530, %v612
    %v614 = vpop.f32.mrb[0].mxu0
    %v615 = vpop.f32.mrb[0].mxu0
    %v616 = vadd.f32 %v533, %v615
    %v617 = vpop.f32.mrb[0].mxu0
    %618 = vmatprep.mubr.bf16.mxu0 0
    %619 = vmatmul.mubr.bf16.gmra.mrb[0].mxu0 %v565
    %v620 = vpop.f32.mrb[0].mxu0
    %v621 = vadd.f32 %v538, %v620
    %v622 = vpop.f32.mrb[0].mxu0
    %v623 = vpop.f32.mrb[0].mxu0
    %v624 = vadd.f32 %v541, %v623
    %v625 = vpop.f32.mrb[0].mxu0
    %626 = vmatprep.mubr.bf16.mxu0 0
    %627 = vmatmul.mubr.bf16.gmra.mrb[0].mxu0 %v568
    %v628 = vpop.f32.mrb[0].mxu0
    %v629 = vadd.f32 %v546, %v628
    %v630 = vpop.f32.mrb[0].mxu0
    %v631 = vpop.f32.mrb[0].mxu0
    %v632 = vadd.f32 %v549, %v631
    %v633 = vpop.f32.mrb[0].mxu0
    %634 = vdwg.mxu0
    %v635 = vtanh.pop %v605
    %v636 = vtanh.pop %v608
    %v637 = vtanh.pop %v613
    %v638 = vtanh.pop %v616
    %v639 = vtanh.pop %v621
    %v640 = vtanh.pop %v624
    %v641 = vtanh.pop %v629
    %v642 = vtanh.pop %v632
    %v643 = vxor.u32 %v605, 2147483648
    %v644 = vxor.u32 %v608, 2147483648
    %v645 = vxor.u32 %v613, 2147483648
    %v646 = vxor.u32 %v616, 2147483648
    %v647 = vxor.u32 %v621, 2147483648
    %v648 = vxor.u32 %v624, 2147483648
    %v649 = vxor.u32 %v629, 2147483648
    %v650 = vxor.u32 %v632, 2147483648
    %v651 = vmul.f32 %v643, 1.442695
    %v652 = vpow.pop %v651
    %v653 = vmul.f32 %v644, 1.442695
    %v654 = vpow.pop %v653
    %v655 = vmul.f32 %v645, 1.442695
    %v656 = vpow.pop %v655
    %v657 = vmul.f32 %v646, 1.442695
    %v658 = vpow.pop %v657
    %v659 = vmul.f32 %v647, 1.442695
    %v660 = vpow.pop %v659
    %v661 = vmul.f32 %v648, 1.442695
    %v662 = vpow.pop %v661
    %v663 = vmul.f32 %v649, 1.442695
    %v664 = vpow.pop %v663
    %v665 = vmul.f32 %v650, 1.442695
    %v666 = vpow.pop %v665
    %v667 = vadd.f32 %v652, 1.0
    %v668 = vadd.f32 %v654, 1.0
    %v669 = vadd.f32 %v656, 1.0
    %v670 = vadd.f32 %v658, 1.0
    %v671 = vadd.f32 %v660, 1.0
    %v672 = vadd.f32 %v662, 1.0
    %v673 = vadd.f32 %v664, 1.0
    %v674 = vadd.f32 %v666, 1.0
    %v675 = vrcp.pop %v667
    %v676 = vmul.f32 1.0, %v675
    %v677 = vrcp.pop %v668
    %v678 = vmul.f32 1.0, %v677
    %v679 = vrcp.pop %v669
    %v680 = vmul.f32 1.0, %v679
    %v681 = vrcp.pop %v670
    %v682 = vmul.f32 1.0, %v681
    %v683 = vrcp.pop %v671
    %v684 = vmul.f32 1.0, %v683
    %v685 = vrcp.pop %v672
    %v686 = vmul.f32 1.0, %v685
    %v687 = vrcp.pop %v673
    %v688 = vmul.f32 1.0, %v687
    %v689 = vrcp.pop %v674
    %v690 = vmul.f32 1.0, %v689
    %v691 = vmul.f32 %v635, %v676
    %v692 = vmul.f32 %v636, %v678
    %v693 = vmul.f32 %v637, %v680
    %v694 = vmul.f32 %v638, %v682
    %v695 = vmul.f32 %v639, %v684
    %v696 = vmul.f32 %v640, %v686
    %v697 = vmul.f32 %v641, %v688
    %v698 = vmul.f32 %v642, %v690
    %v699 = vld [vmem:[%s5] sm:$0xf]
    %v700 = vld [vmem:[%s5 + $0x4] sm:$0xf]
    %v701 = vpack.c.bf16 %v692, %v691
    %v702 = vpack.c.bf16 %v694, %v693
    %v703 = vpack.c.bf16 %v696, %v695
    %v704 = vpack.c.bf16 %v698, %v697
    %v705 = vld [vmem:[%s6] sm:$0x1]
    %v707 = vlaneseq
    %v708 = vshrl.u32 %v707, 7
    %v709 = vsub.s32 0, %v708
    %v710 = vrot.slane %v705, %v709
    %v714 = vunpack.c.l.b16 %v699
    %v715 = vunpack.c.l.b16 %v700
    %v716 = vpack.c.b16 %v715, %v714
    %v719 = vsel %vm251, %v701, 0
    %v722 = vsel %vm251, %v702, 0
    %v725 = vsel %vm251, %v703, 0
    %v728 = vsel %vm251, %v704, 0
    %730 = vmatprep.subr.bf16.mxu0 0
    %731 = vmatpush1.bf16.msra.mxu0 %v716
    %732 = vmatprep.subr.bf16.mxu0 0
    %733 = vmatpush1.bf16.msra.mxu0 0
    %734 = vmatprep.subr.bf16.mxu0 0
    %735 = vmatpush1.bf16.msra.mxu0 0
    %736 = vmatprep.subr.bf16.mxu0 0
    %737 = vmatpush1.bf16.msra.mxu0 0
    %738 = vmatprep.subr.bf16.mxu0 0
    %739 = vmatpush1.bf16.msra.mxu0 0
    %740 = vmatprep.subr.bf16.mxu0 0
    %741 = vmatpush1.bf16.msra.mxu0 0
    %742 = vmatprep.subr.bf16.mxu0 0
    %743 = vmatpush1.bf16.msra.mxu0 0
    %744 = vmatprep.subr.bf16.mxu0 0
    %745 = vmatpush1.bf16.msra.mxu0 0
    %746 = vmatprep.subr.bf16.mxu0 0
    %747 = vmatpush1.bf16.msra.mxu0 0
    %748 = vmatprep.subr.bf16.mxu0 0
    %749 = vmatpush1.bf16.msra.mxu0 0
    %750 = vmatprep.subr.bf16.mxu0 0
    %751 = vmatpush1.bf16.msra.mxu0 0
    %752 = vmatprep.subr.bf16.mxu0 0
    %753 = vmatpush1.bf16.msra.mxu0 0
    %754 = vmatprep.subr.bf16.mxu0 0
    %755 = vmatpush1.bf16.msra.mxu0 0
    %756 = vmatprep.subr.bf16.mxu0 0
    %757 = vmatpush1.bf16.msra.mxu0 0
    %758 = vmatprep.subr.bf16.mxu0 0
    %759 = vmatpush1.bf16.msra.mxu0 0
    %760 = vmatprep.subr.bf16.mxu0 0
    %761 = vmatpush1.bf16.msra.mxu0 0
    %762 = vmatprep.mubr.bf16.mxu0 0
    %763 = vmatmul.mubr.bf16.gmra.mrb[0].mxu0 %v719
    %v764 = vpop.f32.mrb[0].mxu0
    %v765 = vadd.f32 %v710, %v764
    %v766 = vpop.f32.mrb[0].mxu0
    %v767 = vpop.f32.mrb[0].mxu0
    %v768 = vadd.f32 %v710, %v767
    %v769 = vpop.f32.mrb[0].mxu0
    %770 = vmatprep.mubr.bf16.mxu0 0
    %771 = vmatmul.mubr.bf16.gmra.mrb[0].mxu0 %v722
    %v772 = vpop.f32.mrb[0].mxu0
    %v773 = vadd.f32 %v710, %v772
    %v774 = vpop.f32.mrb[0].mxu0
    %v775 = vpop.f32.mrb[0].mxu0
    %v776 = vadd.f32 %v710, %v775
    %v777 = vpop.f32.mrb[0].mxu0
    %778 = vmatprep.mubr.bf16.mxu0 0
    %779 = vmatmul.mubr.bf16.gmra.mrb[0].mxu0 %v725
    %v780 = vpop.f32.mrb[0].mxu0
    %v781 = vadd.f32 %v710, %v780
    %v782 = vpop.f32.mrb[0].mxu0
    %v783 = vpop.f32.mrb[0].mxu0
    %v784 = vadd.f32 %v710, %v783
    %v785 = vpop.f32.mrb[0].mxu0
    %786 = vmatprep.mubr.bf16.mxu0 0
    %787 = vmatmul.mubr.bf16.gmra.mrb[0].mxu0 %v728
    %v788 = vpop.f32.mrb[0].mxu0
    %v789 = vadd.f32 %v710, %v788
    %v790 = vpop.f32.mrb[0].mxu0
    %v791 = vpop.f32.mrb[0].mxu0
    %v792 = vadd.f32 %v710, %v791
    %v793 = vpop.f32.mrb[0].mxu0
    %794 = vdwg.mxu0
    %v795 = vadd.f32 %v765, %v441
    %v796 = vadd.f32 %v768, %v442
    %v797 = vadd.f32 %v773, %v443
    %v798 = vadd.f32 %v776, %v444
    %v799 = vadd.f32 %v781, %v445
    %v800 = vadd.f32 %v784, %v446
    %v801 = vadd.f32 %v789, %v447
    %v802 = vadd.f32 %v792, %v448
    %803 = vst.msk [vmem:[#allocation3 + $0x8] sm:$0xff] %vm251, %v795
    %804 = vst.msk [vmem:[#allocation3 + $0x10] sm:$0xff] %vm251, %v796
    %805 = vst.msk [vmem:[#allocation3 + $0x18] sm:$0xff] %vm251, %v797
    %806 = vst.msk [vmem:[#allocation3 + $0x20] sm:$0xff] %vm251, %v798
    %807 = vst.msk [vmem:[#allocation3 + $0x28] sm:$0xff] %vm251, %v799
    %808 = vst.msk [vmem:[#allocation3 + $0x30] sm:$0xff] %vm251, %v800
    %809 = vst.msk [vmem:[#allocation3 + $0x38] sm:$0xff] %vm251, %v801
    %810 = vst.msk [vmem:[#allocation3 + $0x40] sm:$0xff] %vm251, %v802
    %v811 = vld [vmem:[#allocation4] sm:$0xff]
    %v812 = vld [vmem:[#allocation4 + $0x8] sm:$0xff]
    %v813 = vld [vmem:[#allocation4 + $0x10] sm:$0xff]
    %v814 = vld [vmem:[#allocation4 + $0x18] sm:$0xff]
    %v815 = vld [vmem:[#allocation4 + $0x20] sm:$0xff]
    %v816 = vld [vmem:[#allocation4 + $0x28] sm:$0xff]
    %v817 = vld [vmem:[#allocation4 + $0x30] sm:$0xff]
    %v818 = vld [vmem:[#allocation4 + $0x38] sm:$0xff]
    %v819 = vadd.f32 %v811, %v765
    %v820 = vadd.f32 %v812, %v768
    %v821 = vadd.f32 %v813, %v773
    %v822 = vadd.f32 %v814, %v776
    %v823 = vadd.f32 %v815, %v781
    %v824 = vadd.f32 %v816, %v784
    %v825 = vadd.f32 %v817, %v789
    %v826 = vadd.f32 %v818, %v792
    %827 = vst.msk [vmem:[#allocation4] sm:$0xff] %vm432, %v819
    %828 = vst.msk [vmem:[#allocation4 + $0x8] sm:$0xff] %vm432, %v820
    %829 = vst.msk [vmem:[#allocation4 + $0x10] sm:$0xff] %vm432, %v821
    %830 = vst.msk [vmem:[#allocation4 + $0x18] sm:$0xff] %vm432, %v822
    %831 = vst.msk [vmem:[#allocation4 + $0x20] sm:$0xff] %vm432, %v823
    %832 = vst.msk [vmem:[#allocation4 + $0x28] sm:$0xff] %vm432, %v824
    %833 = vst.msk [vmem:[#allocation4 + $0x30] sm:$0xff] %vm432, %v825
    %834 = vst.msk [vmem:[#allocation4 + $0x38] sm:$0xff] %vm432, %v826
    %v835 = vld [vmem:[#allocation3 + $0x8] sm:$0xff]
    %v836 = vld [vmem:[#allocation3 + $0x10] sm:$0xff]
    %v837 = vld [vmem:[#allocation3 + $0x18] sm:$0xff]
    %v838 = vld [vmem:[#allocation3 + $0x20] sm:$0xff]
    %v839 = vld [vmem:[#allocation3 + $0x28] sm:$0xff]
    %v840 = vld [vmem:[#allocation3 + $0x30] sm:$0xff]
    %v841 = vld [vmem:[#allocation3 + $0x38] sm:$0xff]
    %v842 = vld [vmem:[#allocation3 + $0x40] sm:$0xff]
    %v843 = vld [vmem:[#allocation3 + $0x6] sm:$0xff]
    %v844 = vld [vmem:[#allocation3 + $0xe] sm:$0xff]
    %v845 = vld [vmem:[#allocation3 + $0x16] sm:$0xff]
    %v846 = vld [vmem:[#allocation3 + $0x1e] sm:$0xff]
    %v847 = vld [vmem:[#allocation3 + $0x26] sm:$0xff]
    %v848 = vld [vmem:[#allocation3 + $0x2e] sm:$0xff]
    %v849 = vld [vmem:[#allocation3 + $0x36] sm:$0xff]
    %v850 = vld [vmem:[#allocation3 + $0x3e] sm:$0xff]
    %s851 = scalar_lea.vmem %s3, 8
    %v852 = vld [vmem:[%s851] sm:$0xf]
    %v853 = vld [vmem:[%s851 + $0x4] sm:$0xf]
    %v854 = vpack.c.bf16 %v844, %v843
    %v855 = vpack.c.bf16 %v846, %v845
    %v856 = vpack.c.bf16 %v848, %v847
    %v857 = vpack.c.bf16 %v850, %v849
    %s858 = scalar_lea.vmem [#allocation9], 8
    %v859 = vld [vmem:[%s858] sm:$0xf]
    %v860 = vld [vmem:[%s858 + $0x4] sm:$0xf]
    %v861 = vpack.c.bf16 %v836, %v835
    %v862 = vpack.c.bf16 %v838, %v837
    %v863 = vpack.c.bf16 %v840, %v839
    %v864 = vpack.c.bf16 %v842, %v841
    %v867 = vunpack.c.l.b16 %v859
    %v868 = vunpack.c.l.b16 %v860
    %v869 = vpack.c.b16 %v868, %v867
    %v872 = vsel %vm251, %v861, 0
    %v875 = vsel %vm251, %v862, 0
    %v878 = vsel %vm251, %v863, 0
    %v881 = vsel %vm251, %v864, 0
    %883 = vmatprep.subr.bf16.mxu0 0
    %884 = vmatpush1.bf16.msra.mxu0 %v869
    %885 = vmatprep.subr.bf16.mxu0 0
    %886 = vmatpush1.bf16.msra.mxu0 0
    %887 = vmatprep.subr.bf16.mxu0 0
    %888 = vmatpush1.bf16.msra.mxu0 0
    %889 = vmatprep.subr.bf16.mxu0 0
    %890 = vmatpush1.bf16.msra.mxu0 0
    %891 = vmatprep.subr.bf16.mxu0 0
    %892 = vmatpush1.bf16.msra.mxu0 0
    %893 = vmatprep.subr.bf16.mxu0 0
    %894 = vmatpush1.bf16.msra.mxu0 0
    %895 = vmatprep.subr.bf16.mxu0 0
    %896 = vmatpush1.bf16.msra.mxu0 0
    %897 = vmatprep.subr.bf16.mxu0 0
    %898 = vmatpush1.bf16.msra.mxu0 0
    %899 = vmatprep.subr.bf16.mxu0 0
    %900 = vmatpush1.bf16.msra.mxu0 0
    %901 = vmatprep.subr.bf16.mxu0 0
    %902 = vmatpush1.bf16.msra.mxu0 0
    %903 = vmatprep.subr.bf16.mxu0 0
    %904 = vmatpush1.bf16.msra.mxu0 0
    %905 = vmatprep.subr.bf16.mxu0 0
    %906 = vmatpush1.bf16.msra.mxu0 0
    %907 = vmatprep.subr.bf16.mxu0 0
    %908 = vmatpush1.bf16.msra.mxu0 0
    %909 = vmatprep.subr.bf16.mxu0 0
    %910 = vmatpush1.bf16.msra.mxu0 0
    %911 = vmatprep.subr.bf16.mxu0 0
    %912 = vmatpush1.bf16.msra.mxu0 0
    %913 = vmatprep.subr.bf16.mxu0 0
    %914 = vmatpush1.bf16.msra.mxu0 0
    %915 = vmatprep.mubr.bf16.mxu0 0
    %916 = vmatmul.mubr.bf16.gmra.mrb[0].mxu0 %v872
    %v917 = vpop.f32.mrb[0].mxu0
    %v918 = vadd.f32 0.0, %v917
    %v919 = vpop.f32.mrb[0].mxu0
    %v920 = vpop.f32.mrb[0].mxu0
    %v921 = vadd.f32 0.0, %v920
    %v922 = vpop.f32.mrb[0].mxu0
    %923 = vmatprep.mubr.bf16.mxu0 0
    %924 = vmatmul.mubr.bf16.gmra.mrb[0].mxu0 %v875
    %v925 = vpop.f32.mrb[0].mxu0
    %v926 = vadd.f32 0.0, %v925
    %v927 = vpop.f32.mrb[0].mxu0
    %v928 = vpop.f32.mrb[0].mxu0
    %v929 = vadd.f32 0.0, %v928
    %v930 = vpop.f32.mrb[0].mxu0
    %931 = vmatprep.mubr.bf16.mxu0 0
    %932 = vmatmul.mubr.bf16.gmra.mrb[0].mxu0 %v878
    %v933 = vpop.f32.mrb[0].mxu0
    %v934 = vadd.f32 0.0, %v933
    %v935 = vpop.f32.mrb[0].mxu0
    %v936 = vpop.f32.mrb[0].mxu0
    %v937 = vadd.f32 0.0, %v936
    %v938 = vpop.f32.mrb[0].mxu0
    %939 = vmatprep.mubr.bf16.mxu0 0
    %940 = vmatmul.mubr.bf16.gmra.mrb[0].mxu0 %v881
    %v941 = vpop.f32.mrb[0].mxu0
    %v942 = vadd.f32 0.0, %v941
    %v943 = vpop.f32.mrb[0].mxu0
    %v944 = vpop.f32.mrb[0].mxu0
    %v945 = vadd.f32 0.0, %v944
    %v946 = vpop.f32.mrb[0].mxu0
    %947 = vdwg.mxu0
    %v950 = vunpack.c.l.b16 %v852
    %v951 = vunpack.c.l.b16 %v853
    %v952 = vpack.c.b16 %v951, %v950
    %v955 = vsel %vm251, %v854, 0
    %v958 = vsel %vm251, %v855, 0
    %v961 = vsel %vm251, %v856, 0
    %v964 = vsel %vm251, %v857, 0
    %966 = vmatprep.subr.bf16.mxu0 0
    %967 = vmatpush1.bf16.msra.mxu0 %v952
    %968 = vmatprep.subr.bf16.mxu0 0
    %969 = vmatpush1.bf16.msra.mxu0 0
    %970 = vmatprep.subr.bf16.mxu0 0
    %971 = vmatpush1.bf16.msra.mxu0 0
    %972 = vmatprep.subr.bf16.mxu0 0
    %973 = vmatpush1.bf16.msra.mxu0 0
    %974 = vmatprep.subr.bf16.mxu0 0
    %975 = vmatpush1.bf16.msra.mxu0 0
    %976 = vmatprep.subr.bf16.mxu0 0
    %977 = vmatpush1.bf16.msra.mxu0 0
    %978 = vmatprep.subr.bf16.mxu0 0
    %979 = vmatpush1.bf16.msra.mxu0 0
    %980 = vmatprep.subr.bf16.mxu0 0
    %981 = vmatpush1.bf16.msra.mxu0 0
    %982 = vmatprep.subr.bf16.mxu0 0
    %983 = vmatpush1.bf16.msra.mxu0 0
    %984 = vmatprep.subr.bf16.mxu0 0
    %985 = vmatpush1.bf16.msra.mxu0 0
    %986 = vmatprep.subr.bf16.mxu0 0
    %987 = vmatpush1.bf16.msra.mxu0 0
    %988 = vmatprep.subr.bf16.mxu0 0
    %989 = vmatpush1.bf16.msra.mxu0 0
    %990 = vmatprep.subr.bf16.mxu0 0
    %991 = vmatpush1.bf16.msra.mxu0 0
    %992 = vmatprep.subr.bf16.mxu0 0
    %993 = vmatpush1.bf16.msra.mxu0 0
    %994 = vmatprep.subr.bf16.mxu0 0
    %995 = vmatpush1.bf16.msra.mxu0 0
    %996 = vmatprep.subr.bf16.mxu0 0
    %997 = vmatpush1.bf16.msra.mxu0 0
    %998 = vmatprep.mubr.bf16.mxu0 0
    %999 = vmatmul.mubr.bf16.gmra.mrb[0].mxu0 %v955
    %v1000 = vpop.f32.mrb[0].mxu0
    %v1001 = vadd.f32 %v918, %v1000
    %v1002 = vpop.f32.mrb[0].mxu0
    %v1003 = vpop.f32.mrb[0].mxu0
    %v1004 = vadd.f32 %v921, %v1003
    %v1005 = vpop.f32.mrb[0].mxu0
    %1006 = vmatprep.mubr.bf16.mxu0 0
    %1007 = vmatmul.mubr.bf16.gmra.mrb[0].mxu0 %v958
    %v1008 = vpop.f32.mrb[0].mxu0
    %v1009 = vadd.f32 %v926, %v1008
    %v1010 = vpop.f32.mrb[0].mxu0
    %v1011 = vpop.f32.mrb[0].mxu0
    %v1012 = vadd.f32 %v929, %v1011
    %v1013 = vpop.f32.mrb[0].mxu0
    %1014 = vmatprep.mubr.bf16.mxu0 0
    %1015 = vmatmul.mubr.bf16.gmra.mrb[0].mxu0 %v961
    %v1016 = vpop.f32.mrb[0].mxu0
    %v1017 = vadd.f32 %v934, %v1016
    %v1018 = vpop.f32.mrb[0].mxu0
    %v1019 = vpop.f32.mrb[0].mxu0
    %v1020 = vadd.f32 %v937, %v1019
    %v1021 = vpop.f32.mrb[0].mxu0
    %1022 = vmatprep.mubr.bf16.mxu0 0
    %1023 = vmatmul.mubr.bf16.gmra.mrb[0].mxu0 %v964
    %v1024 = vpop.f32.mrb[0].mxu0
    %v1025 = vadd.f32 %v942, %v1024
    %v1026 = vpop.f32.mrb[0].mxu0
    %v1027 = vpop.f32.mrb[0].mxu0
    %v1028 = vadd.f32 %v945, %v1027
    %v1029 = vpop.f32.mrb[0].mxu0
    %1030 = vdwg.mxu0
    %v1031 = vtanh.pop %v1001
    %v1032 = vtanh.pop %v1004
    %v1033 = vtanh.pop %v1009
    %v1034 = vtanh.pop %v1012
    %v1035 = vtanh.pop %v1017
    %v1036 = vtanh.pop %v1020
    %v1037 = vtanh.pop %v1025
    %v1038 = vtanh.pop %v1028
    %v1039 = vxor.u32 %v1001, 2147483648
    %v1040 = vxor.u32 %v1004, 2147483648
    %v1041 = vxor.u32 %v1009, 2147483648
    %v1042 = vxor.u32 %v1012, 2147483648
    %v1043 = vxor.u32 %v1017, 2147483648
    %v1044 = vxor.u32 %v1020, 2147483648
    %v1045 = vxor.u32 %v1025, 2147483648
    %v1046 = vxor.u32 %v1028, 2147483648
    %v1047 = vmul.f32 %v1039, 1.442695
    %v1048 = vpow.pop %v1047
    %v1049 = vmul.f32 %v1040, 1.442695
    %v1050 = vpow.pop %v1049
    %v1051 = vmul.f32 %v1041, 1.442695
    %v1052 = vpow.pop %v1051
    %v1053 = vmul.f32 %v1042, 1.442695
    %v1054 = vpow.pop %v1053
    %v1055 = vmul.f32 %v1043, 1.442695
    %v1056 = vpow.pop %v1055
    %v1057 = vmul.f32 %v1044, 1.442695
    %v1058 = vpow.pop %v1057
    %v1059 = vmul.f32 %v1045, 1.442695
    %v1060 = vpow.pop %v1059
    %v1061 = vmul.f32 %v1046, 1.442695
    %v1062 = vpow.pop %v1061
    %v1063 = vadd.f32 %v1048, 1.0
    %v1064 = vadd.f32 %v1050, 1.0
    %v1065 = vadd.f32 %v1052, 1.0
    %v1066 = vadd.f32 %v1054, 1.0
    %v1067 = vadd.f32 %v1056, 1.0
    %v1068 = vadd.f32 %v1058, 1.0
    %v1069 = vadd.f32 %v1060, 1.0
    %v1070 = vadd.f32 %v1062, 1.0
    %v1071 = vrcp.pop %v1063
    %v1072 = vmul.f32 1.0, %v1071
    %v1073 = vrcp.pop %v1064
    %v1074 = vmul.f32 1.0, %v1073
    %v1075 = vrcp.pop %v1065
    %v1076 = vmul.f32 1.0, %v1075
    %v1077 = vrcp.pop %v1066
    %v1078 = vmul.f32 1.0, %v1077
    %v1079 = vrcp.pop %v1067
    %v1080 = vmul.f32 1.0, %v1079
    %v1081 = vrcp.pop %v1068
    %v1082 = vmul.f32 1.0, %v1081
    %v1083 = vrcp.pop %v1069
    %v1084 = vmul.f32 1.0, %v1083
    %v1085 = vrcp.pop %v1070
    %v1086 = vmul.f32 1.0, %v1085
    %v1087 = vmul.f32 %v1031, %v1072
    %v1088 = vmul.f32 %v1032, %v1074
    %v1089 = vmul.f32 %v1033, %v1076
    %v1090 = vmul.f32 %v1034, %v1078
    %v1091 = vmul.f32 %v1035, %v1080
    %v1092 = vmul.f32 %v1036, %v1082
    %v1093 = vmul.f32 %v1037, %v1084
    %v1094 = vmul.f32 %v1038, %v1086
    %s1095 = scalar_lea.vmem %s5, 8
    %v1096 = vld [vmem:[%s1095] sm:$0xf]
    %v1097 = vld [vmem:[%s1095 + $0x4] sm:$0xf]
    %v1098 = vpack.c.bf16 %v1088, %v1087
    %v1099 = vpack.c.bf16 %v1090, %v1089
    %v1100 = vpack.c.bf16 %v1092, %v1091
    %v1101 = vpack.c.bf16 %v1094, %v1093
    %s1102 = scalar_lea.vmem %s6, 1
    %v1103 = vld [vmem:[%s1102] sm:$0x1]
    %v1105 = vlaneseq
    %v1106 = vshrl.u32 %v1105, 7
    %v1107 = vsub.s32 0, %v1106
    %v1108 = vrot.slane %v1103, %v1107
    %v1112 = vunpack.c.l.b16 %v1096
    %v1113 = vunpack.c.l.b16 %v1097
    %v1114 = vpack.c.b16 %v1113, %v1112
    %v1117 = vsel %vm251, %v1098, 0
    %v1120 = vsel %vm251, %v1099, 0
    %v1123 = vsel %vm251, %v1100, 0
    %v1126 = vsel %vm251, %v1101, 0
    %1128 = vmatprep.subr.bf16.mxu0 0
    %1129 = vmatpush1.bf16.msra.mxu0 %v1114
    %1130 = vmatprep.subr.bf16.mxu0 0
    %1131 = vmatpush1.bf16.msra.mxu0 0
    %1132 = vmatprep.subr.bf16.mxu0 0
    %1133 = vmatpush1.bf16.msra.mxu0 0
    %1134 = vmatprep.subr.bf16.mxu0 0
    %1135 = vmatpush1.bf16.msra.mxu0 0
    %1136 = vmatprep.subr.bf16.mxu0 0
    %1137 = vmatpush1.bf16.msra.mxu0 0
    %1138 = vmatprep.subr.bf16.mxu0 0
    %1139 = vmatpush1.bf16.msra.mxu0 0
    %1140 = vmatprep.subr.bf16.mxu0 0
    %1141 = vmatpush1.bf16.msra.mxu0 0
    %1142 = vmatprep.subr.bf16.mxu0 0
    %1143 = vmatpush1.bf16.msra.mxu0 0
    %1144 = vmatprep.subr.bf16.mxu0 0
    %1145 = vmatpush1.bf16.msra.mxu0 0
    %1146 = vmatprep.subr.bf16.mxu0 0
    %1147 = vmatpush1.bf16.msra.mxu0 0
    %1148 = vmatprep.subr.bf16.mxu0 0
    %1149 = vmatpush1.bf16.msra.mxu0 0
    %1150 = vmatprep.subr.bf16.mxu0 0
    %1151 = vmatpush1.bf16.msra.mxu0 0
    %1152 = vmatprep.subr.bf16.mxu0 0
    %1153 = vmatpush1.bf16.msra.mxu0 0
    %1154 = vmatprep.subr.bf16.mxu0 0
    %1155 = vmatpush1.bf16.msra.mxu0 0
    %1156 = vmatprep.subr.bf16.mxu0 0
    %1157 = vmatpush1.bf16.msra.mxu0 0
    %1158 = vmatprep.subr.bf16.mxu0 0
    %1159 = vmatpush1.bf16.msra.mxu0 0
    %1160 = vmatprep.mubr.bf16.mxu0 0
    %1161 = vmatmul.mubr.bf16.gmra.mrb[0].mxu0 %v1117
    %v1162 = vpop.f32.mrb[0].mxu0
    %v1163 = vadd.f32 %v1108, %v1162
    %v1164 = vpop.f32.mrb[0].mxu0
    %v1165 = vpop.f32.mrb[0].mxu0
    %v1166 = vadd.f32 %v1108, %v1165
    %v1167 = vpop.f32.mrb[0].mxu0
    %1168 = vmatprep.mubr.bf16.mxu0 0
    %1169 = vmatmul.mubr.bf16.gmra.mrb[0].mxu0 %v1120
    %v1170 = vpop.f32.mrb[0].mxu0
    %v1171 = vadd.f32 %v1108, %v1170
    %v1172 = vpop.f32.mrb[0].mxu0
    %v1173 = vpop.f32.mrb[0].mxu0
    %v1174 = vadd.f32 %v1108, %v1173
    %v1175 = vpop.f32.mrb[0].mxu0
    %1176 = vmatprep.mubr.bf16.mxu0 0
    %1177 = vmatmul.mubr.bf16.gmra.mrb[0].mxu0 %v1123
    %v1178 = vpop.f32.mrb[0].mxu0
    %v1179 = vadd.f32 %v1108, %v1178
    %v1180 = vpop.f32.mrb[0].mxu0
    %v1181 = vpop.f32.mrb[0].mxu0
    %v1182 = vadd.f32 %v1108, %v1181
    %v1183 = vpop.f32.mrb[0].mxu0
    %1184 = vmatprep.mubr.bf16.mxu0 0
    %1185 = vmatmul.mubr.bf16.gmra.mrb[0].mxu0 %v1126
    %v1186 = vpop.f32.mrb[0].mxu0
    %v1187 = vadd.f32 %v1108, %v1186
    %v1188 = vpop.f32.mrb[0].mxu0
    %v1189 = vpop.f32.mrb[0].mxu0
    %v1190 = vadd.f32 %v1108, %v1189
    %v1191 = vpop.f32.mrb[0].mxu0
    %1192 = vdwg.mxu0
    %v1193 = vadd.f32 %v1163, %v835
    %v1194 = vadd.f32 %v1166, %v836
    %v1195 = vadd.f32 %v1171, %v837
    %v1196 = vadd.f32 %v1174, %v838
    %v1197 = vadd.f32 %v1179, %v839
    %v1198 = vadd.f32 %v1182, %v840
    %v1199 = vadd.f32 %v1187, %v841
    %v1200 = vadd.f32 %v1190, %v842
    %1201 = vst.msk [vmem:[#allocation3 + $0x8] sm:$0xff] %vm251, %v1193
    %1202 = vst.msk [vmem:[#allocation3 + $0x10] sm:$0xff] %vm251, %v1194
    %1203 = vst.msk [vmem:[#allocation3 + $0x18] sm:$0xff] %vm251, %v1195
    %1204 = vst.msk [vmem:[#allocation3 + $0x20] sm:$0xff] %vm251, %v1196
    %1205 = vst.msk [vmem:[#allocation3 + $0x28] sm:$0xff] %vm251, %v1197
    %1206 = vst.msk [vmem:[#allocation3 + $0x30] sm:$0xff] %vm251, %v1198
    %1207 = vst.msk [vmem:[#allocation3 + $0x38] sm:$0xff] %vm251, %v1199
    %1208 = vst.msk [vmem:[#allocation3 + $0x40] sm:$0xff] %vm251, %v1200
    %v1209 = vld [vmem:[#allocation4] sm:$0xff]
    %v1210 = vld [vmem:[#allocation4 + $0x8] sm:$0xff]
    %v1211 = vld [vmem:[#allocation4 + $0x10] sm:$0xff]
    %v1212 = vld [vmem:[#allocation4 + $0x18] sm:$0xff]
    %v1213 = vld [vmem:[#allocation4 + $0x20] sm:$0xff]
    %v1214 = vld [vmem:[#allocation4 + $0x28] sm:$0xff]
    %v1215 = vld [vmem:[#allocation4 + $0x30] sm:$0xff]
    %v1216 = vld [vmem:[#allocation4 + $0x38] sm:$0xff]
    %v1217 = vadd.f32 %v1209, %v1163
    %v1218 = vadd.f32 %v1210, %v1166
    %v1219 = vadd.f32 %v1211, %v1171
    %v1220 = vadd.f32 %v1212, %v1174
    %v1221 = vadd.f32 %v1213, %v1179
    %v1222 = vadd.f32 %v1214, %v1182
    %v1223 = vadd.f32 %v1215, %v1187
    %v1224 = vadd.f32 %v1216, %v1190
    %1225 = vst.msk [vmem:[#allocation4] sm:$0xff] %vm432, %v1217
    %1226 = vst.msk [vmem:[#allocation4 + $0x8] sm:$0xff] %vm432, %v1218
    %1227 = vst.msk [vmem:[#allocation4 + $0x10] sm:$0xff] %vm432, %v1219
    %1228 = vst.msk [vmem:[#allocation4 + $0x18] sm:$0xff] %vm432, %v1220
    %1229 = vst.msk [vmem:[#allocation4 + $0x20] sm:$0xff] %vm432, %v1221
    %1230 = vst.msk [vmem:[#allocation4 + $0x28] sm:$0xff] %vm432, %v1222
    %1231 = vst.msk [vmem:[#allocation4 + $0x30] sm:$0xff] %vm432, %v1223
    %1232 = vst.msk [vmem:[#allocation4 + $0x38] sm:$0xff] %vm432, %v1224
    %v1233 = vld [vmem:[#allocation3 + $0x8] sm:$0xff]
    %v1234 = vld [vmem:[#allocation3 + $0x10] sm:$0xff]
    %v1235 = vld [vmem:[#allocation3 + $0x18] sm:$0xff]
    %v1236 = vld [vmem:[#allocation3 + $0x20] sm:$0xff]
    %v1237 = vld [vmem:[#allocation3 + $0x28] sm:$0xff]
    %v1238 = vld [vmem:[#allocation3 + $0x30] sm:$0xff]
    %v1239 = vld [vmem:[#allocation3 + $0x38] sm:$0xff]
    %v1240 = vld [vmem:[#allocation3 + $0x40] sm:$0xff]
    %v1241 = vld [vmem:[#allocation3 + $0x4] sm:$0xff]
    %v1242 = vld [vmem:[#allocation3 + $0xc] sm:$0xff]
    %v1243 = vld [vmem:[#allocation3 + $0x14] sm:$0xff]
    %v1244 = vld [vmem:[#allocation3 + $0x1c] sm:$0xff]
    %v1245 = vld [vmem:[#allocation3 + $0x24] sm:$0xff]
    %v1246 = vld [vmem:[#allocation3 + $0x2c] sm:$0xff]
    %v1247 = vld [vmem:[#allocation3 + $0x34] sm:$0xff]
    %v1248 = vld [vmem:[#allocation3 + $0x3c] sm:$0xff]
    %s1249 = scalar_lea.vmem %s3, 16
    %v1250 = vld [vmem:[%s1249] sm:$0xf]
    %v1251 = vld [vmem:[%s1249 + $0x4] sm:$0xf]
    %v1252 = vpack.c.bf16 %v1242, %v1241
    %v1253 = vpack.c.bf16 %v1244, %v1243
    %v1254 = vpack.c.bf16 %v1246, %v1245
    %v1255 = vpack.c.bf16 %v1248, %v1247
    %s1256 = scalar_lea.vmem [#allocation9], 16
    %v1257 = vld [vmem:[%s1256] sm:$0xf]
    %v1258 = vld [vmem:[%s1256 + $0x4] sm:$0xf]
    %v1259 = vpack.c.bf16 %v1234, %v1233
    %v1260 = vpack.c.bf16 %v1236, %v1235
    %v1261 = vpack.c.bf16 %v1238, %v1237
    %v1262 = vpack.c.bf16 %v1240, %v1239
    %v1265 = vunpack.c.l.b16 %v1257
    %v1266 = vunpack.c.l.b16 %v1258
    %v1267 = vpack.c.b16 %v1266, %v1265
    %v1270 = vsel %vm251, %v1259, 0
    %v1273 = vsel %vm251, %v1260, 0
    %v1276 = vsel %vm251, %v1261, 0
    %v1279 = vsel %vm251, %v1262, 0
    %1281 = vmatprep.subr.bf16.mxu0 0
    %1282 = vmatpush1.bf16.msra.mxu0 %v1267
    %1283 = vmatprep.subr.bf16.mxu0 0
    %1284 = vmatpush1.bf16.msra.mxu0 0
    %1285 = vmatprep.subr.bf16.mxu0 0
    %1286 = vmatpush1.bf16.msra.mxu0 0
    %1287 = vmatprep.subr.bf16.mxu0 0
    %1288 = vmatpush1.bf16.msra.mxu0 0
    %1289 = vmatprep.subr.bf16.mxu0 0
    %1290 = vmatpush1.bf16.msra.mxu0 0
    %1291 = vmatprep.subr.bf16.mxu0 0
    %1292 = vmatpush1.bf16.msra.mxu0 0
    %1293 = vmatprep.subr.bf16.mxu0 0
    %1294 = vmatpush1.bf16.msra.mxu0 0
    %1295 = vmatprep.subr.bf16.mxu0 0
    %1296 = vmatpush1.bf16.msra.mxu0 0
    %1297 = vmatprep.subr.bf16.mxu0 0
    %1298 = vmatpush1.bf16.msra.mxu0 0
    %1299 = vmatprep.subr.bf16.mxu0 0
    %1300 = vmatpush1.bf16.msra.mxu0 0
    %1301 = vmatprep.subr.bf16.mxu0 0
    %1302 = vmatpush1.bf16.msra.mxu0 0
    %1303 = vmatprep.subr.bf16.mxu0 0
    %1304 = vmatpush1.bf16.msra.mxu0 0
    %1305 = vmatprep.subr.bf16.mxu0 0
    %1306 = vmatpush1.bf16.msra.mxu0 0
    %1307 = vmatprep.subr.bf16.mxu0 0
    %1308 = vmatpush1.bf16.msra.mxu0 0
    %1309 = vmatprep.subr.bf16.mxu0 0
    %1310 = vmatpush1.bf16.msra.mxu0 0
    %1311 = vmatprep.subr.bf16.mxu0 0
    %1312 = vmatpush1.bf16.msra.mxu0 0
    %1313 = vmatprep.mubr.bf16.mxu0 0
    %1314 = vmatmul.mubr.bf16.gmra.mrb[0].mxu0 %v1270
    %v1315 = vpop.f32.mrb[0].mxu0
    %v1316 = vadd.f32 0.0, %v1315
    %v1317 = vpop.f32.mrb[0].mxu0
    %v1318 = vpop.f32.mrb[0].mxu0
    %v1319 = vadd.f32 0.0, %v1318
    %v1320 = vpop.f32.mrb[0].mxu0
    %1321 = vmatprep.mubr.bf16.mxu0 0
    %1322 = vmatmul.mubr.bf16.gmra.mrb[0].mxu0 %v1273
    %v1323 = vpop.f32.mrb[0].mxu0
    %v1324 = vadd.f32 0.0, %v1323
    %v1325 = vpop.f32.mrb[0].mxu0
    %v1326 = vpop.f32.mrb[0].mxu0
    %v1327 = vadd.f32 0.0, %v1326
    %v1328 = vpop.f32.mrb[0].mxu0
    %1329 = vmatprep.mubr.bf16.mxu0 0
    %1330 = vmatmul.mubr.bf16.gmra.mrb[0].mxu0 %v1276
    %v1331 = vpop.f32.mrb[0].mxu0
    %v1332 = vadd.f32 0.0, %v1331
    %v1333 = vpop.f32.mrb[0].mxu0
    %v1334 = vpop.f32.mrb[0].mxu0
    %v1335 = vadd.f32 0.0, %v1334
    %v1336 = vpop.f32.mrb[0].mxu0
    %1337 = vmatprep.mubr.bf16.mxu0 0
    %1338 = vmatmul.mubr.bf16.gmra.mrb[0].mxu0 %v1279
    %v1339 = vpop.f32.mrb[0].mxu0
    %v1340 = vadd.f32 0.0, %v1339
    %v1341 = vpop.f32.mrb[0].mxu0
    %v1342 = vpop.f32.mrb[0].mxu0
    %v1343 = vadd.f32 0.0, %v1342
    %v1344 = vpop.f32.mrb[0].mxu0
    %1345 = vdwg.mxu0
    %v1348 = vunpack.c.l.b16 %v1250
    %v1349 = vunpack.c.l.b16 %v1251
    %v1350 = vpack.c.b16 %v1349, %v1348
    %v1353 = vsel %vm251, %v1252, 0
    %v1356 = vsel %vm251, %v1253, 0
    %v1359 = vsel %vm251, %v1254, 0
    %v1362 = vsel %vm251, %v1255, 0
    %1364 = vmatprep.subr.bf16.mxu0 0
    %1365 = vmatpush1.bf16.msra.mxu0 %v1350
    %1366 = vmatprep.subr.bf16.mxu0 0
    %1367 = vmatpush1.bf16.msra.mxu0 0
    %1368 = vmatprep.subr.bf16.mxu0 0
    %1369 = vmatpush1.bf16.msra.mxu0 0
    %1370 = vmatprep.subr.bf16.mxu0 0
    %1371 = vmatpush1.bf16.msra.mxu0 0
    %1372 = vmatprep.subr.bf16.mxu0 0
    %1373 = vmatpush1.bf16.msra.mxu0 0
    %1374 = vmatprep.subr.bf16.mxu0 0
    %1375 = vmatpush1.bf16.msra.mxu0 0
    %1376 = vmatprep.subr.bf16.mxu0 0
    %1377 = vmatpush1.bf16.msra.mxu0 0
    %1378 = vmatprep.subr.bf16.mxu0 0
    %1379 = vmatpush1.bf16.msra.mxu0 0
    %1380 = vmatprep.subr.bf16.mxu0 0
    %1381 = vmatpush1.bf16.msra.mxu0 0
    %1382 = vmatprep.subr.bf16.mxu0 0
    %1383 = vmatpush1.bf16.msra.mxu0 0
    %1384 = vmatprep.subr.bf16.mxu0 0
    %1385 = vmatpush1.bf16.msra.mxu0 0
    %1386 = vmatprep.subr.bf16.mxu0 0
    %1387 = vmatpush1.bf16.msra.mxu0 0
    %1388 = vmatprep.subr.bf16.mxu0 0
    %1389 = vmatpush1.bf16.msra.mxu0 0
    %1390 = vmatprep.subr.bf16.mxu0 0
    %1391 = vmatpush1.bf16.msra.mxu0 0
    %1392 = vmatprep.subr.bf16.mxu0 0
    %1393 = vmatpush1.bf16.msra.mxu0 0
    %1394 = vmatprep.subr.bf16.mxu0 0
    %1395 = vmatpush1.bf16.msra.mxu0 0
    %1396 = vmatprep.mubr.bf16.mxu0 0
    %1397 = vmatmul.mubr.bf16.gmra.mrb[0].mxu0 %v1353
    %v1398 = vpop.f32.mrb[0].mxu0
    %v1399 = vadd.f32 %v1316, %v1398
    %v1400 = vpop.f32.mrb[0].mxu0
    %v1401 = vpop.f32.mrb[0].mxu0
    %v1402 = vadd.f32 %v1319, %v1401
    %v1403 = vpop.f32.mrb[0].mxu0
    %1404 = vmatprep.mubr.bf16.mxu0 0
    %1405 = vmatmul.mubr.bf16.gmra.mrb[0].mxu0 %v1356
    %v1406 = vpop.f32.mrb[0].mxu0
    %v1407 = vadd.f32 %v1324, %v1406
    %v1408 = vpop.f32.mrb[0].mxu0
    %v1409 = vpop.f32.mrb[0].mxu0
    %v1410 = vadd.f32 %v1327, %v1409
    %v1411 = vpop.f32.mrb[0].mxu0
    %1412 = vmatprep.mubr.bf16.mxu0 0
    %1413 = vmatmul.mubr.bf16.gmra.mrb[0].mxu0 %v1359
    %v1414 = vpop.f32.mrb[0].mxu0
    %v1415 = vadd.f32 %v1332, %v1414
    %v1416 = vpop.f32.mrb[0].mxu0
    %v1417 = vpop.f32.mrb[0].mxu0
    %v1418 = vadd.f32 %v1335, %v1417
    %v1419 = vpop.f32.mrb[0].mxu0
    %1420 = vmatprep.mubr.bf16.mxu0 0
    %1421 = vmatmul.mubr.bf16.gmra.mrb[0].mxu0 %v1362
    %v1422 = vpop.f32.mrb[0].mxu0
    %v1423 = vadd.f32 %v1340, %v1422
    %v1424 = vpop.f32.mrb[0].mxu0
    %v1425 = vpop.f32.mrb[0].mxu0
    %v1426 = vadd.f32 %v1343, %v1425
    %v1427 = vpop.f32.mrb[0].mxu0
    %1428 = vdwg.mxu0
    %v1429 = vtanh.pop %v1399
    %v1430 = vtanh.pop %v1402
    %v1431 = vtanh.pop %v1407
    %v1432 = vtanh.pop %v1410
    %v1433 = vtanh.pop %v1415
    %v1434 = vtanh.pop %v1418
    %v1435 = vtanh.pop %v1423
    %v1436 = vtanh.pop %v1426
    %v1437 = vxor.u32 %v1399, 2147483648
    %v1438 = vxor.u32 %v1402, 2147483648
    %v1439 = vxor.u32 %v1407, 2147483648
    %v1440 = vxor.u32 %v1410, 2147483648
    %v1441 = vxor.u32 %v1415, 2147483648
    %v1442 = vxor.u32 %v1418, 2147483648
    %v1443 = vxor.u32 %v1423, 2147483648
    %v1444 = vxor.u32 %v1426, 2147483648
    %v1445 = vmul.f32 %v1437, 1.442695
    %v1446 = vpow.pop %v1445
    %v1447 = vmul.f32 %v1438, 1.442695
    %v1448 = vpow.pop %v1447
    %v1449 = vmul.f32 %v1439, 1.442695
    %v1450 = vpow.pop %v1449
    %v1451 = vmul.f32 %v1440, 1.442695
    %v1452 = vpow.pop %v1451
    %v1453 = vmul.f32 %v1441, 1.442695
    %v1454 = vpow.pop %v1453
    %v1455 = vmul.f32 %v1442, 1.442695
    %v1456 = vpow.pop %v1455
    %v1457 = vmul.f32 %v1443, 1.442695
    %v1458 = vpow.pop %v1457
    %v1459 = vmul.f32 %v1444, 1.442695
    %v1460 = vpow.pop %v1459
    %v1461 = vadd.f32 %v1446, 1.0
    %v1462 = vadd.f32 %v1448, 1.0
    %v1463 = vadd.f32 %v1450, 1.0
    %v1464 = vadd.f32 %v1452, 1.0
    %v1465 = vadd.f32 %v1454, 1.0
    %v1466 = vadd.f32 %v1456, 1.0
    %v1467 = vadd.f32 %v1458, 1.0
    %v1468 = vadd.f32 %v1460, 1.0
    %v1469 = vrcp.pop %v1461
    %v1470 = vmul.f32 1.0, %v1469
    %v1471 = vrcp.pop %v1462
    %v1472 = vmul.f32 1.0, %v1471
    %v1473 = vrcp.pop %v1463
    %v1474 = vmul.f32 1.0, %v1473
    %v1475 = vrcp.pop %v1464
    %v1476 = vmul.f32 1.0, %v1475
    %v1477 = vrcp.pop %v1465
    %v1478 = vmul.f32 1.0, %v1477
    %v1479 = vrcp.pop %v1466
    %v1480 = vmul.f32 1.0, %v1479
    %v1481 = vrcp.pop %v1467
    %v1482 = vmul.f32 1.0, %v1481
    %v1483 = vrcp.pop %v1468
    %v1484 = vmul.f32 1.0, %v1483
    %v1485 = vmul.f32 %v1429, %v1470
    %v1486 = vmul.f32 %v1430, %v1472
    %v1487 = vmul.f32 %v1431, %v1474
    %v1488 = vmul.f32 %v1432, %v1476
    %v1489 = vmul.f32 %v1433, %v1478
    %v1490 = vmul.f32 %v1434, %v1480
    %v1491 = vmul.f32 %v1435, %v1482
    %v1492 = vmul.f32 %v1436, %v1484
    %s1493 = scalar_lea.vmem %s5, 16
    %v1494 = vld [vmem:[%s1493] sm:$0xf]
    %v1495 = vld [vmem:[%s1493 + $0x4] sm:$0xf]
    %v1496 = vpack.c.bf16 %v1486, %v1485
    %v1497 = vpack.c.bf16 %v1488, %v1487
    %v1498 = vpack.c.bf16 %v1490, %v1489
    %v1499 = vpack.c.bf16 %v1492, %v1491
    %s1500 = scalar_lea.vmem %s6, 2
    %v1501 = vld [vmem:[%s1500] sm:$0x1]
    %v1503 = vlaneseq
    %v1504 = vshrl.u32 %v1503, 7
    %v1505 = vsub.s32 0, %v1504
    %v1506 = vrot.slane %v1501, %v1505
    %v1510 = vunpack.c.l.b16 %v1494
    %v1511 = vunpack.c.l.b16 %v1495
    %v1512 = vpack.c.b16 %v1511, %v1510
    %v1515 = vsel %vm251, %v1496, 0
    %v1518 = vsel %vm251, %v1497, 0
    %v1521 = vsel %vm251, %v1498, 0
    %v1524 = vsel %vm251, %v1499, 0
    %1526 = vmatprep.subr.bf16.mxu0 0
    %1527 = vmatpush1.bf16.msra.mxu0 %v1512
    %1528 = vmatprep.subr.bf16.mxu0 0
    %1529 = vmatpush1.bf16.msra.mxu0 0
    %1530 = vmatprep.subr.bf16.mxu0 0
    %1531 = vmatpush1.bf16.msra.mxu0 0
    %1532 = vmatprep.subr.bf16.mxu0 0
    %1533 = vmatpush1.bf16.msra.mxu0 0
    %1534 = vmatprep.subr.bf16.mxu0 0
    %1535 = vmatpush1.bf16.msra.mxu0 0
    %1536 = vmatprep.subr.bf16.mxu0 0
    %1537 = vmatpush1.bf16.msra.mxu0 0
    %1538 = vmatprep.subr.bf16.mxu0 0
    %1539 = vmatpush1.bf16.msra.mxu0 0
    %1540 = vmatprep.subr.bf16.mxu0 0
    %1541 = vmatpush1.bf16.msra.mxu0 0
    %1542 = vmatprep.subr.bf16.mxu0 0
    %1543 = vmatpush1.bf16.msra.mxu0 0
    %1544 = vmatprep.subr.bf16.mxu0 0
    %1545 = vmatpush1.bf16.msra.mxu0 0
    %1546 = vmatprep.subr.bf16.mxu0 0
    %1547 = vmatpush1.bf16.msra.mxu0 0
    %1548 = vmatprep.subr.bf16.mxu0 0
    %1549 = vmatpush1.bf16.msra.mxu0 0
    %1550 = vmatprep.subr.bf16.mxu0 0
    %1551 = vmatpush1.bf16.msra.mxu0 0
    %1552 = vmatprep.subr.bf16.mxu0 0
    %1553 = vmatpush1.bf16.msra.mxu0 0
    %1554 = vmatprep.subr.bf16.mxu0 0
    %1555 = vmatpush1.bf16.msra.mxu0 0
    %1556 = vmatprep.subr.bf16.mxu0 0
    %1557 = vmatpush1.bf16.msra.mxu0 0
    %1558 = vmatprep.mubr.bf16.mxu0 0
    %1559 = vmatmul.mubr.bf16.gmra.mrb[0].mxu0 %v1515
    %v1560 = vpop.f32.mrb[0].mxu0
    %v1561 = vadd.f32 %v1506, %v1560
    %v1562 = vpop.f32.mrb[0].mxu0
    %v1563 = vpop.f32.mrb[0].mxu0
    %v1564 = vadd.f32 %v1506, %v1563
    %v1565 = vpop.f32.mrb[0].mxu0
    %1566 = vmatprep.mubr.bf16.mxu0 0
    %1567 = vmatmul.mubr.bf16.gmra.mrb[0].mxu0 %v1518
    %v1568 = vpop.f32.mrb[0].mxu0
    %v1569 = vadd.f32 %v1506, %v1568
    %v1570 = vpop.f32.mrb[0].mxu0
    %v1571 = vpop.f32.mrb[0].mxu0
    %v1572 = vadd.f32 %v1506, %v1571
    %v1573 = vpop.f32.mrb[0].mxu0
    %1574 = vmatprep.mubr.bf16.mxu0 0
    %1575 = vmatmul.mubr.bf16.gmra.mrb[0].mxu0 %v1521
    %v1576 = vpop.f32.mrb[0].mxu0
    %v1577 = vadd.f32 %v1506, %v1576
    %v1578 = vpop.f32.mrb[0].mxu0
    %v1579 = vpop.f32.mrb[0].mxu0
    %v1580 = vadd.f32 %v1506, %v1579
    %v1581 = vpop.f32.mrb[0].mxu0
    %1582 = vmatprep.mubr.bf16.mxu0 0
    %1583 = vmatmul.mubr.bf16.gmra.mrb[0].mxu0 %v1524
    %v1584 = vpop.f32.mrb[0].mxu0
    %v1585 = vadd.f32 %v1506, %v1584
    %v1586 = vpop.f32.mrb[0].mxu0
    %v1587 = vpop.f32.mrb[0].mxu0
    %v1588 = vadd.f32 %v1506, %v1587
    %v1589 = vpop.f32.mrb[0].mxu0
    %1590 = vdwg.mxu0
    %v1591 = vadd.f32 %v1561, %v1233
    %v1592 = vadd.f32 %v1564, %v1234
    %v1593 = vadd.f32 %v1569, %v1235
    %v1594 = vadd.f32 %v1572, %v1236
    %v1595 = vadd.f32 %v1577, %v1237
    %v1596 = vadd.f32 %v1580, %v1238
    %v1597 = vadd.f32 %v1585, %v1239
    %v1598 = vadd.f32 %v1588, %v1240
    %1599 = vst.msk [vmem:[#allocation3 + $0x8] sm:$0xff] %vm251, %v1591
    %1600 = vst.msk [vmem:[#allocation3 + $0x10] sm:$0xff] %vm251, %v1592
    %1601 = vst.msk [vmem:[#allocation3 + $0x18] sm:$0xff] %vm251, %v1593
    %1602 = vst.msk [vmem:[#allocation3 + $0x20] sm:$0xff] %vm251, %v1594
    %1603 = vst.msk [vmem:[#allocation3 + $0x28] sm:$0xff] %vm251, %v1595
    %1604 = vst.msk [vmem:[#allocation3 + $0x30] sm:$0xff] %vm251, %v1596
    %1605 = vst.msk [vmem:[#allocation3 + $0x38] sm:$0xff] %vm251, %v1597
    %1606 = vst.msk [vmem:[#allocation3 + $0x40] sm:$0xff] %vm251, %v1598
    %v1607 = vld [vmem:[#allocation4] sm:$0xff]
    %v1608 = vld [vmem:[#allocation4 + $0x8] sm:$0xff]
    %v1609 = vld [vmem:[#allocation4 + $0x10] sm:$0xff]
    %v1610 = vld [vmem:[#allocation4 + $0x18] sm:$0xff]
    %v1611 = vld [vmem:[#allocation4 + $0x20] sm:$0xff]
    %v1612 = vld [vmem:[#allocation4 + $0x28] sm:$0xff]
    %v1613 = vld [vmem:[#allocation4 + $0x30] sm:$0xff]
    %v1614 = vld [vmem:[#allocation4 + $0x38] sm:$0xff]
    %v1615 = vadd.f32 %v1607, %v1561
    %v1616 = vadd.f32 %v1608, %v1564
    %v1617 = vadd.f32 %v1609, %v1569
    %v1618 = vadd.f32 %v1610, %v1572
    %v1619 = vadd.f32 %v1611, %v1577
    %v1620 = vadd.f32 %v1612, %v1580
    %v1621 = vadd.f32 %v1613, %v1585
    %v1622 = vadd.f32 %v1614, %v1588
    %1623 = vst.msk [vmem:[#allocation4] sm:$0xff] %vm432, %v1615
    %1624 = vst.msk [vmem:[#allocation4 + $0x8] sm:$0xff] %vm432, %v1616
    %1625 = vst.msk [vmem:[#allocation4 + $0x10] sm:$0xff] %vm432, %v1617
    %1626 = vst.msk [vmem:[#allocation4 + $0x18] sm:$0xff] %vm432, %v1618
    %1627 = vst.msk [vmem:[#allocation4 + $0x20] sm:$0xff] %vm432, %v1619
    %1628 = vst.msk [vmem:[#allocation4 + $0x28] sm:$0xff] %vm432, %v1620
    %1629 = vst.msk [vmem:[#allocation4 + $0x30] sm:$0xff] %vm432, %v1621
    %1630 = vst.msk [vmem:[#allocation4 + $0x38] sm:$0xff] %vm432, %v1622
    %v1631 = vld [vmem:[#allocation3 + $0x8] sm:$0xff]
    %v1632 = vld [vmem:[#allocation3 + $0x10] sm:$0xff]
    %v1633 = vld [vmem:[#allocation3 + $0x18] sm:$0xff]
    %v1634 = vld [vmem:[#allocation3 + $0x20] sm:$0xff]
    %v1635 = vld [vmem:[#allocation3 + $0x28] sm:$0xff]
    %v1636 = vld [vmem:[#allocation3 + $0x30] sm:$0xff]
    %v1637 = vld [vmem:[#allocation3 + $0x38] sm:$0xff]
    %v1638 = vld [vmem:[#allocation3 + $0x40] sm:$0xff]
    %v1639 = vld [vmem:[#allocation3 + $0x7] sm:$0xff]
    %v1640 = vld [vmem:[#allocation3 + $0xf] sm:$0xff]
    %v1641 = vld [vmem:[#allocation3 + $0x17] sm:$0xff]
    %v1642 = vld [vmem:[#allocation3 + $0x1f] sm:$0xff]
    %v1643 = vld [vmem:[#allocation3 + $0x27] sm:$0xff]
    %v1644 = vld [vmem:[#allocation3 + $0x2f] sm:$0xff]
    %v1645 = vld [vmem:[#allocation3 + $0x37] sm:$0xff]
    %v1646 = vld [vmem:[#allocation3 + $0x3f] sm:$0xff]
    %s1647 = scalar_lea.vmem %s3, 24
    %v1648 = vld [vmem:[%s1647] sm:$0xf]
    %v1649 = vld [vmem:[%s1647 + $0x4] sm:$0xf]
    %v1650 = vpack.c.bf16 %v1640, %v1639
    %v1651 = vpack.c.bf16 %v1642, %v1641
    %v1652 = vpack.c.bf16 %v1644, %v1643
    %v1653 = vpack.c.bf16 %v1646, %v1645
    %s1654 = scalar_lea.vmem [#allocation9], 24
    %v1655 = vld [vmem:[%s1654] sm:$0xf]
    %v1656 = vld [vmem:[%s1654 + $0x4] sm:$0xf]
    %v1657 = vpack.c.bf16 %v1632, %v1631
    %v1658 = vpack.c.bf16 %v1634, %v1633
    %v1659 = vpack.c.bf16 %v1636, %v1635
    %v1660 = vpack.c.bf16 %v1638, %v1637
    %v1663 = vunpack.c.l.b16 %v1655
    %v1664 = vunpack.c.l.b16 %v1656
    %v1665 = vpack.c.b16 %v1664, %v1663
    %v1668 = vsel %vm251, %v1657, 0
    %v1671 = vsel %vm251, %v1658, 0
    %v1674 = vsel %vm251, %v1659, 0
    %v1677 = vsel %vm251, %v1660, 0
    %1679 = vmatprep.subr.bf16.mxu0 0
    %1680 = vmatpush1.bf16.msra.mxu0 %v1665
    %1681 = vmatprep.subr.bf16.mxu0 0
    %1682 = vmatpush1.bf16.msra.mxu0 0
    %1683 = vmatprep.subr.bf16.mxu0 0
    %1684 = vmatpush1.bf16.msra.mxu0 0
    %1685 = vmatprep.subr.bf16.mxu0 0
    %1686 = vmatpush1.bf16.msra.mxu0 0
    %1687 = vmatprep.subr.bf16.mxu0 0
    %1688 = vmatpush1.bf16.msra.mxu0 0
    %1689 = vmatprep.subr.bf16.mxu0 0
    %1690 = vmatpush1.bf16.msra.mxu0 0
    %1691 = vmatprep.subr.bf16.mxu0 0
    %1692 = vmatpush1.bf16.msra.mxu0 0
    %1693 = vmatprep.subr.bf16.mxu0 0
    %1694 = vmatpush1.bf16.msra.mxu0 0
    %1695 = vmatprep.subr.bf16.mxu0 0
    %1696 = vmatpush1.bf16.msra.mxu0 0
    %1697 = vmatprep.subr.bf16.mxu0 0
    %1698 = vmatpush1.bf16.msra.mxu0 0
    %1699 = vmatprep.subr.bf16.mxu0 0
    %1700 = vmatpush1.bf16.msra.mxu0 0
    %1701 = vmatprep.subr.bf16.mxu0 0
    %1702 = vmatpush1.bf16.msra.mxu0 0
    %1703 = vmatprep.subr.bf16.mxu0 0
    %1704 = vmatpush1.bf16.msra.mxu0 0
    %1705 = vmatprep.subr.bf16.mxu0 0
    %1706 = vmatpush1.bf16.msra.mxu0 0
    %1707 = vmatprep.subr.bf16.mxu0 0
    %1708 = vmatpush1.bf16.msra.mxu0 0
    %1709 = vmatprep.subr.bf16.mxu0 0
    %1710 = vmatpush1.bf16.msra.mxu0 0
    %1711 = vmatprep.mubr.bf16.mxu0 0
    %1712 = vmatmul.mubr.bf16.gmra.mrb[0].mxu0 %v1668
    %v1713 = vpop.f32.mrb[0].mxu0
    %v1714 = vadd.f32 0.0, %v1713
    %v1715 = vpop.f32.mrb[0].mxu0
    %v1716 = vpop.f32.mrb[0].mxu0
    %v1717 = vadd.f32 0.0, %v1716
    %v1718 = vpop.f32.mrb[0].mxu0
    %1719 = vmatprep.mubr.bf16.mxu0 0
    %1720 = vmatmul.mubr.bf16.gmra.mrb[0].mxu0 %v1671
    %v1721 = vpop.f32.mrb[0].mxu0
    %v1722 = vadd.f32 0.0, %v1721
    %v1723 = vpop.f32.mrb[0].mxu0
    %v1724 = vpop.f32.mrb[0].mxu0
    %v1725 = vadd.f32 0.0, %v1724
    %v1726 = vpop.f32.mrb[0].mxu0
    %1727 = vmatprep.mubr.bf16.mxu0 0
    %1728 = vmatmul.mubr.bf16.gmra.mrb[0].mxu0 %v1674
    %v1729 = vpop.f32.mrb[0].mxu0
    %v1730 = vadd.f32 0.0, %v1729
    %v1731 = vpop.f32.mrb[0].mxu0
    %v1732 = vpop.f32.mrb[0].mxu0
    %v1733 = vadd.f32 0.0, %v1732
    %v1734 = vpop.f32.mrb[0].mxu0
    %1735 = vmatprep.mubr.bf16.mxu0 0
    %1736 = vmatmul.mubr.bf16.gmra.mrb[0].mxu0 %v1677
    %v1737 = vpop.f32.mrb[0].mxu0
    %v1738 = vadd.f32 0.0, %v1737
    %v1739 = vpop.f32.mrb[0].mxu0
    %v1740 = vpop.f32.mrb[0].mxu0
    %v1741 = vadd.f32 0.0, %v1740
    %v1742 = vpop.f32.mrb[0].mxu0
    %1743 = vdwg.mxu0
    %v1746 = vunpack.c.l.b16 %v1648
    %v1747 = vunpack.c.l.b16 %v1649
    %v1748 = vpack.c.b16 %v1747, %v1746
    %v1751 = vsel %vm251, %v1650, 0
    %v1754 = vsel %vm251, %v1651, 0
    %v1757 = vsel %vm251, %v1652, 0
    %v1760 = vsel %vm251, %v1653, 0
    %1762 = vmatprep.subr.bf16.mxu0 0
    %1763 = vmatpush1.bf16.msra.mxu0 %v1748
    %1764 = vmatprep.subr.bf16.mxu0 0
    %1765 = vmatpush1.bf16.msra.mxu0 0
    %1766 = vmatprep.subr.bf16.mxu0 0
    %1767 = vmatpush1.bf16.msra.mxu0 0
    %1768 = vmatprep.subr.bf16.mxu0 0
    %1769 = vmatpush1.bf16.msra.mxu0 0
    %1770 = vmatprep.subr.bf16.mxu0 0
    %1771 = vmatpush1.bf16.msra.mxu0 0
    %1772 = vmatprep.subr.bf16.mxu0 0
    %1773 = vmatpush1.bf16.msra.mxu0 0
    %1774 = vmatprep.subr.bf16.mxu0 0
    %1775 = vmatpush1.bf16.msra.mxu0 0
    %1776 = vmatprep.subr.bf16.mxu0 0
    %1777 = vmatpush1.bf16.msra.mxu0 0
    %1778 = vmatprep.subr.bf16.mxu0 0
    %1779 = vmatpush1.bf16.msra.mxu0 0
    %1780 = vmatprep.subr.bf16.mxu0 0
    %1781 = vmatpush1.bf16.msra.mxu0 0
    %1782 = vmatprep.subr.bf16.mxu0 0
    %1783 = vmatpush1.bf16.msra.mxu0 0
    %1784 = vmatprep.subr.bf16.mxu0 0
    %1785 = vmatpush1.bf16.msra.mxu0 0
    %1786 = vmatprep.subr.bf16.mxu0 0
    %1787 = vmatpush1.bf16.msra.mxu0 0
    %1788 = vmatprep.subr.bf16.mxu0 0
    %1789 = vmatpush1.bf16.msra.mxu0 0
    %1790 = vmatprep.subr.bf16.mxu0 0
    %1791 = vmatpush1.bf16.msra.mxu0 0
    %1792 = vmatprep.subr.bf16.mxu0 0
    %1793 = vmatpush1.bf16.msra.mxu0 0
    %1794 = vmatprep.mubr.bf16.mxu0 0
    %1795 = vmatmul.mubr.bf16.gmra.mrb[0].mxu0 %v1751
    %v1796 = vpop.f32.mrb[0].mxu0
    %v1797 = vadd.f32 %v1714, %v1796
    %v1798 = vpop.f32.mrb[0].mxu0
    %v1799 = vpop.f32.mrb[0].mxu0
    %v1800 = vadd.f32 %v1717, %v1799
    %v1801 = vpop.f32.mrb[0].mxu0
    %1802 = vmatprep.mubr.bf16.mxu0 0
    %1803 = vmatmul.mubr.bf16.gmra.mrb[0].mxu0 %v1754
    %v1804 = vpop.f32.mrb[0].mxu0
    %v1805 = vadd.f32 %v1722, %v1804
    %v1806 = vpop.f32.mrb[0].mxu0
    %v1807 = vpop.f32.mrb[0].mxu0
    %v1808 = vadd.f32 %v1725, %v1807
    %v1809 = vpop.f32.mrb[0].mxu0
    %1810 = vmatprep.mubr.bf16.mxu0 0
    %1811 = vmatmul.mubr.bf16.gmra.mrb[0].mxu0 %v1757
    %v1812 = vpop.f32.mrb[0].mxu0
    %v1813 = vadd.f32 %v1730, %v1812
    %v1814 = vpop.f32.mrb[0].mxu0
    %v1815 = vpop.f32.mrb[0].mxu0
    %v1816 = vadd.f32 %v1733, %v1815
    %v1817 = vpop.f32.mrb[0].mxu0
    %1818 = vmatprep.mubr.bf16.mxu0 0
    %1819 = vmatmul.mubr.bf16.gmra.mrb[0].mxu0 %v1760
    %v1820 = vpop.f32.mrb[0].mxu0
    %v1821 = vadd.f32 %v1738, %v1820
    %v1822 = vpop.f32.mrb[0].mxu0
    %v1823 = vpop.f32.mrb[0].mxu0
    %v1824 = vadd.f32 %v1741, %v1823
    %v1825 = vpop.f32.mrb[0].mxu0
    %1826 = vdwg.mxu0
    %v1827 = vtanh.pop %v1797
    %v1828 = vtanh.pop %v1800
    %v1829 = vtanh.pop %v1805
    %v1830 = vtanh.pop %v1808
    %v1831 = vtanh.pop %v1813
    %v1832 = vtanh.pop %v1816
    %v1833 = vtanh.pop %v1821
    %v1834 = vtanh.pop %v1824
    %v1835 = vxor.u32 %v1797, 2147483648
    %v1836 = vxor.u32 %v1800, 2147483648
    %v1837 = vxor.u32 %v1805, 2147483648
    %v1838 = vxor.u32 %v1808, 2147483648
    %v1839 = vxor.u32 %v1813, 2147483648
    %v1840 = vxor.u32 %v1816, 2147483648
    %v1841 = vxor.u32 %v1821, 2147483648
    %v1842 = vxor.u32 %v1824, 2147483648
    %v1843 = vmul.f32 %v1835, 1.442695
    %v1844 = vpow.pop %v1843
    %v1845 = vmul.f32 %v1836, 1.442695
    %v1846 = vpow.pop %v1845
    %v1847 = vmul.f32 %v1837, 1.442695
    %v1848 = vpow.pop %v1847
    %v1849 = vmul.f32 %v1838, 1.442695
    %v1850 = vpow.pop %v1849
    %v1851 = vmul.f32 %v1839, 1.442695
    %v1852 = vpow.pop %v1851
    %v1853 = vmul.f32 %v1840, 1.442695
    %v1854 = vpow.pop %v1853
    %v1855 = vmul.f32 %v1841, 1.442695
    %v1856 = vpow.pop %v1855
    %v1857 = vmul.f32 %v1842, 1.442695
    %v1858 = vpow.pop %v1857
    %v1859 = vadd.f32 %v1844, 1.0
    %v1860 = vadd.f32 %v1846, 1.0
    %v1861 = vadd.f32 %v1848, 1.0
    %v1862 = vadd.f32 %v1850, 1.0
    %v1863 = vadd.f32 %v1852, 1.0
    %v1864 = vadd.f32 %v1854, 1.0
    %v1865 = vadd.f32 %v1856, 1.0
    %v1866 = vadd.f32 %v1858, 1.0
    %v1867 = vrcp.pop %v1859
    %v1868 = vmul.f32 1.0, %v1867
    %v1869 = vrcp.pop %v1860
    %v1870 = vmul.f32 1.0, %v1869
    %v1871 = vrcp.pop %v1861
    %v1872 = vmul.f32 1.0, %v1871
    %v1873 = vrcp.pop %v1862
    %v1874 = vmul.f32 1.0, %v1873
    %v1875 = vrcp.pop %v1863
    %v1876 = vmul.f32 1.0, %v1875
    %v1877 = vrcp.pop %v1864
    %v1878 = vmul.f32 1.0, %v1877
    %v1879 = vrcp.pop %v1865
    %v1880 = vmul.f32 1.0, %v1879
    %v1881 = vrcp.pop %v1866
    %v1882 = vmul.f32 1.0, %v1881
    %v1883 = vmul.f32 %v1827, %v1868
    %v1884 = vmul.f32 %v1828, %v1870
    %v1885 = vmul.f32 %v1829, %v1872
    %v1886 = vmul.f32 %v1830, %v1874
    %v1887 = vmul.f32 %v1831, %v1876
    %v1888 = vmul.f32 %v1832, %v1878
    %v1889 = vmul.f32 %v1833, %v1880
    %v1890 = vmul.f32 %v1834, %v1882
    %s1891 = scalar_lea.vmem %s5, 24
    %v1892 = vld [vmem:[%s1891] sm:$0xf]
    %v1893 = vld [vmem:[%s1891 + $0x4] sm:$0xf]
    %v1894 = vpack.c.bf16 %v1884, %v1883
    %v1895 = vpack.c.bf16 %v1886, %v1885
    %v1896 = vpack.c.bf16 %v1888, %v1887
    %v1897 = vpack.c.bf16 %v1890, %v1889
    %s1898 = scalar_lea.vmem %s6, 3
    %v1899 = vld [vmem:[%s1898] sm:$0x1]
    %v1901 = vlaneseq
    %v1902 = vshrl.u32 %v1901, 7
    %v1903 = vsub.s32 0, %v1902
    %v1904 = vrot.slane %v1899, %v1903
    %v1908 = vunpack.c.l.b16 %v1892
    %v1909 = vunpack.c.l.b16 %v1893
    %v1910 = vpack.c.b16 %v1909, %v1908
    %v1913 = vsel %vm251, %v1894, 0
    %v1916 = vsel %vm251, %v1895, 0
    %v1919 = vsel %vm251, %v1896, 0
    %v1922 = vsel %vm251, %v1897, 0
    %1924 = vmatprep.subr.bf16.mxu0 0
    %1925 = vmatpush1.bf16.msra.mxu0 %v1910
    %1926 = vmatprep.subr.bf16.mxu0 0
    %1927 = vmatpush1.bf16.msra.mxu0 0
    %1928 = vmatprep.subr.bf16.mxu0 0
    %1929 = vmatpush1.bf16.msra.mxu0 0
    %1930 = vmatprep.subr.bf16.mxu0 0
    %1931 = vmatpush1.bf16.msra.mxu0 0
    %1932 = vmatprep.subr.bf16.mxu0 0
    %1933 = vmatpush1.bf16.msra.mxu0 0
    %1934 = vmatprep.subr.bf16.mxu0 0
    %1935 = vmatpush1.bf16.msra.mxu0 0
    %1936 = vmatprep.subr.bf16.mxu0 0
    %1937 = vmatpush1.bf16.msra.mxu0 0
    %1938 = vmatprep.subr.bf16.mxu0 0
    %1939 = vmatpush1.bf16.msra.mxu0 0
    %1940 = vmatprep.subr.bf16.mxu0 0
    %1941 = vmatpush1.bf16.msra.mxu0 0
    %1942 = vmatprep.subr.bf16.mxu0 0
    %1943 = vmatpush1.bf16.msra.mxu0 0
    %1944 = vmatprep.subr.bf16.mxu0 0
    %1945 = vmatpush1.bf16.msra.mxu0 0
    %1946 = vmatprep.subr.bf16.mxu0 0
    %1947 = vmatpush1.bf16.msra.mxu0 0
    %1948 = vmatprep.subr.bf16.mxu0 0
    %1949 = vmatpush1.bf16.msra.mxu0 0
    %1950 = vmatprep.subr.bf16.mxu0 0
    %1951 = vmatpush1.bf16.msra.mxu0 0
    %1952 = vmatprep.subr.bf16.mxu0 0
    %1953 = vmatpush1.bf16.msra.mxu0 0
    %1954 = vmatprep.subr.bf16.mxu0 0
    %1955 = vmatpush1.bf16.msra.mxu0 0
    %1956 = vmatprep.mubr.bf16.mxu0 0
    %1957 = vmatmul.mubr.bf16.gmra.mrb[0].mxu0 %v1913
    %v1958 = vpop.f32.mrb[0].mxu0
    %v1959 = vadd.f32 %v1904, %v1958
    %v1960 = vpop.f32.mrb[0].mxu0
    %v1961 = vpop.f32.mrb[0].mxu0
    %v1962 = vadd.f32 %v1904, %v1961
    %v1963 = vpop.f32.mrb[0].mxu0
    %1964 = vmatprep.mubr.bf16.mxu0 0
    %1965 = vmatmul.mubr.bf16.gmra.mrb[0].mxu0 %v1916
    %v1966 = vpop.f32.mrb[0].mxu0
    %v1967 = vadd.f32 %v1904, %v1966
    %v1968 = vpop.f32.mrb[0].mxu0
    %v1969 = vpop.f32.mrb[0].mxu0
    %v1970 = vadd.f32 %v1904, %v1969
    %v1971 = vpop.f32.mrb[0].mxu0
    %1972 = vmatprep.mubr.bf16.mxu0 0
    %1973 = vmatmul.mubr.bf16.gmra.mrb[0].mxu0 %v1919
    %v1974 = vpop.f32.mrb[0].mxu0
    %v1975 = vadd.f32 %v1904, %v1974
    %v1976 = vpop.f32.mrb[0].mxu0
    %v1977 = vpop.f32.mrb[0].mxu0
    %v1978 = vadd.f32 %v1904, %v1977
    %v1979 = vpop.f32.mrb[0].mxu0
    %1980 = vmatprep.mubr.bf16.mxu0 0
    %1981 = vmatmul.mubr.bf16.gmra.mrb[0].mxu0 %v1922
    %v1982 = vpop.f32.mrb[0].mxu0
    %v1983 = vadd.f32 %v1904, %v1982
    %v1984 = vpop.f32.mrb[0].mxu0
    %v1985 = vpop.f32.mrb[0].mxu0
    %v1986 = vadd.f32 %v1904, %v1985
    %v1987 = vpop.f32.mrb[0].mxu0
    %1988 = vdwg.mxu0
    %v1989 = vadd.f32 %v1959, %v1631
    %v1990 = vadd.f32 %v1962, %v1632
    %v1991 = vadd.f32 %v1967, %v1633
    %v1992 = vadd.f32 %v1970, %v1634
    %v1993 = vadd.f32 %v1975, %v1635
    %v1994 = vadd.f32 %v1978, %v1636
    %v1995 = vadd.f32 %v1983, %v1637
    %v1996 = vadd.f32 %v1986, %v1638
    %1997 = vst.msk [vmem:[#allocation3 + $0x8] sm:$0xff] %vm251, %v1989
    %1998 = vst.msk [vmem:[#allocation3 + $0x10] sm:$0xff] %vm251, %v1990
    %1999 = vst.msk [vmem:[#allocation3 + $0x18] sm:$0xff] %vm251, %v1991
    %2000 = vst.msk [vmem:[#allocation3 + $0x20] sm:$0xff] %vm251, %v1992
    %2001 = vst.msk [vmem:[#allocation3 + $0x28] sm:$0xff] %vm251, %v1993
    %2002 = vst.msk [vmem:[#allocation3 + $0x30] sm:$0xff] %vm251, %v1994
    %2003 = vst.msk [vmem:[#allocation3 + $0x38] sm:$0xff] %vm251, %v1995
    %2004 = vst.msk [vmem:[#allocation3 + $0x40] sm:$0xff] %vm251, %v1996
    %v2005 = vld [vmem:[#allocation4] sm:$0xff]
    %v2006 = vld [vmem:[#allocation4 + $0x8] sm:$0xff]
    %v2007 = vld [vmem:[#allocation4 + $0x10] sm:$0xff]
    %v2008 = vld [vmem:[#allocation4 + $0x18] sm:$0xff]
    %v2009 = vld [vmem:[#allocation4 + $0x20] sm:$0xff]
    %v2010 = vld [vmem:[#allocation4 + $0x28] sm:$0xff]
    %v2011 = vld [vmem:[#allocation4 + $0x30] sm:$0xff]
    %v2012 = vld [vmem:[#allocation4 + $0x38] sm:$0xff]
    %v2013 = vadd.f32 %v2005, %v1959
    %v2014 = vadd.f32 %v2006, %v1962
    %v2015 = vadd.f32 %v2007, %v1967
    %v2016 = vadd.f32 %v2008, %v1970
    %v2017 = vadd.f32 %v2009, %v1975
    %v2018 = vadd.f32 %v2010, %v1978
    %v2019 = vadd.f32 %v2011, %v1983
    %v2020 = vadd.f32 %v2012, %v1986
    %2021 = vst.msk [vmem:[#allocation4] sm:$0xff] %vm432, %v2013
    %2022 = vst.msk [vmem:[#allocation4 + $0x8] sm:$0xff] %vm432, %v2014
    %2023 = vst.msk [vmem:[#allocation4 + $0x10] sm:$0xff] %vm432, %v2015
    %2024 = vst.msk [vmem:[#allocation4 + $0x18] sm:$0xff] %vm432, %v2016
    %2025 = vst.msk [vmem:[#allocation4 + $0x20] sm:$0xff] %vm432, %v2017
    %2026 = vst.msk [vmem:[#allocation4 + $0x28] sm:$0xff] %vm432, %v2018
    %2027 = vst.msk [vmem:[#allocation4 + $0x30] sm:$0xff] %vm432, %v2019
    %2028 = vst.msk [vmem:[#allocation4 + $0x38] sm:$0xff] %vm432, %v2020
    %v2029 = vld [vmem:[#allocation3 + $0x8] sm:$0xff]
    %v2030 = vld [vmem:[#allocation3 + $0x10] sm:$0xff]
    %v2031 = vld [vmem:[#allocation3 + $0x18] sm:$0xff]
    %v2032 = vld [vmem:[#allocation3 + $0x20] sm:$0xff]
    %v2033 = vld [vmem:[#allocation3 + $0x28] sm:$0xff]
    %v2034 = vld [vmem:[#allocation3 + $0x30] sm:$0xff]
    %v2035 = vld [vmem:[#allocation3 + $0x38] sm:$0xff]
    %v2036 = vld [vmem:[#allocation3 + $0x40] sm:$0xff]
    %v2037 = vld [vmem:[#allocation3 + $0x6] sm:$0xff]
    %v2038 = vld [vmem:[#allocation3 + $0xe] sm:$0xff]
    %v2039 = vld [vmem:[#allocation3 + $0x16] sm:$0xff]
    %v2040 = vld [vmem:[#allocation3 + $0x1e] sm:$0xff]
    %v2041 = vld [vmem:[#allocation3 + $0x26] sm:$0xff]
    %v2042 = vld [vmem:[#allocation3 + $0x2e] sm:$0xff]
    %v2043 = vld [vmem:[#allocation3 + $0x36] sm:$0xff]
    %v2044 = vld [vmem:[#allocation3 + $0x3e] sm:$0xff]
    %s2045 = scalar_lea.vmem %s3, 32
    %v2046 = vld [vmem:[%s2045] sm:$0xf]
    %v2047 = vld [vmem:[%s2045 + $0x4] sm:$0xf]
    %v2048 = vpack.c.bf16 %v2038, %v2037
    %v2049 = vpack.c.bf16 %v2040, %v2039
    %v2050 = vpack.c.bf16 %v2042, %v2041
    %v2051 = vpack.c.bf16 %v2044, %v2043
    %s2052 = scalar_lea.vmem [#allocation9], 32
    %v2053 = vld [vmem:[%s2052] sm:$0xf]
    %v2054 = vld [vmem:[%s2052 + $0x4] sm:$0xf]
    %v2055 = vpack.c.bf16 %v2030, %v2029
    %v2056 = vpack.c.bf16 %v2032, %v2031
    %v2057 = vpack.c.bf16 %v2034, %v2033
    %v2058 = vpack.c.bf16 %v2036, %v2035
    %v2061 = vunpack.c.l.b16 %v2053
    %v2062 = vunpack.c.l.b16 %v2054
    %v2063 = vpack.c.b16 %v2062, %v2061
    %v2066 = vsel %vm251, %v2055, 0
    %v2069 = vsel %vm251, %v2056, 0
    %v2072 = vsel %vm251, %v2057, 0
    %v2075 = vsel %vm251, %v2058, 0
    %2077 = vmatprep.subr.bf16.mxu0 0
    %2078 = vmatpush1.bf16.msra.mxu0 %v2063
    %2079 = vmatprep.subr.bf16.mxu0 0
    %2080 = vmatpush1.bf16.msra.mxu0 0
    %2081 = vmatprep.subr.bf16.mxu0 0
    %2082 = vmatpush1.bf16.msra.mxu0 0
    %2083 = vmatprep.subr.bf16.mxu0 0
    %2084 = vmatpush1.bf16.msra.mxu0 0
    %2085 = vmatprep.subr.bf16.mxu0 0
    %2086 = vmatpush1.bf16.msra.mxu0 0
    %2087 = vmatprep.subr.bf16.mxu0 0
    %2088 = vmatpush1.bf16.msra.mxu0 0
    %2089 = vmatprep.subr.bf16.mxu0 0
    %2090 = vmatpush1.bf16.msra.mxu0 0
    %2091 = vmatprep.subr.bf16.mxu0 0
    %2092 = vmatpush1.bf16.msra.mxu0 0
    %2093 = vmatprep.subr.bf16.mxu0 0
    %2094 = vmatpush1.bf16.msra.mxu0 0
    %2095 = vmatprep.subr.bf16.mxu0 0
    %2096 = vmatpush1.bf16.msra.mxu0 0
    %2097 = vmatprep.subr.bf16.mxu0 0
    %2098 = vmatpush1.bf16.msra.mxu0 0
    %2099 = vmatprep.subr.bf16.mxu0 0
    %2100 = vmatpush1.bf16.msra.mxu0 0
    %2101 = vmatprep.subr.bf16.mxu0 0
    %2102 = vmatpush1.bf16.msra.mxu0 0
    %2103 = vmatprep.subr.bf16.mxu0 0
    %2104 = vmatpush1.bf16.msra.mxu0 0
    %2105 = vmatprep.subr.bf16.mxu0 0
    %2106 = vmatpush1.bf16.msra.mxu0 0
    %2107 = vmatprep.subr.bf16.mxu0 0
    %2108 = vmatpush1.bf16.msra.mxu0 0
    %2109 = vmatprep.mubr.bf16.mxu0 0
    %2110 = vmatmul.mubr.bf16.gmra.mrb[0].mxu0 %v2066
    %v2111 = vpop.f32.mrb[0].mxu0
    %v2112 = vadd.f32 0.0, %v2111
    %v2113 = vpop.f32.mrb[0].mxu0
    %v2114 = vpop.f32.mrb[0].mxu0
    %v2115 = vadd.f32 0.0, %v2114
    %v2116 = vpop.f32.mrb[0].mxu0
    %2117 = vmatprep.mubr.bf16.mxu0 0
    %2118 = vmatmul.mubr.bf16.gmra.mrb[0].mxu0 %v2069
    %v2119 = vpop.f32.mrb[0].mxu0
    %v2120 = vadd.f32 0.0, %v2119
    %v2121 = vpop.f32.mrb[0].mxu0
    %v2122 = vpop.f32.mrb[0].mxu0
    %v2123 = vadd.f32 0.0, %v2122
    %v2124 = vpop.f32.mrb[0].mxu0
    %2125 = vmatprep.mubr.bf16.mxu0 0
    %2126 = vmatmul.mubr.bf16.gmra.mrb[0].mxu0 %v2072
    %v2127 = vpop.f32.mrb[0].mxu0
    %v2128 = vadd.f32 0.0, %v2127
    %v2129 = vpop.f32.mrb[0].mxu0
    %v2130 = vpop.f32.mrb[0].mxu0
    %v2131 = vadd.f32 0.0, %v2130
    %v2132 = vpop.f32.mrb[0].mxu0
    %2133 = vmatprep.mubr.bf16.mxu0 0
    %2134 = vmatmul.mubr.bf16.gmra.mrb[0].mxu0 %v2075
    %v2135 = vpop.f32.mrb[0].mxu0
    %v2136 = vadd.f32 0.0, %v2135
    %v2137 = vpop.f32.mrb[0].mxu0
    %v2138 = vpop.f32.mrb[0].mxu0
    %v2139 = vadd.f32 0.0, %v2138
    %v2140 = vpop.f32.mrb[0].mxu0
    %2141 = vdwg.mxu0
    %v2144 = vunpack.c.l.b16 %v2046
    %v2145 = vunpack.c.l.b16 %v2047
    %v2146 = vpack.c.b16 %v2145, %v2144
    %v2149 = vsel %vm251, %v2048, 0
    %v2152 = vsel %vm251, %v2049, 0
    %v2155 = vsel %vm251, %v2050, 0
    %v2158 = vsel %vm251, %v2051, 0
    %2160 = vmatprep.subr.bf16.mxu0 0
    %2161 = vmatpush1.bf16.msra.mxu0 %v2146
    %2162 = vmatprep.subr.bf16.mxu0 0
    %2163 = vmatpush1.bf16.msra.mxu0 0
    %2164 = vmatprep.subr.bf16.mxu0 0
    %2165 = vmatpush1.bf16.msra.mxu0 0
    %2166 = vmatprep.subr.bf16.mxu0 0
    %2167 = vmatpush1.bf16.msra.mxu0 0
    %2168 = vmatprep.subr.bf16.mxu0 0
    %2169 = vmatpush1.bf16.msra.mxu0 0
    %2170 = vmatprep.subr.bf16.mxu0 0
    %2171 = vmatpush1.bf16.msra.mxu0 0
    %2172 = vmatprep.subr.bf16.mxu0 0
    %2173 = vmatpush1.bf16.msra.mxu0 0
    %2174 = vmatprep.subr.bf16.mxu0 0
    %2175 = vmatpush1.bf16.msra.mxu0 0
    %2176 = vmatprep.subr.bf16.mxu0 0
    %2177 = vmatpush1.bf16.msra.mxu0 0
    %2178 = vmatprep.subr.bf16.mxu0 0
    %2179 = vmatpush1.bf16.msra.mxu0 0
    %2180 = vmatprep.subr.bf16.mxu0 0
    %2181 = vmatpush1.bf16.msra.mxu0 0
    %2182 = vmatprep.subr.bf16.mxu0 0
    %2183 = vmatpush1.bf16.msra.mxu0 0
    %2184 = vmatprep.subr.bf16.mxu0 0
    %2185 = vmatpush1.bf16.msra.mxu0 0
    %2186 = vmatprep.subr.bf16.mxu0 0
    %2187 = vmatpush1.bf16.msra.mxu0 0
    %2188 = vmatprep.subr.bf16.mxu0 0
    %2189 = vmatpush1.bf16.msra.mxu0 0
    %2190 = vmatprep.subr.bf16.mxu0 0
    %2191 = vmatpush1.bf16.msra.mxu0 0
    %2192 = vmatprep.mubr.bf16.mxu0 0
    %2193 = vmatmul.mubr.bf16.gmra.mrb[0].mxu0 %v2149
    %v2194 = vpop.f32.mrb[0].mxu0
    %v2195 = vadd.f32 %v2112, %v2194
    %v2196 = vpop.f32.mrb[0].mxu0
    %v2197 = vpop.f32.mrb[0].mxu0
    %v2198 = vadd.f32 %v2115, %v2197
    %v2199 = vpop.f32.mrb[0].mxu0
    %2200 = vmatprep.mubr.bf16.mxu0 0
    %2201 = vmatmul.mubr.bf16.gmra.mrb[0].mxu0 %v2152
    %v2202 = vpop.f32.mrb[0].mxu0
    %v2203 = vadd.f32 %v2120, %v2202
    %v2204 = vpop.f32.mrb[0].mxu0
    %v2205 = vpop.f32.mrb[0].mxu0
    %v2206 = vadd.f32 %v2123, %v2205
    %v2207 = vpop.f32.mrb[0].mxu0
    %2208 = vmatprep.mubr.bf16.mxu0 0
    %2209 = vmatmul.mubr.bf16.gmra.mrb[0].mxu0 %v2155
    %v2210 = vpop.f32.mrb[0].mxu0
    %v2211 = vadd.f32 %v2128, %v2210
    %v2212 = vpop.f32.mrb[0].mxu0
    %v2213 = vpop.f32.mrb[0].mxu0
    %v2214 = vadd.f32 %v2131, %v2213
    %v2215 = vpop.f32.mrb[0].mxu0
    %2216 = vmatprep.mubr.bf16.mxu0 0
    %2217 = vmatmul.mubr.bf16.gmra.mrb[0].mxu0 %v2158
    %v2218 = vpop.f32.mrb[0].mxu0
    %v2219 = vadd.f32 %v2136, %v2218
    %v2220 = vpop.f32.mrb[0].mxu0
    %v2221 = vpop.f32.mrb[0].mxu0
    %v2222 = vadd.f32 %v2139, %v2221
    %v2223 = vpop.f32.mrb[0].mxu0
    %2224 = vdwg.mxu0
    %v2225 = vtanh.pop %v2195
    %v2226 = vtanh.pop %v2198
    %v2227 = vtanh.pop %v2203
    %v2228 = vtanh.pop %v2206
    %v2229 = vtanh.pop %v2211
    %v2230 = vtanh.pop %v2214
    %v2231 = vtanh.pop %v2219
    %v2232 = vtanh.pop %v2222
    %v2233 = vxor.u32 %v2195, 2147483648
    %v2234 = vxor.u32 %v2198, 2147483648
    %v2235 = vxor.u32 %v2203, 2147483648
    %v2236 = vxor.u32 %v2206, 2147483648
    %v2237 = vxor.u32 %v2211, 2147483648
    %v2238 = vxor.u32 %v2214, 2147483648
    %v2239 = vxor.u32 %v2219, 2147483648
    %v2240 = vxor.u32 %v2222, 2147483648
    %v2241 = vmul.f32 %v2233, 1.442695
    %v2242 = vpow.pop %v2241
    %v2243 = vmul.f32 %v2234, 1.442695
    %v2244 = vpow.pop %v2243
    %v2245 = vmul.f32 %v2235, 1.442695
    %v2246 = vpow.pop %v2245
    %v2247 = vmul.f32 %v2236, 1.442695
    %v2248 = vpow.pop %v2247
    %v2249 = vmul.f32 %v2237, 1.442695
    %v2250 = vpow.pop %v2249
    %v2251 = vmul.f32 %v2238, 1.442695
    %v2252 = vpow.pop %v2251
    %v2253 = vmul.f32 %v2239, 1.442695
    %v2254 = vpow.pop %v2253
    %v2255 = vmul.f32 %v2240, 1.442695
    %v2256 = vpow.pop %v2255
    %v2257 = vadd.f32 %v2242, 1.0
    %v2258 = vadd.f32 %v2244, 1.0
    %v2259 = vadd.f32 %v2246, 1.0
    %v2260 = vadd.f32 %v2248, 1.0
    %v2261 = vadd.f32 %v2250, 1.0
    %v2262 = vadd.f32 %v2252, 1.0
    %v2263 = vadd.f32 %v2254, 1.0
    %v2264 = vadd.f32 %v2256, 1.0
    %v2265 = vrcp.pop %v2257
    %v2266 = vmul.f32 1.0, %v2265
    %v2267 = vrcp.pop %v2258
    %v2268 = vmul.f32 1.0, %v2267
    %v2269 = vrcp.pop %v2259
    %v2270 = vmul.f32 1.0, %v2269
    %v2271 = vrcp.pop %v2260
    %v2272 = vmul.f32 1.0, %v2271
    %v2273 = vrcp.pop %v2261
    %v2274 = vmul.f32 1.0, %v2273
    %v2275 = vrcp.pop %v2262
    %v2276 = vmul.f32 1.0, %v2275
    %v2277 = vrcp.pop %v2263
    %v2278 = vmul.f32 1.0, %v2277
    %v2279 = vrcp.pop %v2264
    %v2280 = vmul.f32 1.0, %v2279
    %v2281 = vmul.f32 %v2225, %v2266
    %v2282 = vmul.f32 %v2226, %v2268
    %v2283 = vmul.f32 %v2227, %v2270
    %v2284 = vmul.f32 %v2228, %v2272
    %v2285 = vmul.f32 %v2229, %v2274
    %v2286 = vmul.f32 %v2230, %v2276
    %v2287 = vmul.f32 %v2231, %v2278
    %v2288 = vmul.f32 %v2232, %v2280
    %s2289 = scalar_lea.vmem %s5, 32
    %v2290 = vld [vmem:[%s2289] sm:$0xf]
    %v2291 = vld [vmem:[%s2289 + $0x4] sm:$0xf]
    %v2292 = vpack.c.bf16 %v2282, %v2281
    %v2293 = vpack.c.bf16 %v2284, %v2283
    %v2294 = vpack.c.bf16 %v2286, %v2285
    %v2295 = vpack.c.bf16 %v2288, %v2287
    %s2296 = scalar_lea.vmem %s6, 4
    %v2297 = vld [vmem:[%s2296] sm:$0x1]
    %v2299 = vlaneseq
    %v2300 = vshrl.u32 %v2299, 7
    %v2301 = vsub.s32 0, %v2300
    %v2302 = vrot.slane %v2297, %v2301
    %v2306 = vunpack.c.l.b16 %v2290
    %v2307 = vunpack.c.l.b16 %v2291
    %v2308 = vpack.c.b16 %v2307, %v2306
    %v2311 = vsel %vm251, %v2292, 0
    %v2314 = vsel %vm251, %v2293, 0
    %v2317 = vsel %vm251, %v2294, 0
    %v2320 = vsel %vm251, %v2295, 0
    %2322 = vmatprep.subr.bf16.mxu0 0
    %2323 = vmatpush1.bf16.msra.mxu0 %v2308
    %2324 = vmatprep.subr.bf16.mxu0 0
    %2325 = vmatpush1.bf16.msra.mxu0 0
    %2326 = vmatprep.subr.bf16.mxu0 0
    %2327 = vmatpush1.bf16.msra.mxu0 0
    %2328 = vmatprep.subr.bf16.mxu0 0
    %2329 = vmatpush1.bf16.msra.mxu0 0
    %2330 = vmatprep.subr.bf16.mxu0 0
    %2331 = vmatpush1.bf16.msra.mxu0 0
    %2332 = vmatprep.subr.bf16.mxu0 0
    %2333 = vmatpush1.bf16.msra.mxu0 0
    %2334 = vmatprep.subr.bf16.mxu0 0
    %2335 = vmatpush1.bf16.msra.mxu0 0
    %2336 = vmatprep.subr.bf16.mxu0 0
    %2337 = vmatpush1.bf16.msra.mxu0 0
    %2338 = vmatprep.subr.bf16.mxu0 0
    %2339 = vmatpush1.bf16.msra.mxu0 0
    %2340 = vmatprep.subr.bf16.mxu0 0
    %2341 = vmatpush1.bf16.msra.mxu0 0
    %2342 = vmatprep.subr.bf16.mxu0 0
    %2343 = vmatpush1.bf16.msra.mxu0 0
    %2344 = vmatprep.subr.bf16.mxu0 0
    %2345 = vmatpush1.bf16.msra.mxu0 0
    %2346 = vmatprep.subr.bf16.mxu0 0
    %2347 = vmatpush1.bf16.msra.mxu0 0
    %2348 = vmatprep.subr.bf16.mxu0 0
    %2349 = vmatpush1.bf16.msra.mxu0 0
    %2350 = vmatprep.subr.bf16.mxu0 0
    %2351 = vmatpush1.bf16.msra.mxu0 0
    %2352 = vmatprep.subr.bf16.mxu0 0
    %2353 = vmatpush1.bf16.msra.mxu0 0
    %2354 = vmatprep.mubr.bf16.mxu0 0
    %2355 = vmatmul.mubr.bf16.gmra.mrb[0].mxu0 %v2311
    %v2356 = vpop.f32.mrb[0].mxu0
    %v2357 = vadd.f32 %v2302, %v2356
    %v2358 = vpop.f32.mrb[0].mxu0
    %v2359 = vpop.f32.mrb[0].mxu0
    %v2360 = vadd.f32 %v2302, %v2359
    %v2361 = vpop.f32.mrb[0].mxu0
    %2362 = vmatprep.mubr.bf16.mxu0 0
    %2363 = vmatmul.mubr.bf16.gmra.mrb[0].mxu0 %v2314
    %v2364 = vpop.f32.mrb[0].mxu0
    %v2365 = vadd.f32 %v2302, %v2364
    %v2366 = vpop.f32.mrb[0].mxu0
    %v2367 = vpop.f32.mrb[0].mxu0
    %v2368 = vadd.f32 %v2302, %v2367
    %v2369 = vpop.f32.mrb[0].mxu0
    %2370 = vmatprep.mubr.bf16.mxu0 0
    %2371 = vmatmul.mubr.bf16.gmra.mrb[0].mxu0 %v2317
    %v2372 = vpop.f32.mrb[0].mxu0
    %v2373 = vadd.f32 %v2302, %v2372
    %v2374 = vpop.f32.mrb[0].mxu0
    %v2375 = vpop.f32.mrb[0].mxu0
    %v2376 = vadd.f32 %v2302, %v2375
    %v2377 = vpop.f32.mrb[0].mxu0
    %2378 = vmatprep.mubr.bf16.mxu0 0
    %2379 = vmatmul.mubr.bf16.gmra.mrb[0].mxu0 %v2320
    %v2380 = vpop.f32.mrb[0].mxu0
    %v2381 = vadd.f32 %v2302, %v2380
    %v2382 = vpop.f32.mrb[0].mxu0
    %v2383 = vpop.f32.mrb[0].mxu0
    %v2384 = vadd.f32 %v2302, %v2383
    %v2385 = vpop.f32.mrb[0].mxu0
    %2386 = vdwg.mxu0
    %v2387 = vadd.f32 %v2357, %v2029
    %v2388 = vadd.f32 %v2360, %v2030
    %v2389 = vadd.f32 %v2365, %v2031
    %v2390 = vadd.f32 %v2368, %v2032
    %v2391 = vadd.f32 %v2373, %v2033
    %v2392 = vadd.f32 %v2376, %v2034
    %v2393 = vadd.f32 %v2381, %v2035
    %v2394 = vadd.f32 %v2384, %v2036
    %2395 = vst.msk [vmem:[#allocation3 + $0x8] sm:$0xff] %vm251, %v2387
    %2396 = vst.msk [vmem:[#allocation3 + $0x10] sm:$0xff] %vm251, %v2388
    %2397 = vst.msk [vmem:[#allocation3 + $0x18] sm:$0xff] %vm251, %v2389
    %2398 = vst.msk [vmem:[#allocation3 + $0x20] sm:$0xff] %vm251, %v2390
    %2399 = vst.msk [vmem:[#allocation3 + $0x28] sm:$0xff] %vm251, %v2391
    %2400 = vst.msk [vmem:[#allocation3 + $0x30] sm:$0xff] %vm251, %v2392
    %2401 = vst.msk [vmem:[#allocation3 + $0x38] sm:$0xff] %vm251, %v2393
    %2402 = vst.msk [vmem:[#allocation3 + $0x40] sm:$0xff] %vm251, %v2394
    %v2403 = vld [vmem:[#allocation4] sm:$0xff]
    %v2404 = vld [vmem:[#allocation4 + $0x8] sm:$0xff]
    %v2405 = vld [vmem:[#allocation4 + $0x10] sm:$0xff]
    %v2406 = vld [vmem:[#allocation4 + $0x18] sm:$0xff]
    %v2407 = vld [vmem:[#allocation4 + $0x20] sm:$0xff]
    %v2408 = vld [vmem:[#allocation4 + $0x28] sm:$0xff]
    %v2409 = vld [vmem:[#allocation4 + $0x30] sm:$0xff]
    %v2410 = vld [vmem:[#allocation4 + $0x38] sm:$0xff]
    %v2411 = vadd.f32 %v2403, %v2357
    %v2412 = vadd.f32 %v2404, %v2360
    %v2413 = vadd.f32 %v2405, %v2365
    %v2414 = vadd.f32 %v2406, %v2368
    %v2415 = vadd.f32 %v2407, %v2373
    %v2416 = vadd.f32 %v2408, %v2376
    %v2417 = vadd.f32 %v2409, %v2381
    %v2418 = vadd.f32 %v2410, %v2384
    %2419 = vst.msk [vmem:[#allocation4] sm:$0xff] %vm432, %v2411
    %2420 = vst.msk [vmem:[#allocation4 + $0x8] sm:$0xff] %vm432, %v2412
    %2421 = vst.msk [vmem:[#allocation4 + $0x10] sm:$0xff] %vm432, %v2413
    %2422 = vst.msk [vmem:[#allocation4 + $0x18] sm:$0xff] %vm432, %v2414
    %2423 = vst.msk [vmem:[#allocation4 + $0x20] sm:$0xff] %vm432, %v2415
    %2424 = vst.msk [vmem:[#allocation4 + $0x28] sm:$0xff] %vm432, %v2416
    %2425 = vst.msk [vmem:[#allocation4 + $0x30] sm:$0xff] %vm432, %v2417
    %2426 = vst.msk [vmem:[#allocation4 + $0x38] sm:$0xff] %vm432, %v2418
    %v2427 = vld [vmem:[#allocation3 + $0x8] sm:$0xff]
    %v2428 = vld [vmem:[#allocation3 + $0x10] sm:$0xff]
    %v2429 = vld [vmem:[#allocation3 + $0x18] sm:$0xff]
    %v2430 = vld [vmem:[#allocation3 + $0x20] sm:$0xff]
    %v2431 = vld [vmem:[#allocation3 + $0x28] sm:$0xff]
    %v2432 = vld [vmem:[#allocation3 + $0x30] sm:$0xff]
    %v2433 = vld [vmem:[#allocation3 + $0x38] sm:$0xff]
    %v2434 = vld [vmem:[#allocation3 + $0x40] sm:$0xff]
    %v2435 = vld [vmem:[#allocation3 + $0x4] sm:$0xff]
    %v2436 = vld [vmem:[#allocation3 + $0xc] sm:$0xff]
    %v2437 = vld [vmem:[#allocation3 + $0x14] sm:$0xff]
    %v2438 = vld [vmem:[#allocation3 + $0x1c] sm:$0xff]
    %v2439 = vld [vmem:[#allocation3 + $0x24] sm:$0xff]
    %v2440 = vld [vmem:[#allocation3 + $0x2c] sm:$0xff]
    %v2441 = vld [vmem:[#allocation3 + $0x34] sm:$0xff]
    %v2442 = vld [vmem:[#allocation3 + $0x3c] sm:$0xff]
    %s2443 = scalar_lea.vmem %s3, 40
    %v2444 = vld [vmem:[%s2443] sm:$0xf]
    %v2445 = vld [vmem:[%s2443 + $0x4] sm:$0xf]
    %v2446 = vpack.c.bf16 %v2436, %v2435
    %v2447 = vpack.c.bf16 %v2438, %v2437
    %v2448 = vpack.c.bf16 %v2440, %v2439
    %v2449 = vpack.c.bf16 %v2442, %v2441
    %s2450 = scalar_lea.vmem [#allocation9], 40
    %v2451 = vld [vmem:[%s2450] sm:$0xf]
    %v2452 = vld [vmem:[%s2450 + $0x4] sm:$0xf]
    %v2453 = vpack.c.bf16 %v2428, %v2427
    %v2454 = vpack.c.bf16 %v2430, %v2429
    %v2455 = vpack.c.bf16 %v2432, %v2431
    %v2456 = vpack.c.bf16 %v2434, %v2433
    %v2459 = vunpack.c.l.b16 %v2451
    %v2460 = vunpack.c.l.b16 %v2452
    %v2461 = vpack.c.b16 %v2460, %v2459
    %v2464 = vsel %vm251, %v2453, 0
    %v2467 = vsel %vm251, %v2454, 0
    %v2470 = vsel %vm251, %v2455, 0
    %v2473 = vsel %vm251, %v2456, 0
    %2475 = vmatprep.subr.bf16.mxu0 0
    %2476 = vmatpush1.bf16.msra.mxu0 %v2461
    %2477 = vmatprep.subr.bf16.mxu0 0
    %2478 = vmatpush1.bf16.msra.mxu0 0
    %2479 = vmatprep.subr.bf16.mxu0 0
    %2480 = vmatpush1.bf16.msra.mxu0 0
    %2481 = vmatprep.subr.bf16.mxu0 0
    %2482 = vmatpush1.bf16.msra.mxu0 0
    %2483 = vmatprep.subr.bf16.mxu0 0
    %2484 = vmatpush1.bf16.msra.mxu0 0
    %2485 = vmatprep.subr.bf16.mxu0 0
    %2486 = vmatpush1.bf16.msra.mxu0 0
    %2487 = vmatprep.subr.bf16.mxu0 0
    %2488 = vmatpush1.bf16.msra.mxu0 0
    %2489 = vmatprep.subr.bf16.mxu0 0
    %2490 = vmatpush1.bf16.msra.mxu0 0
    %2491 = vmatprep.subr.bf16.mxu0 0
    %2492 = vmatpush1.bf16.msra.mxu0 0
    %2493 = vmatprep.subr.bf16.mxu0 0
    %2494 = vmatpush1.bf16.msra.mxu0 0
    %2495 = vmatprep.subr.bf16.mxu0 0
    %2496 = vmatpush1.bf16.msra.mxu0 0
    %2497 = vmatprep.subr.bf16.mxu0 0
    %2498 = vmatpush1.bf16.msra.mxu0 0
    %2499 = vmatprep.subr.bf16.mxu0 0
    %2500 = vmatpush1.bf16.msra.mxu0 0
    %2501 = vmatprep.subr.bf16.mxu0 0
    %2502 = vmatpush1.bf16.msra.mxu0 0
    %2503 = vmatprep.subr.bf16.mxu0 0
    %2504 = vmatpush1.bf16.msra.mxu0 0
    %2505 = vmatprep.subr.bf16.mxu0 0
    %2506 = vmatpush1.bf16.msra.mxu0 0
    %2507 = vmatprep.mubr.bf16.mxu0 0
    %2508 = vmatmul.mubr.bf16.gmra.mrb[0].mxu0 %v2464
    %v2509 = vpop.f32.mrb[0].mxu0
    %v2510 = vadd.f32 0.0, %v2509
    %v2511 = vpop.f32.mrb[0].mxu0
    %v2512 = vpop.f32.mrb[0].mxu0
    %v2513 = vadd.f32 0.0, %v2512
    %v2514 = vpop.f32.mrb[0].mxu0
    %2515 = vmatprep.mubr.bf16.mxu0 0
    %2516 = vmatmul.mubr.bf16.gmra.mrb[0].mxu0 %v2467
    %v2517 = vpop.f32.mrb[0].mxu0
    %v2518 = vadd.f32 0.0, %v2517
    %v2519 = vpop.f32.mrb[0].mxu0
    %v2520 = vpop.f32.mrb[0].mxu0
    %v2521 = vadd.f32 0.0, %v2520
    %v2522 = vpop.f32.mrb[0].mxu0
    %2523 = vmatprep.mubr.bf16.mxu0 0
    %2524 = vmatmul.mubr.bf16.gmra.mrb[0].mxu0 %v2470
    %v2525 = vpop.f32.mrb[0].mxu0
    %v2526 = vadd.f32 0.0, %v2525
    %v2527 = vpop.f32.mrb[0].mxu0
    %v2528 = vpop.f32.mrb[0].mxu0
    %v2529 = vadd.f32 0.0, %v2528
    %v2530 = vpop.f32.mrb[0].mxu0
    %2531 = vmatprep.mubr.bf16.mxu0 0
    %2532 = vmatmul.mubr.bf16.gmra.mrb[0].mxu0 %v2473
    %v2533 = vpop.f32.mrb[0].mxu0
    %v2534 = vadd.f32 0.0, %v2533
    %v2535 = vpop.f32.mrb[0].mxu0
    %v2536 = vpop.f32.mrb[0].mxu0
    %v2537 = vadd.f32 0.0, %v2536
    %v2538 = vpop.f32.mrb[0].mxu0
    %2539 = vdwg.mxu0
    %v2542 = vunpack.c.l.b16 %v2444
    %v2543 = vunpack.c.l.b16 %v2445
    %v2544 = vpack.c.b16 %v2543, %v2542
    %v2547 = vsel %vm251, %v2446, 0
    %v2550 = vsel %vm251, %v2447, 0
    %v2553 = vsel %vm251, %v2448, 0
    %v2556 = vsel %vm251, %v2449, 0
    %2558 = vmatprep.subr.bf16.mxu0 0
    %2559 = vmatpush1.bf16.msra.mxu0 %v2544
    %2560 = vmatprep.subr.bf16.mxu0 0
    %2561 = vmatpush1.bf16.msra.mxu0 0
    %2562 = vmatprep.subr.bf16.mxu0 0
    %2563 = vmatpush1.bf16.msra.mxu0 0
    %2564 = vmatprep.subr.bf16.mxu0 0
    %2565 = vmatpush1.bf16.msra.mxu0 0
    %2566 = vmatprep.subr.bf16.mxu0 0
    %2567 = vmatpush1.bf16.msra.mxu0 0
    %2568 = vmatprep.subr.bf16.mxu0 0
    %2569 = vmatpush1.bf16.msra.mxu0 0
    %2570 = vmatprep.subr.bf16.mxu0 0
    %2571 = vmatpush1.bf16.msra.mxu0 0
    %2572 = vmatprep.subr.bf16.mxu0 0
    %2573 = vmatpush1.bf16.msra.mxu0 0
    %2574 = vmatprep.subr.bf16.mxu0 0
    %2575 = vmatpush1.bf16.msra.mxu0 0
    %2576 = vmatprep.subr.bf16.mxu0 0
    %2577 = vmatpush1.bf16.msra.mxu0 0
    %2578 = vmatprep.subr.bf16.mxu0 0
    %2579 = vmatpush1.bf16.msra.mxu0 0
    %2580 = vmatprep.subr.bf16.mxu0 0
    %2581 = vmatpush1.bf16.msra.mxu0 0
    %2582 = vmatprep.subr.bf16.mxu0 0
    %2583 = vmatpush1.bf16.msra.mxu0 0
    %2584 = vmatprep.subr.bf16.mxu0 0
    %2585 = vmatpush1.bf16.msra.mxu0 0
    %2586 = vmatprep.subr.bf16.mxu0 0
    %2587 = vmatpush1.bf16.msra.mxu0 0
    %2588 = vmatprep.subr.bf16.mxu0 0
    %2589 = vmatpush1.bf16.msra.mxu0 0
    %2590 = vmatprep.mubr.bf16.mxu0 0
    %2591 = vmatmul.mubr.bf16.gmra.mrb[0].mxu0 %v2547
    %v2592 = vpop.f32.mrb[0].mxu0
    %v2593 = vadd.f32 %v2510, %v2592
    %v2594 = vpop.f32.mrb[0].mxu0
    %v2595 = vpop.f32.mrb[0].mxu0
    %v2596 = vadd.f32 %v2513, %v2595
    %v2597 = vpop.f32.mrb[0].mxu0
    %2598 = vmatprep.mubr.bf16.mxu0 0
    %2599 = vmatmul.mubr.bf16.gmra.mrb[0].mxu0 %v2550
    %v2600 = vpop.f32.mrb[0].mxu0
    %v2601 = vadd.f32 %v2518, %v2600
    %v2602 = vpop.f32.mrb[0].mxu0
    %v2603 = vpop.f32.mrb[0].mxu0
    %v2604 = vadd.f32 %v2521, %v2603
    %v2605 = vpop.f32.mrb[0].mxu0
    %2606 = vmatprep.mubr.bf16.mxu0 0
    %2607 = vmatmul.mubr.bf16.gmra.mrb[0].mxu0 %v2553
    %v2608 = vpop.f32.mrb[0].mxu0
    %v2609 = vadd.f32 %v2526, %v2608
    %v2610 = vpop.f32.mrb[0].mxu0
    %v2611 = vpop.f32.mrb[0].mxu0
    %v2612 = vadd.f32 %v2529, %v2611
    %v2613 = vpop.f32.mrb[0].mxu0
    %2614 = vmatprep.mubr.bf16.mxu0 0
    %2615 = vmatmul.mubr.bf16.gmra.mrb[0].mxu0 %v2556
    %v2616 = vpop.f32.mrb[0].mxu0
    %v2617 = vadd.f32 %v2534, %v2616
    %v2618 = vpop.f32.mrb[0].mxu0
    %v2619 = vpop.f32.mrb[0].mxu0
    %v2620 = vadd.f32 %v2537, %v2619
    %v2621 = vpop.f32.mrb[0].mxu0
    %2622 = vdwg.mxu0
    %v2623 = vtanh.pop %v2593
    %v2624 = vtanh.pop %v2596
    %v2625 = vtanh.pop %v2601
    %v2626 = vtanh.pop %v2604
    %v2627 = vtanh.pop %v2609
    %v2628 = vtanh.pop %v2612
    %v2629 = vtanh.pop %v2617
    %v2630 = vtanh.pop %v2620
    %v2631 = vxor.u32 %v2593, 2147483648
    %v2632 = vxor.u32 %v2596, 2147483648
    %v2633 = vxor.u32 %v2601, 2147483648
    %v2634 = vxor.u32 %v2604, 2147483648
    %v2635 = vxor.u32 %v2609, 2147483648
    %v2636 = vxor.u32 %v2612, 2147483648
    %v2637 = vxor.u32 %v2617, 2147483648
    %v2638 = vxor.u32 %v2620, 2147483648
    %v2639 = vmul.f32 %v2631, 1.442695
    %v2640 = vpow.pop %v2639
    %v2641 = vmul.f32 %v2632, 1.442695
    %v2642 = vpow.pop %v2641
    %v2643 = vmul.f32 %v2633, 1.442695
    %v2644 = vpow.pop %v2643
    %v2645 = vmul.f32 %v2634, 1.442695
    %v2646 = vpow.pop %v2645
    %v2647 = vmul.f32 %v2635, 1.442695
    %v2648 = vpow.pop %v2647
    %v2649 = vmul.f32 %v2636, 1.442695
    %v2650 = vpow.pop %v2649
    %v2651 = vmul.f32 %v2637, 1.442695
    %v2652 = vpow.pop %v2651
    %v2653 = vmul.f32 %v2638, 1.442695
    %v2654 = vpow.pop %v2653
    %v2655 = vadd.f32 %v2640, 1.0
    %v2656 = vadd.f32 %v2642, 1.0
    %v2657 = vadd.f32 %v2644, 1.0
    %v2658 = vadd.f32 %v2646, 1.0
    %v2659 = vadd.f32 %v2648, 1.0
    %v2660 = vadd.f32 %v2650, 1.0
    %v2661 = vadd.f32 %v2652, 1.0
    %v2662 = vadd.f32 %v2654, 1.0
    %v2663 = vrcp.pop %v2655
    %v2664 = vmul.f32 1.0, %v2663
    %v2665 = vrcp.pop %v2656
    %v2666 = vmul.f32 1.0, %v2665
    %v2667 = vrcp.pop %v2657
    %v2668 = vmul.f32 1.0, %v2667
    %v2669 = vrcp.pop %v2658
    %v2670 = vmul.f32 1.0, %v2669
    %v2671 = vrcp.pop %v2659
    %v2672 = vmul.f32 1.0, %v2671
    %v2673 = vrcp.pop %v2660
    %v2674 = vmul.f32 1.0, %v2673
    %v2675 = vrcp.pop %v2661
    %v2676 = vmul.f32 1.0, %v2675
    %v2677 = vrcp.pop %v2662
    %v2678 = vmul.f32 1.0, %v2677
    %v2679 = vmul.f32 %v2623, %v2664
    %v2680 = vmul.f32 %v2624, %v2666
    %v2681 = vmul.f32 %v2625, %v2668
    %v2682 = vmul.f32 %v2626, %v2670
    %v2683 = vmul.f32 %v2627, %v2672
    %v2684 = vmul.f32 %v2628, %v2674
    %v2685 = vmul.f32 %v2629, %v2676
    %v2686 = vmul.f32 %v2630, %v2678
    %s2687 = scalar_lea.vmem %s5, 40
    %v2688 = vld [vmem:[%s2687] sm:$0xf]
    %v2689 = vld [vmem:[%s2687 + $0x4] sm:$0xf]
    %v2690 = vpack.c.bf16 %v2680, %v2679
    %v2691 = vpack.c.bf16 %v2682, %v2681
    %v2692 = vpack.c.bf16 %v2684, %v2683
    %v2693 = vpack.c.bf16 %v2686, %v2685
    %s2694 = scalar_lea.vmem %s6, 5
    %v2695 = vld [vmem:[%s2694] sm:$0x1]
    %v2697 = vlaneseq
    %v2698 = vshrl.u32 %v2697, 7
    %v2699 = vsub.s32 0, %v2698
    %v2700 = vrot.slane %v2695, %v2699
    %v2704 = vunpack.c.l.b16 %v2688
    %v2705 = vunpack.c.l.b16 %v2689
    %v2706 = vpack.c.b16 %v2705, %v2704
    %v2709 = vsel %vm251, %v2690, 0
    %v2712 = vsel %vm251, %v2691, 0
    %v2715 = vsel %vm251, %v2692, 0
    %v2718 = vsel %vm251, %v2693, 0
    %2720 = vmatprep.subr.bf16.mxu0 0
    %2721 = vmatpush1.bf16.msra.mxu0 %v2706
    %2722 = vmatprep.subr.bf16.mxu0 0
    %2723 = vmatpush1.bf16.msra.mxu0 0
    %2724 = vmatprep.subr.bf16.mxu0 0
    %2725 = vmatpush1.bf16.msra.mxu0 0
    %2726 = vmatprep.subr.bf16.mxu0 0
    %2727 = vmatpush1.bf16.msra.mxu0 0
    %2728 = vmatprep.subr.bf16.mxu0 0
    %2729 = vmatpush1.bf16.msra.mxu0 0
    %2730 = vmatprep.subr.bf16.mxu0 0
    %2731 = vmatpush1.bf16.msra.mxu0 0
    %2732 = vmatprep.subr.bf16.mxu0 0
    %2733 = vmatpush1.bf16.msra.mxu0 0
    %2734 = vmatprep.subr.bf16.mxu0 0
    %2735 = vmatpush1.bf16.msra.mxu0 0
    %2736 = vmatprep.subr.bf16.mxu0 0
    %2737 = vmatpush1.bf16.msra.mxu0 0
    %2738 = vmatprep.subr.bf16.mxu0 0
    %2739 = vmatpush1.bf16.msra.mxu0 0
    %2740 = vmatprep.subr.bf16.mxu0 0
    %2741 = vmatpush1.bf16.msra.mxu0 0
    %2742 = vmatprep.subr.bf16.mxu0 0
    %2743 = vmatpush1.bf16.msra.mxu0 0
    %2744 = vmatprep.subr.bf16.mxu0 0
    %2745 = vmatpush1.bf16.msra.mxu0 0
    %2746 = vmatprep.subr.bf16.mxu0 0
    %2747 = vmatpush1.bf16.msra.mxu0 0
    %2748 = vmatprep.subr.bf16.mxu0 0
    %2749 = vmatpush1.bf16.msra.mxu0 0
    %2750 = vmatprep.subr.bf16.mxu0 0
    %2751 = vmatpush1.bf16.msra.mxu0 0
    %2752 = vmatprep.mubr.bf16.mxu0 0
    %2753 = vmatmul.mubr.bf16.gmra.mrb[0].mxu0 %v2709
    %v2754 = vpop.f32.mrb[0].mxu0
    %v2755 = vadd.f32 %v2700, %v2754
    %v2756 = vpop.f32.mrb[0].mxu0
    %v2757 = vpop.f32.mrb[0].mxu0
    %v2758 = vadd.f32 %v2700, %v2757
    %v2759 = vpop.f32.mrb[0].mxu0
    %2760 = vmatprep.mubr.bf16.mxu0 0
    %2761 = vmatmul.mubr.bf16.gmra.mrb[0].mxu0 %v2712
    %v2762 = vpop.f32.mrb[0].mxu0
    %v2763 = vadd.f32 %v2700, %v2762
    %v2764 = vpop.f32.mrb[0].mxu0
    %v2765 = vpop.f32.mrb[0].mxu0
    %v2766 = vadd.f32 %v2700, %v2765
    %v2767 = vpop.f32.mrb[0].mxu0
    %2768 = vmatprep.mubr.bf16.mxu0 0
    %2769 = vmatmul.mubr.bf16.gmra.mrb[0].mxu0 %v2715
    %v2770 = vpop.f32.mrb[0].mxu0
    %v2771 = vadd.f32 %v2700, %v2770
    %v2772 = vpop.f32.mrb[0].mxu0
    %v2773 = vpop.f32.mrb[0].mxu0
    %v2774 = vadd.f32 %v2700, %v2773
    %v2775 = vpop.f32.mrb[0].mxu0
    %2776 = vmatprep.mubr.bf16.mxu0 0
    %2777 = vmatmul.mubr.bf16.gmra.mrb[0].mxu0 %v2718
    %v2778 = vpop.f32.mrb[0].mxu0
    %v2779 = vadd.f32 %v2700, %v2778
    %v2780 = vpop.f32.mrb[0].mxu0
    %v2781 = vpop.f32.mrb[0].mxu0
    %v2782 = vadd.f32 %v2700, %v2781
    %v2783 = vpop.f32.mrb[0].mxu0
    %2784 = vdwg.mxu0
    %v2785 = vadd.f32 %v2755, %v2427
    %v2786 = vadd.f32 %v2758, %v2428
    %v2787 = vadd.f32 %v2763, %v2429
    %v2788 = vadd.f32 %v2766, %v2430
    %v2789 = vadd.f32 %v2771, %v2431
    %v2790 = vadd.f32 %v2774, %v2432
    %v2791 = vadd.f32 %v2779, %v2433
    %v2792 = vadd.f32 %v2782, %v2434
    %2793 = vst.msk [vmem:[#allocation3 + $0x8] sm:$0xff] %vm251, %v2785
    %2794 = vst.msk [vmem:[#allocation3 + $0x10] sm:$0xff] %vm251, %v2786
    %2795 = vst.msk [vmem:[#allocation3 + $0x18] sm:$0xff] %vm251, %v2787
    %2796 = vst.msk [vmem:[#allocation3 + $0x20] sm:$0xff] %vm251, %v2788
    %2797 = vst.msk [vmem:[#allocation3 + $0x28] sm:$0xff] %vm251, %v2789
    %2798 = vst.msk [vmem:[#allocation3 + $0x30] sm:$0xff] %vm251, %v2790
    %2799 = vst.msk [vmem:[#allocation3 + $0x38] sm:$0xff] %vm251, %v2791
    %2800 = vst.msk [vmem:[#allocation3 + $0x40] sm:$0xff] %vm251, %v2792
    %v2801 = vld [vmem:[#allocation4] sm:$0xff]
    %v2802 = vld [vmem:[#allocation4 + $0x8] sm:$0xff]
    %v2803 = vld [vmem:[#allocation4 + $0x10] sm:$0xff]
    %v2804 = vld [vmem:[#allocation4 + $0x18] sm:$0xff]
    %v2805 = vld [vmem:[#allocation4 + $0x20] sm:$0xff]
    %v2806 = vld [vmem:[#allocation4 + $0x28] sm:$0xff]
    %v2807 = vld [vmem:[#allocation4 + $0x30] sm:$0xff]
    %v2808 = vld [vmem:[#allocation4 + $0x38] sm:$0xff]
    %v2809 = vadd.f32 %v2801, %v2755
    %v2810 = vadd.f32 %v2802, %v2758
    %v2811 = vadd.f32 %v2803, %v2763
    %v2812 = vadd.f32 %v2804, %v2766
    %v2813 = vadd.f32 %v2805, %v2771
    %v2814 = vadd.f32 %v2806, %v2774
    %v2815 = vadd.f32 %v2807, %v2779
    %v2816 = vadd.f32 %v2808, %v2782
    %2817 = vst.msk [vmem:[#allocation4] sm:$0xff] %vm432, %v2809
    %2818 = vst.msk [vmem:[#allocation4 + $0x8] sm:$0xff] %vm432, %v2810
    %2819 = vst.msk [vmem:[#allocation4 + $0x10] sm:$0xff] %vm432, %v2811
    %2820 = vst.msk [vmem:[#allocation4 + $0x18] sm:$0xff] %vm432, %v2812
    %2821 = vst.msk [vmem:[#allocation4 + $0x20] sm:$0xff] %vm432, %v2813
    %2822 = vst.msk [vmem:[#allocation4 + $0x28] sm:$0xff] %vm432, %v2814
    %2823 = vst.msk [vmem:[#allocation4 + $0x30] sm:$0xff] %vm432, %v2815
    %2824 = vst.msk [vmem:[#allocation4 + $0x38] sm:$0xff] %vm432, %v2816
    %v2825 = vld [vmem:[#allocation4] sm:$0xff]
    %v2826 = vld [vmem:[#allocation4 + $0x8] sm:$0xff]
    %v2827 = vld [vmem:[#allocation4 + $0x10] sm:$0xff]
    %v2828 = vld [vmem:[#allocation4 + $0x18] sm:$0xff]
    %v2829 = vld [vmem:[#allocation4 + $0x20] sm:$0xff]
    %v2830 = vld [vmem:[#allocation4 + $0x28] sm:$0xff]
    %v2831 = vld [vmem:[#allocation4 + $0x30] sm:$0xff]
    %v2832 = vld [vmem:[#allocation4 + $0x38] sm:$0xff]
    %v2833 = vmax.f32 %v2825, 0.0
    %v2834 = vmax.f32 %v2826, 0.0
    %v2835 = vmax.f32 %v2827, 0.0
    %v2836 = vmax.f32 %v2828, 0.0
    %v2837 = vmax.f32 %v2829, 0.0
    %v2838 = vmax.f32 %v2830, 0.0
    %v2839 = vmax.f32 %v2831, 0.0
    %v2840 = vmax.f32 %v2832, 0.0
    %v2841 = vld [vmem:[%s7] sm:$0xf]
    %v2842 = vpack.c.bf16 %v2834, %v2833
    %v2843 = vpack.c.bf16 %v2836, %v2835
    %v2844 = vpack.c.bf16 %v2838, %v2837
    %v2845 = vpack.c.bf16 %v2840, %v2839
    %v2846 = vld [vmem:[#allocation10] sm:$0x1]
    %v2848 = vlaneseq
    %v2849 = vshrl.u32 %v2848, 7
    %v2850 = vsub.s32 0, %v2849
    %v2851 = vrot.slane %v2846, %v2850
    %2857 = vrot.lane.b32.xlu0 %v2842, 112
    %v2858 = vpop.permute.xlu0 %2857
    %2859 = vrot.lane.b32.xlu0 %v2843, 112
    %v2860 = vpop.permute.xlu0 %2859
    %2861 = vrot.lane.b32.xlu0 %v2844, 112
    %v2862 = vpop.permute.xlu0 %2861
    %2863 = vrot.lane.b32.xlu0 %v2845, 112
    %v2864 = vpop.permute.xlu0 %2863
    %v2866 = vsel %vm96, %v2858, 0
    %v2869 = vsel %vm96, %v2860, 0
    %v2872 = vsel %vm96, %v2862, 0
    %v2875 = vsel %vm96, %v2864, 0
    %v2878 = vsel %vm275, %v2841, 0
    %2880 = vmatprep.subr.bf16.mxu0 0
    %2881 = vmatpush1.bf16.msra.mxu0 %v2878
    %2882 = vmatprep.subr.bf16.mxu0 0
    %2883 = vmatpush1.bf16.msra.mxu0 0
    %2884 = vmatprep.subr.bf16.mxu0 0
    %2885 = vmatpush1.bf16.msra.mxu0 0
    %2886 = vmatprep.subr.bf16.mxu0 0
    %2887 = vmatpush1.bf16.msra.mxu0 0
    %2888 = vmatprep.subr.bf16.mxu0 0
    %2889 = vmatpush1.bf16.msra.mxu0 0
    %2890 = vmatprep.subr.bf16.mxu0 0
    %2891 = vmatpush1.bf16.msra.mxu0 0
    %2892 = vmatprep.subr.bf16.mxu0 0
    %2893 = vmatpush1.bf16.msra.mxu0 0
    %2894 = vmatprep.subr.bf16.mxu0 0
    %2895 = vmatpush1.bf16.msra.mxu0 0
    %2896 = vmatprep.subr.bf16.mxu0 0
    %2897 = vmatpush1.bf16.msra.mxu0 0
    %2898 = vmatprep.subr.bf16.mxu0 0
    %2899 = vmatpush1.bf16.msra.mxu0 0
    %2900 = vmatprep.subr.bf16.mxu0 0
    %2901 = vmatpush1.bf16.msra.mxu0 0
    %2902 = vmatprep.subr.bf16.mxu0 0
    %2903 = vmatpush1.bf16.msra.mxu0 0
    %2904 = vmatprep.subr.bf16.mxu0 0
    %2905 = vmatpush1.bf16.msra.mxu0 0
    %2906 = vmatprep.subr.bf16.mxu0 0
    %2907 = vmatpush1.bf16.msra.mxu0 0
    %2908 = vmatprep.subr.bf16.mxu0 0
    %2909 = vmatpush1.bf16.msra.mxu0 0
    %2910 = vmatprep.subr.bf16.mxu0 0
    %2911 = vmatpush1.bf16.msra.mxu0 0
    %2912 = vmatprep.mubr.bf16.mxu0 0
    %2913 = vmatmul.mubr.bf16.gmra.mrb[0].mxu0 %v2866
    %v2914 = vpop.f32.mrb[0].mxu0
    %v2915 = vadd.f32 %v2851, %v2914
    %v2916 = vpop.f32.mrb[0].mxu0
    %v2917 = vpop.f32.mrb[0].mxu0
    %v2918 = vadd.f32 %v2851, %v2917
    %v2919 = vpop.f32.mrb[0].mxu0
    %2920 = vmatprep.mubr.bf16.mxu0 0
    %2921 = vmatmul.mubr.bf16.gmra.mrb[0].mxu0 %v2869
    %v2922 = vpop.f32.mrb[0].mxu0
    %v2923 = vadd.f32 %v2851, %v2922
    %v2924 = vpop.f32.mrb[0].mxu0
    %v2925 = vpop.f32.mrb[0].mxu0
    %v2926 = vadd.f32 %v2851, %v2925
    %v2927 = vpop.f32.mrb[0].mxu0
    %2928 = vmatprep.mubr.bf16.mxu0 0
    %2929 = vmatmul.mubr.bf16.gmra.mrb[0].mxu0 %v2872
    %v2930 = vpop.f32.mrb[0].mxu0
    %v2931 = vadd.f32 %v2851, %v2930
    %v2932 = vpop.f32.mrb[0].mxu0
    %v2933 = vpop.f32.mrb[0].mxu0
    %v2934 = vadd.f32 %v2851, %v2933
    %v2935 = vpop.f32.mrb[0].mxu0
    %2936 = vmatprep.mubr.bf16.mxu0 0
    %2937 = vmatmul.mubr.bf16.gmra.mrb[0].mxu0 %v2875
    %v2938 = vpop.f32.mrb[0].mxu0
    %v2939 = vadd.f32 %v2851, %v2938
    %v2940 = vpop.f32.mrb[0].mxu0
    %v2941 = vpop.f32.mrb[0].mxu0
    %v2942 = vadd.f32 %v2851, %v2941
    %v2943 = vpop.f32.mrb[0].mxu0
    %2944 = vdwg.mxu0
    %v2945 = vmax.f32 %v2915, 0.0
    %v2946 = vmax.f32 %v2918, 0.0
    %v2947 = vmax.f32 %v2923, 0.0
    %v2948 = vmax.f32 %v2926, 0.0
    %v2949 = vmax.f32 %v2931, 0.0
    %v2950 = vmax.f32 %v2934, 0.0
    %v2951 = vmax.f32 %v2939, 0.0
    %v2952 = vmax.f32 %v2942, 0.0
    %v2953 = vld [vmem:[%s9] sm:$0xf]
    %v2954 = vpack.c.bf16 %v2946, %v2945
    %v2955 = vpack.c.bf16 %v2948, %v2947
    %v2956 = vpack.c.bf16 %v2950, %v2949
    %v2957 = vpack.c.bf16 %v2952, %v2951
    %v2958 = vld [vmem:[%s10] sm:$0x1]
    %v2960 = vlaneseq
    %v2961 = vshrl.u32 %v2960, 7
    %v2962 = vsub.s32 0, %v2961
    %v2963 = vrot.slane %v2958, %v2962
    %v2966 = vsel %vm96, %v2954, 0
    %v2969 = vsel %vm96, %v2955, 0
    %v2972 = vsel %vm96, %v2956, 0
    %v2975 = vsel %vm96, %v2957, 0
    %v2978 = vsel %vm275, %v2953, 0
    %2980 = vmatprep.subr.bf16.mxu0 0
    %2981 = vmatpush1.bf16.msra.mxu0 %v2978
    %2982 = vmatprep.subr.bf16.mxu0 0
    %2983 = vmatpush1.bf16.msra.mxu0 0
    %2984 = vmatprep.subr.bf16.mxu0 0
    %2985 = vmatpush1.bf16.msra.mxu0 0
    %2986 = vmatprep.subr.bf16.mxu0 0
    %2987 = vmatpush1.bf16.msra.mxu0 0
    %2988 = vmatprep.subr.bf16.mxu0 0
    %2989 = vmatpush1.bf16.msra.mxu0 0
    %2990 = vmatprep.subr.bf16.mxu0 0
    %2991 = vmatpush1.bf16.msra.mxu0 0
    %2992 = vmatprep.subr.bf16.mxu0 0
    %2993 = vmatpush1.bf16.msra.mxu0 0
    %2994 = vmatprep.subr.bf16.mxu0 0
    %2995 = vmatpush1.bf16.msra.mxu0 0
    %2996 = vmatprep.subr.bf16.mxu0 0
    %2997 = vmatpush1.bf16.msra.mxu0 0
    %2998 = vmatprep.subr.bf16.mxu0 0
    %2999 = vmatpush1.bf16.msra.mxu0 0
    %3000 = vmatprep.subr.bf16.mxu0 0
    %3001 = vmatpush1.bf16.msra.mxu0 0
    %3002 = vmatprep.subr.bf16.mxu0 0
    %3003 = vmatpush1.bf16.msra.mxu0 0
    %3004 = vmatprep.subr.bf16.mxu0 0
    %3005 = vmatpush1.bf16.msra.mxu0 0
    %3006 = vmatprep.subr.bf16.mxu0 0
    %3007 = vmatpush1.bf16.msra.mxu0 0
    %3008 = vmatprep.subr.bf16.mxu0 0
    %3009 = vmatpush1.bf16.msra.mxu0 0
    %3010 = vmatprep.subr.bf16.mxu0 0
    %3011 = vmatpush1.bf16.msra.mxu0 0
    %3012 = vmatprep.mubr.bf16.mxu0 0
    %3013 = vmatmul.mubr.bf16.gmra.mrb[0].mxu0 %v2966
    %v3014 = vpop.f32.mrb[0].mxu0
    %v3015 = vadd.f32 %v2963, %v3014
    %v3016 = vpop.f32.mrb[0].mxu0
    %v3017 = vpop.f32.mrb[0].mxu0
    %v3018 = vadd.f32 %v2963, %v3017
    %v3019 = vpop.f32.mrb[0].mxu0
    %3020 = vmatprep.mubr.bf16.mxu0 0
    %3021 = vmatmul.mubr.bf16.gmra.mrb[0].mxu0 %v2969
    %v3022 = vpop.f32.mrb[0].mxu0
    %v3023 = vadd.f32 %v2963, %v3022
    %v3024 = vpop.f32.mrb[0].mxu0
    %v3025 = vpop.f32.mrb[0].mxu0
    %v3026 = vadd.f32 %v2963, %v3025
    %v3027 = vpop.f32.mrb[0].mxu0
    %3028 = vmatprep.mubr.bf16.mxu0 0
    %3029 = vmatmul.mubr.bf16.gmra.mrb[0].mxu0 %v2972
    %v3030 = vpop.f32.mrb[0].mxu0
    %v3031 = vadd.f32 %v2963, %v3030
    %v3032 = vpop.f32.mrb[0].mxu0
    %v3033 = vpop.f32.mrb[0].mxu0
    %v3034 = vadd.f32 %v2963, %v3033
    %v3035 = vpop.f32.mrb[0].mxu0
    %3036 = vmatprep.mubr.bf16.mxu0 0
    %3037 = vmatmul.mubr.bf16.gmra.mrb[0].mxu0 %v2975
    %v3038 = vpop.f32.mrb[0].mxu0
    %v3039 = vadd.f32 %v2963, %v3038
    %v3040 = vpop.f32.mrb[0].mxu0
    %v3041 = vpop.f32.mrb[0].mxu0
    %v3042 = vadd.f32 %v2963, %v3041
    %v3043 = vpop.f32.mrb[0].mxu0
    %3044 = vdwg.mxu0
    %v3045 = vsel %vm96, %v3015, -inf
    %3046 = vmax.xlane.f32.xlu0 %v3045
    %v3047 = vpop.xlane.xlu0 %3046
    %v3048 = vsel %vm96, %v3018, -inf
    %3049 = vmax.xlane.f32.xlu0 %v3048
    %v3050 = vpop.xlane.xlu0 %3049
    %v3051 = vsel %vm96, %v3023, -inf
    %3052 = vmax.xlane.f32.xlu0 %v3051
    %v3053 = vpop.xlane.xlu0 %3052
    %v3054 = vsel %vm96, %v3026, -inf
    %3055 = vmax.xlane.f32.xlu0 %v3054
    %v3056 = vpop.xlane.xlu0 %3055
    %v3057 = vsel %vm96, %v3031, -inf
    %3058 = vmax.xlane.f32.xlu0 %v3057
    %v3059 = vpop.xlane.xlu0 %3058
    %v3060 = vsel %vm96, %v3034, -inf
    %3061 = vmax.xlane.f32.xlu0 %v3060
    %v3062 = vpop.xlane.xlu0 %3061
    %v3063 = vsel %vm96, %v3039, -inf
    %3064 = vmax.xlane.f32.xlu0 %v3063
    %v3065 = vpop.xlane.xlu0 %3064
    %v3066 = vsel %vm96, %v3042, -inf
    %3067 = vmax.xlane.f32.xlu0 %v3066
    %v3068 = vpop.xlane.xlu0 %3067
    %v3069 = vsub.f32 %v3015, %v3047
    %v3070 = vsub.f32 %v3018, %v3050
    %v3071 = vsub.f32 %v3023, %v3053
    %v3072 = vsub.f32 %v3026, %v3056
    %v3073 = vsub.f32 %v3031, %v3059
    %v3074 = vsub.f32 %v3034, %v3062
    %v3075 = vsub.f32 %v3039, %v3065
    %v3076 = vsub.f32 %v3042, %v3068
    %v3077 = vmul.f32 %v3069, 1.442695
    %v3078 = vpow.pop %v3077
    %v3079 = vmul.f32 %v3070, 1.442695
    %v3080 = vpow.pop %v3079
    %v3081 = vmul.f32 %v3071, 1.442695
    %v3082 = vpow.pop %v3081
    %v3083 = vmul.f32 %v3072, 1.442695
    %v3084 = vpow.pop %v3083
    %v3085 = vmul.f32 %v3073, 1.442695
    %v3086 = vpow.pop %v3085
    %v3087 = vmul.f32 %v3074, 1.442695
    %v3088 = vpow.pop %v3087
    %v3089 = vmul.f32 %v3075, 1.442695
    %v3090 = vpow.pop %v3089
    %v3091 = vmul.f32 %v3076, 1.442695
    %v3092 = vpow.pop %v3091
    %v3093 = vsel %vm96, %v3078, 0.0
    %3094 = vadd.xlane.f32.xlu0 %v3093
    %v3095 = vpop.xlane.xlu0 %3094
    %v3096 = vsel %vm96, %v3080, 0.0
    %3097 = vadd.xlane.f32.xlu0 %v3096
    %v3098 = vpop.xlane.xlu0 %3097
    %v3099 = vsel %vm96, %v3082, 0.0
    %3100 = vadd.xlane.f32.xlu0 %v3099
    %v3101 = vpop.xlane.xlu0 %3100
    %v3102 = vsel %vm96, %v3084, 0.0
    %3103 = vadd.xlane.f32.xlu0 %v3102
    %v3104 = vpop.xlane.xlu0 %3103
    %v3105 = vsel %vm96, %v3086, 0.0
    %3106 = vadd.xlane.f32.xlu0 %v3105
    %v3107 = vpop.xlane.xlu0 %3106
    %v3108 = vsel %vm96, %v3088, 0.0
    %3109 = vadd.xlane.f32.xlu0 %v3108
    %v3110 = vpop.xlane.xlu0 %3109
    %v3111 = vsel %vm96, %v3090, 0.0
    %3112 = vadd.xlane.f32.xlu0 %v3111
    %v3113 = vpop.xlane.xlu0 %3112
    %v3114 = vsel %vm96, %v3092, 0.0
    %3115 = vadd.xlane.f32.xlu0 %v3114
    %v3116 = vpop.xlane.xlu0 %3115
    %v3117 = vrcp.pop %v3095
    %v3118 = vrcp.pop %v3098
    %v3119 = vrcp.pop %v3101
    %v3120 = vrcp.pop %v3104
    %v3121 = vrcp.pop %v3107
    %v3122 = vrcp.pop %v3110
    %v3123 = vrcp.pop %v3113
    %v3124 = vrcp.pop %v3116
    %v3125 = vmul.f32 %v3078, %v3117
    %v3126 = vmul.f32 %v3080, %v3118
    %v3127 = vmul.f32 %v3082, %v3119
    %v3128 = vmul.f32 %v3084, %v3120
    %v3129 = vmul.f32 %v3086, %v3121
    %v3130 = vmul.f32 %v3088, %v3122
    %v3131 = vmul.f32 %v3090, %v3123
    %v3132 = vmul.f32 %v3092, %v3124
    %3133 = vst.msk [vmem:[%s11] sm:$0xff] %vm96, %v3125
    %3134 = vst.msk [vmem:[%s11 + $0x8] sm:$0xff] %vm96, %v3126
    %3135 = vst.msk [vmem:[%s11 + $0x10] sm:$0xff] %vm96, %v3127
    %3136 = vst.msk [vmem:[%s11 + $0x18] sm:$0xff] %vm96, %v3128
    %3137 = vst.msk [vmem:[%s11 + $0x20] sm:$0xff] %vm96, %v3129
    %3138 = vst.msk [vmem:[%s11 + $0x28] sm:$0xff] %vm96, %v3130
    %3139 = vst.msk [vmem:[%s11 + $0x30] sm:$0xff] %vm96, %v3131
    %3140 = vst.msk [vmem:[%s11 + $0x38] sm:$0xff] %vm96, %v3132
    // Predicated region
    $region62: #{tpu_custom_call.1} parent=1 // pred_check
      _
    $region63: #{tpu_custom_call.1} parent=1 // pred_check_branch
      %3142 = sbr.rel (0) target = $region65
    $region64: #{tpu_custom_call.1} parent=1 // pred_region
      _
    $region65: #{tpu_custom_call.1} parent=1 // pred_fallthru
      _
    // Predicated region
    $region66: #{tpu_custom_call.1} parent=1 // pred_check
      _
    $region67: #{tpu_custom_call.1} parent=1 // pred_check_branch
      %3144 = sbr.rel (0) target = $region69
    $region68: #{tpu_custom_call.1} parent=1 // pred_region
      _
    $region69: #{tpu_custom_call.1} parent=1 // pred_fallthru
      _
    %3145 = vsyncpa [#allocation6], 1
    %3146 = vsyncpa [#allocation8], 1
    %3147 = vsyncpa [#allocation11], 1

</llo_original>
